<compile_context>
chip_gen: v5e
topology: v5e:2x2
jax: 0.10.0
libtpu: 0.0.40
codegen_flags: <defaults>
</compile_context>

<pallas_src>
import functools

import jax
import jax.numpy as jnp
from jax import lax
from jax.experimental import pallas as pl
from jax.experimental.pallas import tpu as pltpu

K1, S1 = 8, 4        # conv1 kernel / stride
K2, S2 = 4, 2        # conv2 kernel / stride
C1_OUT, C2_OUT = 16, 32
LANE = 128


def conv_out(size, k, s):
    return (size - (k - 1) - 1) // s + 1


def _round_up(x, m):
    return ((x + m - 1) // m) * m


# ------------------------------ fused kernel ------------------------------ #
def _critic_kernel(x_ref, w1_ref, b1_ref, w2_ref, b2_ref,
                   fcw_ref, fcb_ref, vw_ref, vb_ref, o_ref,
                   *, bb, oh1, oh2, nb):
    """One grid step = `bb` images.

    x_ref: (1, (h//S1)*bb, (w//S1)*S1*S1*c) space-to-depth input; rows ordered
    (block_row, image), so every slice below is a whole (8,128)-tile slab
    (bb is a multiple of 8).
    """
    f32 = jnp.float32
    xf = x_ref[0]                                            # ((h//S1)*bb, Kin)

    # ---- conv1 + ReLU: one fat matmul per space-to-depth tap (M = oh1*bb) --
    y1 = jnp.dot(xf[0:oh1 * bb].astype(w1_ref.dtype), w1_ref[0],
                 preferred_element_type=f32)
    for a in range(1, nb):
        y1 = y1 + jnp.dot(xf[a * bb:(a + oh1) * bb].astype(w1_ref.dtype),
                          w1_ref[a], preferred_element_type=f32)
    y1 = jnp.maximum(y1 + b1_ref[...], 0.0)                  # (oh1*bb, 128-pad)
    y1 = y1.astype(w2_ref.dtype)

    # ---- conv2 + ReLU: K2 tap matmuls, all output rows per matmul ----------
    acc2 = None
    for i in range(K2):
        lhs = jnp.concatenate(
            [y1[(S2 * r + i) * bb:(S2 * r + i + 1) * bb] for r in range(oh2)],
            axis=0)                                          # (oh2*bb, 128-pad)
        d = jnp.dot(lhs, w2_ref[i], preferred_element_type=f32)
        acc2 = d if acc2 is None else acc2 + d
    y2 = jnp.maximum(acc2 + b2_ref[...], 0.0)                # (oh2*bb, ow2*32)

    # ---- flatten to (bb, feature) + fc + ReLU: a single matmul -------------
    feat = jnp.concatenate([y2[r * bb:(r + 1) * bb] for r in range(oh2)],
                           axis=1).astype(fcw_ref.dtype)     # (bb, feature)
    h = jnp.maximum(jnp.dot(feat, fcw_ref[...], preferred_element_type=f32)
                    + fcb_ref[...], 0.0)                     # (bb, hidden) f32

    # ---- value head, emitted directly as a lane-dense (1, bb) row ----------
    # contract the hidden dim of BOTH operands: (1,hidden) x (bb,hidden)^T
    v = lax.dot_general(vw_ref[...], h, (((1,), (1,)), ((), ())),
                        preferred_element_type=f32) + vb_ref[...]
    o_ref[0] = v                                             # (1, bb)


# ------------------------------ forward pass ------------------------------- #
def critic_forward(prep, x, block_batch=None):
    """x: (N, C, H, W) float32 -> value (N, 1)."""
    n, c, h, w = x.shape
    # banded formulation requires stride-aligned spatial dims and K1 % S1 == 0
    assert h % S1 == 0 and w % S1 == 0 and K1 % S1 == 0
    oh1, ow1 = conv_out(h, K1, S1), conv_out(w, K1, S1)
    oh2, ow2 = conv_out(oh1, K2, S2), conv_out(ow1, K2, S2)
    assert oh1 > 0 and ow1 > 0 and oh2 > 0 and ow2 > 0
    nb = K1 // S1
    nrows = h // S1
    kin = (w // S1) * S1 * S1 * c

    # per-step image count: lane-dense (bb=128) output rows for large batches,
    # >= 2 grid steps when n >= 16 (v7x has two TensorCores), bb % 8 == 0.
    if block_batch is None:
        block_batch = (min(LANE, _round_up(pl.cdiv(n, 2), 8)) if n >= 16
                       else _round_up(n, 8))
    bb = max(8, _round_up(block_batch, 8))
    g = pl.cdiv(n, bb)
    n_pad = g * bb

    # single cheap space-to-depth relayout (no im2col / patch duplication);
    # rows ordered (block_row, image) inside each grid block.
    # TODO(synk): if inputs are reused across calls, hoist this relayout.
    xp = x if n_pad == n else jnp.pad(
        x, ((0, n_pad - n), (0, 0), (0, 0), (0, 0)))
    t = xp.transpose(0, 2, 3, 1).reshape(g, bb, nrows, S1, w // S1, S1, c)
    t = t.transpose(0, 2, 1, 4, 3, 5, 6)
    xb = t.reshape(g, nrows * bb, kin)

    kern = functools.partial(_critic_kernel, bb=bb, oh1=oh1, oh2=oh2, nb=nb)

    def full(a):  # whole array resident in VMEM, constant block across grid
        return pl.BlockSpec(a.shape, lambda i: (0,) * a.ndim)

    out = pl.pallas_call(
        kern,
        out_shape=jax.ShapeDtypeStruct((g, 1, bb), jnp.float32),
        grid_spec=pltpu.PrefetchScalarGridSpec(
            num_scalar_prefetch=0,
            grid=(g,),
            in_specs=[
                pl.BlockSpec((1, nrows * bb, kin), lambda i: (i, 0, 0)),
                full(prep["rhs1"]), full(prep["b1"]),
                full(prep["rhs2"]), full(prep["b2"]),
                full(prep["fcw"]), full(prep["fcb"]),
                full(prep["vw"]), full(prep["vb"]),
            ],
            out_specs=pl.BlockSpec((1, 1, bb), lambda i: (i, 0, 0)),
        ),
        compiler_params=pltpu.CompilerParams(
            dimension_semantics=("parallel",)),
    )(xb, prep["rhs1"], prep["b1"], prep["rhs2"], prep["b2"],
      prep["fcw"], prep["fcb"], prep["vw"], prep["vb"])
    return out.reshape(n_pad, 1)[:n]


# --------------------------- parameter handling ---------------------------- #
def init_params(key, input_shape, hidden_dim=64):
    """Parameters in the original torch layout (source of truth)."""
    c, h, w = input_shape
    oh1, ow1 = conv_out(h, K1, S1), conv_out(w, K1, S1)
    oh2, ow2 = conv_out(oh1, K2, S2), conv_out(ow1, K2, S2)
    feature_size = oh2 * ow2 * C2_OUT

    k = jax.random.split(key, 6)
    ortho = jax.nn.initializers.orthogonal()
    params = dict(
        w1=0.05 * jax.random.normal(k[0], (C1_OUT, c, K1, K1), jnp.float32),
        b1=0.01 * jax.random.normal(k[1], (C1_OUT,), jnp.float32),
        w2=0.05 * jax.random.normal(k[2], (C2_OUT, C1_OUT, K2, K2), jnp.float32),
        b2=0.01 * jax.random.normal(k[3], (C2_OUT,), jnp.float32),
        fc_w=ortho(k[4], (hidden_dim, feature_size), jnp.float32),
        fc_b=0.01 * jax.random.normal(k[5], (hidden_dim,), jnp.float32),
        val_w=ortho(jax.random.fold_in(key, 7), (1, hidden_dim), jnp.float32),
        val_b=jnp.zeros((1,), jnp.float32),
    )
    return params, feature_size


def prepare_params(params, input_shape, hidden_dim=64,
                   matmul_dtype=jnp.float32):
    """One-time offline repack of torch-layout weights into the banded,
    channel-last, 128-lane-padded layouts consumed by the fused kernel.
    matmul_dtype=jnp.bfloat16 enables bf16 MXU operands (f32 accumulation);
    kept f32 by default to hold the 1e-3 parity check vs the f32 reference."""
    c, h, w = input_shape
    oh1, ow1 = conv_out(h, K1, S1), conv_out(w, K1, S1)
    oh2, ow2 = conv_out(oh1, K2, S2), conv_out(ow1, K2, S2)

    nb = K1 // S1                                     # 2 s2d taps per axis
    kblk = S1 * S1 * c
    wblk = w // S1
    n1 = ow1 * C1_OUT
    n1p = _round_up(n1, LANE)                         # 112 -> 128 lane pad

    # conv1: space-to-depth taps w_s2d[a, b, k, oc], k = bh*(S1*c)+bw*c+ch,
    #        with kh = S1*a + bh, kw = S1*b + bw; banded over wb blocks.
    w1 = params["w1"].reshape(C1_OUT, c, nb, S1, nb, S1)
    w_s2d = w1.transpose(2, 4, 3, 5, 1, 0).reshape(nb, nb, kblk, C1_OUT)
    rhs1 = jnp.zeros((nb, wblk * kblk, n1p), jnp.float32)
    for a in range(nb):
        for ow in range(ow1):
            for b in range(nb):
                wb = ow + b
                rhs1 = rhs1.at[a, wb * kblk:(wb + 1) * kblk,
                               ow * C1_OUT:(ow + 1) * C1_OUT].set(w_s2d[a, b])
    b1t = jnp.zeros((1, n1p), jnp.float32)
    b1t = b1t.at[:, :n1].set(jnp.tile(params["b1"][None, :], (1, ow1)))

    # conv2: banded per-kh-row weights rhs2[i, (padded) ow1*16+ic, ow2*32+oc];
    # padded K rows stay zero so the padded y1 columns contribute nothing.
    w2p = params["w2"].transpose(2, 3, 1, 0)                   # (kh, kw, ic, oc)
    rhs2 = jnp.zeros((K2, n1p, ow2 * C2_OUT), jnp.float32)
    for i in range(K2):
        for o2 in range(ow2):
            for j in range(K2):
                o1 = S2 * o2 + j
                rhs2 = rhs2.at[i, o1 * C1_OUT:(o1 + 1) * C1_OUT,
                               o2 * C2_OUT:(o2 + 1) * C2_OUT].set(w2p[i, j])
    b2t = jnp.tile(params["b2"][None, :], (1, ow2))            # (1, OW2*32)

    # fc: permute rows so channel-last (oh2, ow2, oc) activations reproduce
    # torch's NCHW view(-1, feature) ordering (oc, oh2, ow2) exactly.
    fcw = params["fc_w"].T.reshape(C2_OUT, oh2, ow2, hidden_dim)
    fcw = fcw.transpose(1, 2, 0, 3).reshape(oh2 * ow2 * C2_OUT, hidden_dim)
    fcb = params["fc_b"][None, :]                              # (1, hidden)

    vw = params["val_w"]                                       # (1, hidden) row
    vb = params["val_b"][None, :]                              # (1, 1)
    return dict(rhs1=rhs1.astype(matmul_dtype), b1=b1t,
                rhs2=rhs2.astype(matmul_dtype), b2=b2t,
                fcw=fcw.astype(matmul_dtype), fcb=fcb,
                vw=vw, vb=vb)


# -------------------- pure-JAX reference (torch layout) -------------------- #
def critic_forward_ref(params, x):
    dn = ("NCHW", "OIHW", "NCHW")
    hp = lax.Precision.HIGHEST
    y = lax.conv_general_dilated(x, params["w1"], (S1, S1), "VALID",
                                 dimension_numbers=dn, precision=hp)
    y = jax.nn.relu(y + params["b1"][None, :, None, None])
    y = lax.conv_general_dilated(y, params["w2"], (S2, S2), "VALID",
                                 dimension_numbers=dn, precision=hp)
    y = jax.nn.relu(y + params["b2"][None, :, None, None])
    feat = y.reshape(x.shape[0], -1)
    h = jax.nn.relu(jnp.dot(feat, params["fc_w"].T, precision=hp)
                    + params["fc_b"][None, :])
    return jnp.dot(h, params["val_w"].T, precision=hp) + params["val_b"][None, :]


if __name__ == "__main__":
    key = jax.random.PRNGKey(0)
    k_param, k_x = jax.random.split(key)

    # spatial 32 is the smallest clean size for the 8/4 then 4/2 convs;
    # batch 256 exercises the batched path: bb=128 (lane-dense rows), grid=(2,)
    batch, input_shape, hidden_dim = 256, (4, 32, 32), 64
    params, feature_size = init_params(k_param, input_shape, hidden_dim)
    assert feature_size == 2 * 2 * 32
    prep = prepare_params(params, input_shape, hidden_dim)

    x = jax.random.normal(k_x, (batch,) + input_shape, jnp.float32)

    fwd = jax.jit(critic_forward)
    value = jax.block_until_ready(fwd(prep, x))
    ref = jax.block_until_ready(critic_forward_ref(params, x))
    assert value.shape == (batch, 1)
    assert jnp.allclose(value, ref, rtol=1e-3, atol=1e-3), (
        float(jnp.max(jnp.abs(value - ref))))

    # small / ragged batch exercises the zero-padding path (bb=8, grid=(1,))
    x_small = x[:3]
    v_small = jax.block_until_ready(fwd(prep, x_small))
    r_small = critic_forward_ref(params, x_small)
    assert v_small.shape == (3, 1)
    assert jnp.allclose(v_small, r_small, rtol=1e-3, atol=1e-3), (
        float(jnp.max(jnp.abs(v_small - r_small))))

    print("KERNEL_OK")
</pallas_src>

<mosaic_0001>
module attributes {stable_mosaic.version = 11 : i64} {
  func.func @_critic_kernel(%arg0: i32, %arg1: memref<1x1024x512xf32, #tpu.memory_space<vmem>>, %arg2: memref<2x512x128xf32, #tpu.memory_space<vmem>>, %arg3: memref<1x128xf32, #tpu.memory_space<vmem>>, %arg4: memref<4x128x64xf32, #tpu.memory_space<vmem>>, %arg5: memref<1x64xf32, #tpu.memory_space<vmem>>, %arg6: memref<128x64xf32, #tpu.memory_space<vmem>>, %arg7: memref<1x64xf32, #tpu.memory_space<vmem>>, %arg8: memref<1x64xf32, #tpu.memory_space<vmem>>, %arg9: memref<1x1xf32, #tpu.memory_space<vmem>>, %arg10: memref<1x1x128xf32, #tpu.memory_space<vmem>>) attributes {dimension_semantics = [#tpu.dimension_semantics<parallel>], iteration_bounds = array<i64: 2>, scalar_prefetch = 0 : i64, scratch_operands = 0 : i64, tpu.core_type = #tpu.core_type<tc>, window_params = [{transform_indices = @transform_0, window_bounds = array<i64: 1, 1024, 512>}, {pipeline_mode = #tpu.pipeline_mode<synchronous>, transform_indices = @transform_1, window_bounds = array<i64: 2, 512, 128>}, {pipeline_mode = #tpu.pipeline_mode<synchronous>, transform_indices = @transform_2, window_bounds = array<i64: 1, 128>}, {pipeline_mode = #tpu.pipeline_mode<synchronous>, transform_indices = @transform_3, window_bounds = array<i64: 4, 128, 64>}, {pipeline_mode = #tpu.pipeline_mode<synchronous>, transform_indices = @transform_4, window_bounds = array<i64: 1, 64>}, {pipeline_mode = #tpu.pipeline_mode<synchronous>, transform_indices = @transform_5, window_bounds = array<i64: 128, 64>}, {pipeline_mode = #tpu.pipeline_mode<synchronous>, transform_indices = @transform_6, window_bounds = array<i64: 1, 64>}, {pipeline_mode = #tpu.pipeline_mode<synchronous>, transform_indices = @transform_7, window_bounds = array<i64: 1, 64>}, {pipeline_mode = #tpu.pipeline_mode<synchronous>, transform_indices = @transform_8, window_bounds = array<i64: 1, 1>}, {transform_indices = @transform_9, window_bounds = array<i64: 1, 1, 128>}]} {
    %c0 = arith.constant 0 : index
    %c0_0 = arith.constant 0 : index
    %c0_1 = arith.constant 0 : index
    %0 = vector.load %arg1[%c0, %c0_0, %c0_1] : memref<1x1024x512xf32, #tpu.memory_space<vmem>>, vector<1x1024x512xf32>
    %1 = vector.shape_cast %0 : vector<1x1024x512xf32> to vector<1024x512xf32>
    %2 = vector.extract_strided_slice %1 {offsets = [0, 0], sizes = [896, 512], strides = [1, 1]} : vector<1024x512xf32> to vector<896x512xf32>
    %c0_2 = arith.constant 0 : index
    %c0_3 = arith.constant 0 : index
    %c0_4 = arith.constant 0 : index
    %3 = vector.load %arg2[%c0_2, %c0_3, %c0_4] : memref<2x512x128xf32, #tpu.memory_space<vmem>>, vector<1x512x128xf32>
    %4 = vector.shape_cast %3 : vector<1x512x128xf32> to vector<512x128xf32>
    %cst = arith.constant dense<0.000000e+00> : vector<896x128xf32>
    %5 = tpu.matmul %2, %4, %cst {dimension_numbers = #tpu.dot_dimension_numbers<[1], [0], [0], [1], [0, 0, 1, 1], [], []>} : vector<896x512xf32>, vector<512x128xf32>, vector<896x128xf32> -> vector<896x128xf32>
    %6 = vector.extract_strided_slice %1 {offsets = [128, 0], sizes = [896, 512], strides = [1, 1]} : vector<1024x512xf32> to vector<896x512xf32>
    %c1 = arith.constant 1 : index
    %c0_5 = arith.constant 0 : index
    %c0_6 = arith.constant 0 : index
    %7 = vector.load %arg2[%c1, %c0_5, %c0_6] : memref<2x512x128xf32, #tpu.memory_space<vmem>>, vector<1x512x128xf32>
    %8 = vector.shape_cast %7 : vector<1x512x128xf32> to vector<512x128xf32>
    %cst_7 = arith.constant dense<0.000000e+00> : vector<896x128xf32>
    %9 = tpu.matmul %6, %8, %cst_7 {dimension_numbers = #tpu.dot_dimension_numbers<[1], [0], [0], [1], [0, 0, 1, 1], [], []>} : vector<896x512xf32>, vector<512x128xf32>, vector<896x128xf32> -> vector<896x128xf32>
    %10 = arith.addf %5, %9 : vector<896x128xf32>
    %c0_8 = arith.constant 0 : index
    %c0_9 = arith.constant 0 : index
    %11 = vector.load %arg3[%c0_8, %c0_9] : memref<1x128xf32, #tpu.memory_space<vmem>>, vector<1x128xf32>
    %12 = vector.broadcast %11 : vector<1x128xf32> to vector<896x128xf32>
    %13 = arith.addf %10, %12 : vector<896x128xf32>
    %cst_10 = arith.constant 0.000000e+00 : f32
    %14 = vector.broadcast %cst_10 : f32 to vector<896x128xf32>
    %15 = arith.maximumf %13, %14 : vector<896x128xf32>
    %16 = vector.extract_strided_slice %15 {offsets = [0, 0], sizes = [128, 128], strides = [1, 1]} : vector<896x128xf32> to vector<128x128xf32>
    %17 = vector.extract_strided_slice %15 {offsets = [256, 0], sizes = [128, 128], strides = [1, 1]} : vector<896x128xf32> to vector<128x128xf32>
    %18 = tpu.concatenate %16, %17 in 0 : vector<128x128xf32>, vector<128x128xf32> -> vector<256x128xf32>
    %c0_11 = arith.constant 0 : index
    %c0_12 = arith.constant 0 : index
    %c0_13 = arith.constant 0 : index
    %19 = vector.load %arg4[%c0_11, %c0_12, %c0_13] : memref<4x128x64xf32, #tpu.memory_space<vmem>>, vector<1x128x64xf32>
    %20 = vector.shape_cast %19 : vector<1x128x64xf32> to vector<128x64xf32>
    %cst_14 = arith.constant dense<0.000000e+00> : vector<256x64xf32>
    %21 = tpu.matmul %18, %20, %cst_14 {dimension_numbers = #tpu.dot_dimension_numbers<[1], [0], [0], [1], [0, 0, 1, 1], [], []>} : vector<256x128xf32>, vector<128x64xf32>, vector<256x64xf32> -> vector<256x64xf32>
    %22 = vector.extract_strided_slice %15 {offsets = [128, 0], sizes = [128, 128], strides = [1, 1]} : vector<896x128xf32> to vector<128x128xf32>
    %23 = vector.extract_strided_slice %15 {offsets = [384, 0], sizes = [128, 128], strides = [1, 1]} : vector<896x128xf32> to vector<128x128xf32>
    %24 = tpu.concatenate %22, %23 in 0 : vector<128x128xf32>, vector<128x128xf32> -> vector<256x128xf32>
    %c1_15 = arith.constant 1 : index
    %c0_16 = arith.constant 0 : index
    %c0_17 = arith.constant 0 : index
    %25 = vector.load %arg4[%c1_15, %c0_16, %c0_17] : memref<4x128x64xf32, #tpu.memory_space<vmem>>, vector<1x128x64xf32>
    %26 = vector.shape_cast %25 : vector<1x128x64xf32> to vector<128x64xf32>
    %cst_18 = arith.constant dense<0.000000e+00> : vector<256x64xf32>
    %27 = tpu.matmul %24, %26, %cst_18 {dimension_numbers = #tpu.dot_dimension_numbers<[1], [0], [0], [1], [0, 0, 1, 1], [], []>} : vector<256x128xf32>, vector<128x64xf32>, vector<256x64xf32> -> vector<256x64xf32>
    %28 = arith.addf %21, %27 : vector<256x64xf32>
    %29 = vector.extract_strided_slice %15 {offsets = [256, 0], sizes = [128, 128], strides = [1, 1]} : vector<896x128xf32> to vector<128x128xf32>
    %30 = vector.extract_strided_slice %15 {offsets = [512, 0], sizes = [128, 128], strides = [1, 1]} : vector<896x128xf32> to vector<128x128xf32>
    %31 = tpu.concatenate %29, %30 in 0 : vector<128x128xf32>, vector<128x128xf32> -> vector<256x128xf32>
    %c2 = arith.constant 2 : index
    %c0_19 = arith.constant 0 : index
    %c0_20 = arith.constant 0 : index
    %32 = vector.load %arg4[%c2, %c0_19, %c0_20] : memref<4x128x64xf32, #tpu.memory_space<vmem>>, vector<1x128x64xf32>
    %33 = vector.shape_cast %32 : vector<1x128x64xf32> to vector<128x64xf32>
    %cst_21 = arith.constant dense<0.000000e+00> : vector<256x64xf32>
    %34 = tpu.matmul %31, %33, %cst_21 {dimension_numbers = #tpu.dot_dimension_numbers<[1], [0], [0], [1], [0, 0, 1, 1], [], []>} : vector<256x128xf32>, vector<128x64xf32>, vector<256x64xf32> -> vector<256x64xf32>
    %35 = arith.addf %28, %34 : vector<256x64xf32>
    %36 = vector.extract_strided_slice %15 {offsets = [384, 0], sizes = [128, 128], strides = [1, 1]} : vector<896x128xf32> to vector<128x128xf32>
    %37 = vector.extract_strided_slice %15 {offsets = [640, 0], sizes = [128, 128], strides = [1, 1]} : vector<896x128xf32> to vector<128x128xf32>
    %38 = tpu.concatenate %36, %37 in 0 : vector<128x128xf32>, vector<128x128xf32> -> vector<256x128xf32>
    %c3 = arith.constant 3 : index
    %c0_22 = arith.constant 0 : index
    %c0_23 = arith.constant 0 : index
    %39 = vector.load %arg4[%c3, %c0_22, %c0_23] : memref<4x128x64xf32, #tpu.memory_space<vmem>>, vector<1x128x64xf32>
    %40 = vector.shape_cast %39 : vector<1x128x64xf32> to vector<128x64xf32>
    %cst_24 = arith.constant dense<0.000000e+00> : vector<256x64xf32>
    %41 = tpu.matmul %38, %40, %cst_24 {dimension_numbers = #tpu.dot_dimension_numbers<[1], [0], [0], [1], [0, 0, 1, 1], [], []>} : vector<256x128xf32>, vector<128x64xf32>, vector<256x64xf32> -> vector<256x64xf32>
    %42 = arith.addf %35, %41 : vector<256x64xf32>
    %c0_25 = arith.constant 0 : index
    %c0_26 = arith.constant 0 : index
    %43 = vector.load %arg5[%c0_25, %c0_26] : memref<1x64xf32, #tpu.memory_space<vmem>>, vector<1x64xf32>
    %44 = vector.broadcast %43 : vector<1x64xf32> to vector<256x64xf32>
    %45 = arith.addf %42, %44 : vector<256x64xf32>
    %cst_27 = arith.constant 0.000000e+00 : f32
    %46 = vector.broadcast %cst_27 : f32 to vector<256x64xf32>
    %47 = arith.maximumf %45, %46 : vector<256x64xf32>
    %48 = vector.extract_strided_slice %47 {offsets = [0, 0], sizes = [128, 64], strides = [1, 1]} : vector<256x64xf32> to vector<128x64xf32>
    %49 = vector.extract_strided_slice %47 {offsets = [128, 0], sizes = [128, 64], strides = [1, 1]} : vector<256x64xf32> to vector<128x64xf32>
    %50 = tpu.concatenate %48, %49 in 1 : vector<128x64xf32>, vector<128x64xf32> -> vector<128x128xf32>
    %c0_28 = arith.constant 0 : index
    %c0_29 = arith.constant 0 : index
    %51 = vector.load %arg6[%c0_28, %c0_29] : memref<128x64xf32, #tpu.memory_space<vmem>>, vector<128x64xf32>
    %cst_30 = arith.constant dense<0.000000e+00> : vector<128x64xf32>
    %52 = tpu.matmul %50, %51, %cst_30 {dimension_numbers = #tpu.dot_dimension_numbers<[1], [0], [0], [1], [0, 0, 1, 1], [], []>} : vector<128x128xf32>, vector<128x64xf32>, vector<128x64xf32> -> vector<128x64xf32>
    %c0_31 = arith.constant 0 : index
    %c0_32 = arith.constant 0 : index
    %53 = vector.load %arg7[%c0_31, %c0_32] : memref<1x64xf32, #tpu.memory_space<vmem>>, vector<1x64xf32>
    %54 = vector.broadcast %53 : vector<1x64xf32> to vector<128x64xf32>
    %55 = arith.addf %52, %54 : vector<128x64xf32>
    %cst_33 = arith.constant 0.000000e+00 : f32
    %56 = vector.broadcast %cst_33 : f32 to vector<128x64xf32>
    %57 = arith.maximumf %55, %56 : vector<128x64xf32>
    %c0_34 = arith.constant 0 : index
    %c0_35 = arith.constant 0 : index
    %58 = vector.load %arg8[%c0_34, %c0_35] : memref<1x64xf32, #tpu.memory_space<vmem>>, vector<1x64xf32>
    %cst_36 = arith.constant dense<0.000000e+00> : vector<1x128xf32>
    %59 = tpu.matmul %58, %57, %cst_36 {dimension_numbers = #tpu.dot_dimension_numbers<[1], [1], [0], [0], [0, 0, 1, 0], [], []>} : vector<1x64xf32>, vector<128x64xf32>, vector<1x128xf32> -> vector<1x128xf32>
    %c0_37 = arith.constant 0 : index
    %c0_38 = arith.constant 0 : index
    %60 = vector.load %arg9[%c0_37, %c0_38] : memref<1x1xf32, #tpu.memory_space<vmem>>, vector<1x1xf32>
    %61 = vector.broadcast %60 : vector<1x1xf32> to vector<1x128xf32>
    %62 = arith.addf %59, %61 : vector<1x128xf32>
    %c0_39 = arith.constant 0 : index
    %c0_40 = arith.constant 0 : index
    %c0_41 = arith.constant 0 : index
    %63 = vector.load %arg10[%c0_39, %c0_40, %c0_41] : memref<1x1x128xf32, #tpu.memory_space<vmem>>, vector<1x1x128xf32>
    %64 = vector.shape_cast %63 : vector<1x1x128xf32> to vector<1x128xf32>
    %65 = vector.shape_cast %62 : vector<1x128xf32> to vector<1x1x128xf32>
    tpu.vector_store %arg10[%c0_39, %c0_40, %c0_41], %65 {strides = array<i32>} : memref<1x1x128xf32, #tpu.memory_space<vmem>>, vector<1x1x128xf32>,
    return
  }
  func.func @transform_0(%arg0: i32) -> (i32, i32, i32) {
    %c0_i32 = arith.constant 0 : i32
    %c0_i32_0 = arith.constant 0 : i32
    %c0_i32_1 = arith.constant 0 : i32
    return %arg0, %c0_i32, %c0_i32_0 : i32, i32, i32
  }
  func.func @transform_1(%arg0: i32) -> (i32, i32, i32) {
    %c0_i32 = arith.constant 0 : i32
    %c0_i32_0 = arith.constant 0 : i32
    %c0_i32_1 = arith.constant 0 : i32
    %c0_i32_2 = arith.constant 0 : i32
    return %c0_i32, %c0_i32_0, %c0_i32_1 : i32, i32, i32
  }
  func.func @transform_2(%arg0: i32) -> (i32, i32) {
    %c0_i32 = arith.constant 0 : i32
    %c0_i32_0 = arith.constant 0 : i32
    %c0_i32_1 = arith.constant 0 : i32
    return %c0_i32, %c0_i32_0 : i32, i32
  }
  func.func @transform_3(%arg0: i32) -> (i32, i32, i32) {
    %c0_i32 = arith.constant 0 : i32
    %c0_i32_0 = arith.constant 0 : i32
    %c0_i32_1 = arith.constant 0 : i32
    %c0_i32_2 = arith.constant 0 : i32
    return %c0_i32, %c0_i32_0, %c0_i32_1 : i32, i32, i32
  }
  func.func @transform_4(%arg0: i32) -> (i32, i32) {
    %c0_i32 = arith.constant 0 : i32
    %c0_i32_0 = arith.constant 0 : i32
    %c0_i32_1 = arith.constant 0 : i32
    return %c0_i32, %c0_i32_0 : i32, i32
  }
  func.func @transform_5(%arg0: i32) -> (i32, i32) {
    %c0_i32 = arith.constant 0 : i32
    %c0_i32_0 = arith.constant 0 : i32
    %c0_i32_1 = arith.constant 0 : i32
    return %c0_i32, %c0_i32_0 : i32, i32
  }
  func.func @transform_6(%arg0: i32) -> (i32, i32) {
    %c0_i32 = arith.constant 0 : i32
    %c0_i32_0 = arith.constant 0 : i32
    %c0_i32_1 = arith.constant 0 : i32
    return %c0_i32, %c0_i32_0 : i32, i32
  }
  func.func @transform_7(%arg0: i32) -> (i32, i32) {
    %c0_i32 = arith.constant 0 : i32
    %c0_i32_0 = arith.constant 0 : i32
    %c0_i32_1 = arith.constant 0 : i32
    return %c0_i32, %c0_i32_0 : i32, i32
  }
  func.func @transform_8(%arg0: i32) -> (i32, i32) {
    %c0_i32 = arith.constant 0 : i32
    %c0_i32_0 = arith.constant 0 : i32
    %c0_i32_1 = arith.constant 0 : i32
    return %c0_i32, %c0_i32_0 : i32, i32
  }
  func.func @transform_9(%arg0: i32) -> (i32, i32, i32) {
    %c0_i32 = arith.constant 0 : i32
    %c0_i32_0 = arith.constant 0 : i32
    %c0_i32_1 = arith.constant 0 : i32
    return %arg0, %c0_i32, %c0_i32_0 : i32, i32, i32
  }
}

</mosaic_0001>

<llo_original>
// kernel: critic_forward.1
$region0: #{critic_forward.1}
  #allocation0 [shape = 'u32[]', space=smem, size = 0x4, offset = 0x4, fixed_abs, tag = 'smem constant byte address 0x4 - core index']
  #allocation1 [shape = 'u32[72,128]{1,0:T(1,128)}', space=vmem, size = 0x9000, scoped, tag = 'internal scratch']
  #allocation2 [shape = 'f32[1,1]{1,0:T(1,128)S(1)}', space=vmem, size = 0x200, scoped, tag = 'scoped memory for critic_forward.1']
  %s0 = inlined_call_operand.vmem [shape: f32[2,1024,512], index: 0, kind: input, shape index: {}]
  %s1 = inlined_call_operand.vmem [shape: f32[2,512,128], index: 1, kind: input, shape index: {}]
  %s2 = inlined_call_operand.vmem [shape: f32[1,128], index: 2, kind: input, shape index: {}]
  %s3 = inlined_call_operand.vmem [shape: f32[4,128,64], index: 3, kind: input, shape index: {}]
  %s4 = inlined_call_operand.vmem [shape: f32[1,64], index: 4, kind: input, shape index: {}]
  %s5 = inlined_call_operand.vmem [shape: f32[128,64], index: 5, kind: input, shape index: {}]
  %s6 = inlined_call_operand.vmem [shape: f32[1,64], index: 6, kind: input, shape index: {}]
  %s7 = inlined_call_operand.vmem [shape: f32[1,64], index: 7, kind: input, shape index: {}]
  %s8 = inlined_call_operand.<no memory space> [shape: f32[1,1], index: 8, kind: input, shape index: {}]
  %s9 = inlined_call_operand.hbm [shape: f32[2,1,128], index: 9, kind: output, shape index: {}]
  %s10 = sld [smem:[#allocation0]]
  $region69: #{critic_forward.1} parent=0
    _
  %s12 = ssub.s32 1, %s10
  %s13 = scalar_select 0, %s12, %s10
  %v14 = vstv %s8
  %15 = vst [vmem:[#allocation2] sm:$0x1] %v14
  $region1: #{critic_forward.1} parent=0
    #allocation3 [shape = 'u8[1024]{0}', space=vmem, size = 0x400, scoped, tag = 'output window, operand 0']
    #allocation4 [shape = 's32[2]{0}', space=sflag, size = 0x8, scoped, tag = 'scoped memory for critic_forward.1']
    %16 = vsyncpa [#allocation4], 0
    %s17 = scalar_lea.sflag [#allocation4], 1
    %18 = vsyncpa %s17, 0
    loop: start=0, step=1, limit=4
    $region2: #{critic_forward.1} parent=1 // loop_pre_header
      _
    $region3: #{critic_forward.1} parent=1 // loop_header
      %s20 = sphi 0, %s24
      %p21 = scmp.ge.s32.totalorder %s20, 4
      %s30 = sphi 0, %s32
      %s33 = sphi 0, %s30
      %s34 = sphi 0, %s33
      %s50 = sphi 0, %s34
      %s54 = sphi 0, %s54
      %s56 = sphi 0, %s54
      %s57 = sphi 0, %s56
      %s71 = sphi 0, %s57
      %s75 = sphi 0, %s75
      %s77 = sphi 0, %s75
      %s78 = sphi 0, %s77
      %s92 = sphi 0, %s78
      %s96 = sphi 0, %s96
      %s98 = sphi 0, %s96
      %s99 = sphi 0, %s98
      %s113 = sphi 0, %s99
      %s117 = sphi 0, %s117
      %s119 = sphi 0, %s117
      %s120 = sphi 0, %s119
      %s134 = sphi 0, %s120
      %s138 = sphi 0, %s138
      %s140 = sphi 0, %s138
      %s141 = sphi 0, %s140
      %s155 = sphi 0, %s141
      %s159 = sphi 0, %s159
      %s161 = sphi 0, %s159
      %s162 = sphi 0, %s161
      %s176 = sphi 0, %s162
      %s180 = sphi 0, %s180
      %s182 = sphi 0, %s180
      %s183 = sphi 0, %s182
      %s197 = sphi 0, %s183
      %s201 = sphi 0, %s201
      %s203 = sphi 0, %s201
      %s204 = sphi 0, %s203
      %s218 = sphi 0, %s204
      %s224 = sphi 0, %s226
      %s227 = sphi 0, %s224
      %s228 = sphi 0, %s227
      %s244 = sphi 0, %s228
    $region4: #{critic_forward.1} parent=1 // loop_header_branch
      %23 = sbr.rel (%p21) target = $region8
    $region5: #{critic_forward.1} parent=1 // loop_body
      %s25 = ssub.s32 %s20, 1
      %s26 = ssub.s32 %s20, 2
      %s27 = sadd.s32 %s20, 1
      %s28 = ssub.s32 %s20, %s27
      %p29 = scmp.eq.s32.totalorder %s28, 0
      %s31 = sadd.s32 %s30, 1
      %s32 = scalar_select %p29, %s30, %s31
      %p35 = pneg %p29
      %p36 = scmp.eq.s32.totalorder %s20, 1
      %p37 = por %p35, %p36
      %p38 = scmp.ne.s32.totalorder %s30, %s33
      %p39 = scmp.eq.s32.totalorder %s20, 0
      %p40 = por %p38, %p39
      %p41 = scmp.ne.s32.totalorder %s30, %s33
      %p42 = scmp.eq.s32.totalorder %s25, 1
      %p43 = por %p41, %p42
      %p44 = scmp.ne.s32.totalorder %s33, %s34
      %p45 = scmp.eq.s32.totalorder %s25, 0
      %p46 = por %p44, %p45
      %p47 = scmp.ne.s32.totalorder %s33, %s34
      %p48 = scmp.eq.s32.totalorder %s26, 1
      %p49 = por %p47, %p48
      %p51 = scmp.ne.s32.totalorder %s34, %s50
      %p52 = scmp.eq.s32.totalorder %s26, 0
      %p53 = por %p51, %p52
      %s55 = sadd.s32 %s54, 1
      %p58 = scmp.eq.s32.totalorder %s20, 1
      %p59 = scmp.ne.s32.totalorder %s54, %s56
      %p60 = scmp.eq.s32.totalorder %s20, 0
      %p61 = por %p59, %p60
      %p62 = scmp.ne.s32.totalorder %s54, %s56
      %p63 = scmp.eq.s32.totalorder %s25, 1
      %p64 = por %p62, %p63
      %p65 = scmp.ne.s32.totalorder %s56, %s57
      %p66 = scmp.eq.s32.totalorder %s25, 0
      %p67 = por %p65, %p66
      %p68 = scmp.ne.s32.totalorder %s56, %s57
      %p69 = scmp.eq.s32.totalorder %s26, 1
      %p70 = por %p68, %p69
      %p72 = scmp.ne.s32.totalorder %s57, %s71
      %p73 = scmp.eq.s32.totalorder %s26, 0
      %p74 = por %p72, %p73
      %s76 = sadd.s32 %s75, 1
      %p79 = scmp.eq.s32.totalorder %s20, 1
      %p80 = scmp.ne.s32.totalorder %s75, %s77
      %p81 = scmp.eq.s32.totalorder %s20, 0
      %p82 = por %p80, %p81
      %p83 = scmp.ne.s32.totalorder %s75, %s77
      %p84 = scmp.eq.s32.totalorder %s25, 1
      %p85 = por %p83, %p84
      %p86 = scmp.ne.s32.totalorder %s77, %s78
      %p87 = scmp.eq.s32.totalorder %s25, 0
      %p88 = por %p86, %p87
      %p89 = scmp.ne.s32.totalorder %s77, %s78
      %p90 = scmp.eq.s32.totalorder %s26, 1
      %p91 = por %p89, %p90
      %p93 = scmp.ne.s32.totalorder %s78, %s92
      %p94 = scmp.eq.s32.totalorder %s26, 0
      %p95 = por %p93, %p94
      %s97 = sadd.s32 %s96, 1
      %p100 = scmp.eq.s32.totalorder %s20, 1
      %p101 = scmp.ne.s32.totalorder %s96, %s98
      %p102 = scmp.eq.s32.totalorder %s20, 0
      %p103 = por %p101, %p102
      %p104 = scmp.ne.s32.totalorder %s96, %s98
      %p105 = scmp.eq.s32.totalorder %s25, 1
      %p106 = por %p104, %p105
      %p107 = scmp.ne.s32.totalorder %s98, %s99
      %p108 = scmp.eq.s32.totalorder %s25, 0
      %p109 = por %p107, %p108
      %p110 = scmp.ne.s32.totalorder %s98, %s99
      %p111 = scmp.eq.s32.totalorder %s26, 1
      %p112 = por %p110, %p111
      %p114 = scmp.ne.s32.totalorder %s99, %s113
      %p115 = scmp.eq.s32.totalorder %s26, 0
      %p116 = por %p114, %p115
      %s118 = sadd.s32 %s117, 1
      %p121 = scmp.eq.s32.totalorder %s20, 1
      %p122 = scmp.ne.s32.totalorder %s117, %s119
      %p123 = scmp.eq.s32.totalorder %s20, 0
      %p124 = por %p122, %p123
      %p125 = scmp.ne.s32.totalorder %s117, %s119
      %p126 = scmp.eq.s32.totalorder %s25, 1
      %p127 = por %p125, %p126
      %p128 = scmp.ne.s32.totalorder %s119, %s120
      %p129 = scmp.eq.s32.totalorder %s25, 0
      %p130 = por %p128, %p129
      %p131 = scmp.ne.s32.totalorder %s119, %s120
      %p132 = scmp.eq.s32.totalorder %s26, 1
      %p133 = por %p131, %p132
      %p135 = scmp.ne.s32.totalorder %s120, %s134
      %p136 = scmp.eq.s32.totalorder %s26, 0
      %p137 = por %p135, %p136
      %s139 = sadd.s32 %s138, 1
      %p142 = scmp.eq.s32.totalorder %s20, 1
      %p143 = scmp.ne.s32.totalorder %s138, %s140
      %p144 = scmp.eq.s32.totalorder %s20, 0
      %p145 = por %p143, %p144
      %p146 = scmp.ne.s32.totalorder %s138, %s140
      %p147 = scmp.eq.s32.totalorder %s25, 1
      %p148 = por %p146, %p147
      %p149 = scmp.ne.s32.totalorder %s140, %s141
      %p150 = scmp.eq.s32.totalorder %s25, 0
      %p151 = por %p149, %p150
      %p152 = scmp.ne.s32.totalorder %s140, %s141
      %p153 = scmp.eq.s32.totalorder %s26, 1
      %p154 = por %p152, %p153
      %p156 = scmp.ne.s32.totalorder %s141, %s155
      %p157 = scmp.eq.s32.totalorder %s26, 0
      %p158 = por %p156, %p157
      %s160 = sadd.s32 %s159, 1
      %p163 = scmp.eq.s32.totalorder %s20, 1
      %p164 = scmp.ne.s32.totalorder %s159, %s161
      %p165 = scmp.eq.s32.totalorder %s20, 0
      %p166 = por %p164, %p165
      %p167 = scmp.ne.s32.totalorder %s159, %s161
      %p168 = scmp.eq.s32.totalorder %s25, 1
      %p169 = por %p167, %p168
      %p170 = scmp.ne.s32.totalorder %s161, %s162
      %p171 = scmp.eq.s32.totalorder %s25, 0
      %p172 = por %p170, %p171
      %p173 = scmp.ne.s32.totalorder %s161, %s162
      %p174 = scmp.eq.s32.totalorder %s26, 1
      %p175 = por %p173, %p174
      %p177 = scmp.ne.s32.totalorder %s162, %s176
      %p178 = scmp.eq.s32.totalorder %s26, 0
      %p179 = por %p177, %p178
      %s181 = sadd.s32 %s180, 1
      %p184 = scmp.eq.s32.totalorder %s20, 1
      %p185 = scmp.ne.s32.totalorder %s180, %s182
      %p186 = scmp.eq.s32.totalorder %s20, 0
      %p187 = por %p185, %p186
      %p188 = scmp.ne.s32.totalorder %s180, %s182
      %p189 = scmp.eq.s32.totalorder %s25, 1
      %p190 = por %p188, %p189
      %p191 = scmp.ne.s32.totalorder %s182, %s183
      %p192 = scmp.eq.s32.totalorder %s25, 0
      %p193 = por %p191, %p192
      %p194 = scmp.ne.s32.totalorder %s182, %s183
      %p195 = scmp.eq.s32.totalorder %s26, 1
      %p196 = por %p194, %p195
      %p198 = scmp.ne.s32.totalorder %s183, %s197
      %p199 = scmp.eq.s32.totalorder %s26, 0
      %p200 = por %p198, %p199
      %s202 = sadd.s32 %s201, 1
      %p205 = scmp.eq.s32.totalorder %s20, 1
      %p206 = scmp.ne.s32.totalorder %s201, %s203
      %p207 = scmp.eq.s32.totalorder %s20, 0
      %p208 = por %p206, %p207
      %p209 = scmp.ne.s32.totalorder %s201, %s203
      %p210 = scmp.eq.s32.totalorder %s25, 1
      %p211 = por %p209, %p210
      %p212 = scmp.ne.s32.totalorder %s203, %s204
      %p213 = scmp.eq.s32.totalorder %s25, 0
      %p214 = por %p212, %p213
      %p215 = scmp.ne.s32.totalorder %s203, %s204
      %p216 = scmp.eq.s32.totalorder %s26, 1
      %p217 = por %p215, %p216
      %p219 = scmp.ne.s32.totalorder %s204, %s218
      %p220 = scmp.eq.s32.totalorder %s26, 0
      %p221 = por %p219, %p220
      %s222 = ssub.s32 %s20, %s27
      %p223 = scmp.eq.s32.totalorder %s222, 0
      %s225 = sadd.s32 %s224, 1
      %s226 = scalar_select %p223, %s224, %s225
      %p229 = pneg %p223
      %p230 = scmp.eq.s32.totalorder %s20, 1
      %p231 = por %p229, %p230
      %p232 = scmp.ne.s32.totalorder %s224, %s227
      %p233 = scmp.eq.s32.totalorder %s20, 0
      %p234 = por %p232, %p233
      %p235 = scmp.ne.s32.totalorder %s224, %s227
      %p236 = scmp.eq.s32.totalorder %s25, 1
      %p237 = por %p235, %p236
      %p238 = scmp.ne.s32.totalorder %s227, %s228
      %p239 = scmp.eq.s32.totalorder %s25, 0
      %p240 = por %p238, %p239
      %p241 = scmp.ne.s32.totalorder %s227, %s228
      %p242 = scmp.eq.s32.totalorder %s26, 1
      %p243 = por %p241, %p242
      %p245 = scmp.ne.s32.totalorder %s228, %s244
      %p246 = scmp.eq.s32.totalorder %s26, 0
      %p247 = por %p245, %p246
      %p248 = scmp.le.s32.totalorder 1, %s20
      %p249 = scmp.lt.s32.totalorder %s20, 3
      %p250 = pnand %p248, %p249
      %p251 = pneg %p250
      // Predicated region
      $region9: #{critic_forward.1} parent=5 // pred_check
        _
      $region10: #{critic_forward.1} parent=5 // pred_check_branch
        %253 = sbr.rel (%p250) target = $region12
      $region11: #{critic_forward.1} parent=5 // pred_region
        %s254 = ssub.s32 %s20, 1
        // Predicated region
        $region13: #{critic_forward.1} parent=11 // pred_check
          %p255 = pneg %p67
        $region14: #{critic_forward.1} parent=11 // pred_check_branch
          %257 = sbr.rel (%p255) target = $region16
        $region15: #{critic_forward.1} parent=11 // pred_region
          _
        $region16: #{critic_forward.1} parent=11 // pred_fallthru
          _
        // Predicated region
        $region17: #{critic_forward.1} parent=11 // pred_check
          %p258 = pneg %p88
        $region18: #{critic_forward.1} parent=11 // pred_check_branch
          %260 = sbr.rel (%p258) target = $region20
        $region19: #{critic_forward.1} parent=11 // pred_region
          _
        $region20: #{critic_forward.1} parent=11 // pred_fallthru
          _
        // Predicated region
        $region21: #{critic_forward.1} parent=11 // pred_check
          %p261 = pneg %p109
        $region22: #{critic_forward.1} parent=11 // pred_check_branch
          %263 = sbr.rel (%p261) target = $region24
        $region23: #{critic_forward.1} parent=11 // pred_region
          _
        $region24: #{critic_forward.1} parent=11 // pred_fallthru
          _
        // Predicated region
        $region25: #{critic_forward.1} parent=11 // pred_check
          %p264 = pneg %p130
        $region26: #{critic_forward.1} parent=11 // pred_check_branch
          %266 = sbr.rel (%p264) target = $region28
        $region27: #{critic_forward.1} parent=11 // pred_region
          _
        $region28: #{critic_forward.1} parent=11 // pred_fallthru
          _
        // Predicated region
        $region29: #{critic_forward.1} parent=11 // pred_check
          %p267 = pneg %p151
        $region30: #{critic_forward.1} parent=11 // pred_check_branch
          %269 = sbr.rel (%p267) target = $region32
        $region31: #{critic_forward.1} parent=11 // pred_region
          _
        $region32: #{critic_forward.1} parent=11 // pred_fallthru
          _
        // Predicated region
        $region33: #{critic_forward.1} parent=11 // pred_check
          %p270 = pneg %p172
        $region34: #{critic_forward.1} parent=11 // pred_check_branch
          %272 = sbr.rel (%p270) target = $region36
        $region35: #{critic_forward.1} parent=11 // pred_region
          _
        $region36: #{critic_forward.1} parent=11 // pred_fallthru
          _
        // Predicated region
        $region37: #{critic_forward.1} parent=11 // pred_check
          %p273 = pneg %p193
        $region38: #{critic_forward.1} parent=11 // pred_check_branch
          %275 = sbr.rel (%p273) target = $region40
        $region39: #{critic_forward.1} parent=11 // pred_region
          _
        $region40: #{critic_forward.1} parent=11 // pred_fallthru
          _
        // Predicated region
        $region41: #{critic_forward.1} parent=11 // pred_check
          %p276 = pneg %p214
        $region42: #{critic_forward.1} parent=11 // pred_check_branch
          %278 = sbr.rel (%p276) target = $region44
        $region43: #{critic_forward.1} parent=11 // pred_region
          _
        $region44: #{critic_forward.1} parent=11 // pred_fallthru
          _
      $region12: #{critic_forward.1} parent=5 // pred_fallthru
        _
      %p279 = scmp.lt.s32.totalorder %s20, 2
      // Predicated region
      $region45: #{critic_forward.1} parent=5 // pred_check
        %p280 = pneg %p279
      $region46: #{critic_forward.1} parent=5 // pred_check_branch
        %282 = sbr.rel (%p280) target = $region48
      $region47: #{critic_forward.1} parent=5 // pred_region
        // Predicated region
        $region49: #{critic_forward.1} parent=47 // pred_check
          %p283 = pneg %p40
        $region50: #{critic_forward.1} parent=47 // pred_check_branch
          %285 = sbr.rel (%p283) target = $region52
        $region51: #{critic_forward.1} parent=47 // pred_region
          %p286 = scmp.lt.s32.totalorder %s20, 1
          %s287 = scalar_select %p286, %s20, 1
          %s288 = smul.addr %s287, 512
          %s289 = smul.addr %s288, 8
          %s290 = scalar_lea.vmem %s0, %s289
        $region52: #{critic_forward.1} parent=47 // pred_fallthru
          _
      $region48: #{critic_forward.1} parent=5 // pred_fallthru
        _
      %p291 = scmp.le.s32.totalorder 1, %s20
      %p292 = scmp.lt.s32.totalorder %s20, 3
      %p293 = pnand %p291, %p292
      %p294 = pneg %p293
      // Predicated region
      $region53: #{critic_forward.1} parent=5 // pred_check
        _
      $region54: #{critic_forward.1} parent=5 // pred_check_branch
        %296 = sbr.rel (%p293) target = $region56
      $region55: #{critic_forward.1} parent=5 // pred_region
        %s297 = ssub.s32 %s20, 1
        %p298 = scmp.lt.s32.totalorder %s25, 1
        %s299 = scalar_select %p298, %s25, 1
        %s300 = smul.addr %s299, 512
        %s301 = smul.addr %s300, 8
        %s302 = scalar_lea.vmem %s0, %s301
        %p303 = pneg %p46
        %p304 = pneg %p43
        %p305 = pneg %p67
        %p306 = pneg %p64
        %p307 = pneg %p88
        %p308 = pneg %p85
        %p309 = pneg %p109
        %p310 = pneg %p106
        %p311 = pneg %p130
        %p312 = pneg %p127
        %p313 = pneg %p151
        %p314 = pneg %p148
        %p315 = pneg %p172
        %p316 = pneg %p169
        %p317 = pneg %p193
        %p318 = pneg %p190
        %p319 = pneg %p214
        %p320 = pneg %p211
        %p321 = pneg %p240
        %p322 = pneg %p237
        %s323 = sand.u32 %s227, 1
        %s324 = scalar_lea.sflag [#allocation4], %s323
        %s325 = sand.u32 %s227, 1
        %s326 = scalar_lea.vmem [#allocation3], %s325
        %p327 = scmp.lt.s32.totalorder %s25, 1
        %s328 = scalar_select %p327, %s25, 1
        %s329 = smul.addr %s328, 512
        %s330 = smul.addr %s329, 8
        %s331 = scalar_lea.vmem %s0, %s330
        %v332 = vld [vmem:[%s331] sm:$0xff]
        %v333 = vld [vmem:[%s331 + $0x8] sm:$0xff]
        %v334 = vld [vmem:[%s331 + $0x10] sm:$0xff]
        %v335 = vld [vmem:[%s331 + $0x18] sm:$0xff]
        %v336 = vld [vmem:[%s331 + $0x20] sm:$0xff]
        %v337 = vld [vmem:[%s331 + $0x28] sm:$0xff]
        %v338 = vld [vmem:[%s331 + $0x30] sm:$0xff]
        %v339 = vld [vmem:[%s331 + $0x38] sm:$0xff]
        %v340 = vld [vmem:[%s331 + $0x40] sm:$0xff]
        %v341 = vld [vmem:[%s331 + $0x48] sm:$0xff]
        %v342 = vld [vmem:[%s331 + $0x50] sm:$0xff]
        %v343 = vld [vmem:[%s331 + $0x58] sm:$0xff]
        %v344 = vld [vmem:[%s331 + $0x60] sm:$0xff]
        %v345 = vld [vmem:[%s331 + $0x68] sm:$0xff]
        %v346 = vld [vmem:[%s331 + $0x70] sm:$0xff]
        %v347 = vld [vmem:[%s331 + $0x78] sm:$0xff]
        %v348 = vld [vmem:[%s331 + $0x80] sm:$0xff]
        %v349 = vld [vmem:[%s331 + $0x88] sm:$0xff]
        %v350 = vld [vmem:[%s331 + $0x90] sm:$0xff]
        %v351 = vld [vmem:[%s331 + $0x98] sm:$0xff]
        %v352 = vld [vmem:[%s331 + $0xa0] sm:$0xff]
        %v353 = vld [vmem:[%s331 + $0xa8] sm:$0xff]
        %v354 = vld [vmem:[%s331 + $0xb0] sm:$0xff]
        %v355 = vld [vmem:[%s331 + $0xb8] sm:$0xff]
        %v356 = vld [vmem:[%s331 + $0xc0] sm:$0xff]
        %v357 = vld [vmem:[%s331 + $0xc8] sm:$0xff]
        %v358 = vld [vmem:[%s331 + $0xd0] sm:$0xff]
        %v359 = vld [vmem:[%s331 + $0xd8] sm:$0xff]
        %v360 = vld [vmem:[%s331 + $0xe0] sm:$0xff]
        %v361 = vld [vmem:[%s331 + $0xe8] sm:$0xff]
        %v362 = vld [vmem:[%s331 + $0xf0] sm:$0xff]
        %v363 = vld [vmem:[%s331 + $0xf8] sm:$0xff]
        %v364 = vld [vmem:[%s331 + $0x100] sm:$0xff]
        %v365 = vld [vmem:[%s331 + $0x108] sm:$0xff]
        %v366 = vld [vmem:[%s331 + $0x110] sm:$0xff]
        %v367 = vld [vmem:[%s331 + $0x118] sm:$0xff]
        %v368 = vld [vmem:[%s331 + $0x120] sm:$0xff]
        %v369 = vld [vmem:[%s331 + $0x128] sm:$0xff]
        %v370 = vld [vmem:[%s331 + $0x130] sm:$0xff]
        %v371 = vld [vmem:[%s331 + $0x138] sm:$0xff]
        %v372 = vld [vmem:[%s331 + $0x140] sm:$0xff]
        %v373 = vld [vmem:[%s331 + $0x148] sm:$0xff]
        %v374 = vld [vmem:[%s331 + $0x150] sm:$0xff]
        %v375 = vld [vmem:[%s331 + $0x158] sm:$0xff]
        %v376 = vld [vmem:[%s331 + $0x160] sm:$0xff]
        %v377 = vld [vmem:[%s331 + $0x168] sm:$0xff]
        %v378 = vld [vmem:[%s331 + $0x170] sm:$0xff]
        %v379 = vld [vmem:[%s331 + $0x178] sm:$0xff]
        %v380 = vld [vmem:[%s331 + $0x180] sm:$0xff]
        %v381 = vld [vmem:[%s331 + $0x188] sm:$0xff]
        %v382 = vld [vmem:[%s331 + $0x190] sm:$0xff]
        %v383 = vld [vmem:[%s331 + $0x198] sm:$0xff]
        %v384 = vld [vmem:[%s331 + $0x1a0] sm:$0xff]
        %v385 = vld [vmem:[%s331 + $0x1a8] sm:$0xff]
        %v386 = vld [vmem:[%s331 + $0x1b0] sm:$0xff]
        %v387 = vld [vmem:[%s331 + $0x1b8] sm:$0xff]
        %v388 = vld [vmem:[%s331 + $0x1c0] sm:$0xff]
        %v389 = vld [vmem:[%s331 + $0x1c8] sm:$0xff]
        %v390 = vld [vmem:[%s331 + $0x1d0] sm:$0xff]
        %v391 = vld [vmem:[%s331 + $0x1d8] sm:$0xff]
        %v392 = vld [vmem:[%s331 + $0x1e0] sm:$0xff]
        %v393 = vld [vmem:[%s331 + $0x1e8] sm:$0xff]
        %v394 = vld [vmem:[%s331 + $0x1f0] sm:$0xff]
        %v395 = vld [vmem:[%s331 + $0x1f8] sm:$0xff]
        %v396 = vld [vmem:[%s331 + $0x200] sm:$0xff]
        %v397 = vld [vmem:[%s331 + $0x208] sm:$0xff]
        %v398 = vld [vmem:[%s331 + $0x210] sm:$0xff]
        %v399 = vld [vmem:[%s331 + $0x218] sm:$0xff]
        %v400 = vld [vmem:[%s331 + $0x220] sm:$0xff]
        %v401 = vld [vmem:[%s331 + $0x228] sm:$0xff]
        %v402 = vld [vmem:[%s331 + $0x230] sm:$0xff]
        %v403 = vld [vmem:[%s331 + $0x238] sm:$0xff]
        %v404 = vld [vmem:[%s331 + $0x240] sm:$0xff]
        %v405 = vld [vmem:[%s331 + $0x248] sm:$0xff]
        %v406 = vld [vmem:[%s331 + $0x250] sm:$0xff]
        %v407 = vld [vmem:[%s331 + $0x258] sm:$0xff]
        %v408 = vld [vmem:[%s331 + $0x260] sm:$0xff]
        %v409 = vld [vmem:[%s331 + $0x268] sm:$0xff]
        %v410 = vld [vmem:[%s331 + $0x270] sm:$0xff]
        %v411 = vld [vmem:[%s331 + $0x278] sm:$0xff]
        %v412 = vld [vmem:[%s331 + $0x280] sm:$0xff]
        %v413 = vld [vmem:[%s331 + $0x288] sm:$0xff]
        %v414 = vld [vmem:[%s331 + $0x290] sm:$0xff]
        %v415 = vld [vmem:[%s331 + $0x298] sm:$0xff]
        %v416 = vld [vmem:[%s331 + $0x2a0] sm:$0xff]
        %v417 = vld [vmem:[%s331 + $0x2a8] sm:$0xff]
        %v418 = vld [vmem:[%s331 + $0x2b0] sm:$0xff]
        %v419 = vld [vmem:[%s331 + $0x2b8] sm:$0xff]
        %v420 = vld [vmem:[%s331 + $0x2c0] sm:$0xff]
        %v421 = vld [vmem:[%s331 + $0x2c8] sm:$0xff]
        %v422 = vld [vmem:[%s331 + $0x2d0] sm:$0xff]
        %v423 = vld [vmem:[%s331 + $0x2d8] sm:$0xff]
        %v424 = vld [vmem:[%s331 + $0x2e0] sm:$0xff]
        %v425 = vld [vmem:[%s331 + $0x2e8] sm:$0xff]
        %v426 = vld [vmem:[%s331 + $0x2f0] sm:$0xff]
        %v427 = vld [vmem:[%s331 + $0x2f8] sm:$0xff]
        %v428 = vld [vmem:[%s331 + $0x300] sm:$0xff]
        %v429 = vld [vmem:[%s331 + $0x308] sm:$0xff]
        %v430 = vld [vmem:[%s331 + $0x310] sm:$0xff]
        %v431 = vld [vmem:[%s331 + $0x318] sm:$0xff]
        %v432 = vld [vmem:[%s331 + $0x320] sm:$0xff]
        %v433 = vld [vmem:[%s331 + $0x328] sm:$0xff]
        %v434 = vld [vmem:[%s331 + $0x330] sm:$0xff]
        %v435 = vld [vmem:[%s331 + $0x338] sm:$0xff]
        %v436 = vld [vmem:[%s331 + $0x340] sm:$0xff]
        %v437 = vld [vmem:[%s331 + $0x348] sm:$0xff]
        %v438 = vld [vmem:[%s331 + $0x350] sm:$0xff]
        %v439 = vld [vmem:[%s331 + $0x358] sm:$0xff]
        %v440 = vld [vmem:[%s331 + $0x360] sm:$0xff]
        %v441 = vld [vmem:[%s331 + $0x368] sm:$0xff]
        %v442 = vld [vmem:[%s331 + $0x370] sm:$0xff]
        %v443 = vld [vmem:[%s331 + $0x378] sm:$0xff]
        %v444 = vld [vmem:[%s331 + $0x380] sm:$0xff]
        %v445 = vld [vmem:[%s331 + $0x388] sm:$0xff]
        %v446 = vld [vmem:[%s331 + $0x390] sm:$0xff]
        %v447 = vld [vmem:[%s331 + $0x398] sm:$0xff]
        %v448 = vld [vmem:[%s331 + $0x3a0] sm:$0xff]
        %v449 = vld [vmem:[%s331 + $0x3a8] sm:$0xff]
        %v450 = vld [vmem:[%s331 + $0x3b0] sm:$0xff]
        %v451 = vld [vmem:[%s331 + $0x3b8] sm:$0xff]
        %v452 = vld [vmem:[%s331 + $0x3c0] sm:$0xff]
        %v453 = vld [vmem:[%s331 + $0x3c8] sm:$0xff]
        %v454 = vld [vmem:[%s331 + $0x3d0] sm:$0xff]
        %v455 = vld [vmem:[%s331 + $0x3d8] sm:$0xff]
        %v456 = vld [vmem:[%s331 + $0x3e0] sm:$0xff]
        %v457 = vld [vmem:[%s331 + $0x3e8] sm:$0xff]
        %v458 = vld [vmem:[%s331 + $0x3f0] sm:$0xff]
        %v459 = vld [vmem:[%s331 + $0x3f8] sm:$0xff]
        %v460 = vld [vmem:[%s331 + $0x400] sm:$0xff]
        %v461 = vld [vmem:[%s331 + $0x408] sm:$0xff]
        %v462 = vld [vmem:[%s331 + $0x410] sm:$0xff]
        %v463 = vld [vmem:[%s331 + $0x418] sm:$0xff]
        %v464 = vld [vmem:[%s331 + $0x420] sm:$0xff]
        %v465 = vld [vmem:[%s331 + $0x428] sm:$0xff]
        %v466 = vld [vmem:[%s331 + $0x430] sm:$0xff]
        %v467 = vld [vmem:[%s331 + $0x438] sm:$0xff]
        %v468 = vld [vmem:[%s331 + $0x440] sm:$0xff]
        %v469 = vld [vmem:[%s331 + $0x448] sm:$0xff]
        %v470 = vld [vmem:[%s331 + $0x450] sm:$0xff]
        %v471 = vld [vmem:[%s331 + $0x458] sm:$0xff]
        %v472 = vld [vmem:[%s331 + $0x460] sm:$0xff]
        %v473 = vld [vmem:[%s331 + $0x468] sm:$0xff]
        %v474 = vld [vmem:[%s331 + $0x470] sm:$0xff]
        %v475 = vld [vmem:[%s331 + $0x478] sm:$0xff]
        %v476 = vld [vmem:[%s331 + $0x480] sm:$0xff]
        %v477 = vld [vmem:[%s331 + $0x488] sm:$0xff]
        %v478 = vld [vmem:[%s331 + $0x490] sm:$0xff]
        %v479 = vld [vmem:[%s331 + $0x498] sm:$0xff]
        %v480 = vld [vmem:[%s331 + $0x4a0] sm:$0xff]
        %v481 = vld [vmem:[%s331 + $0x4a8] sm:$0xff]
        %v482 = vld [vmem:[%s331 + $0x4b0] sm:$0xff]
        %v483 = vld [vmem:[%s331 + $0x4b8] sm:$0xff]
        %v484 = vld [vmem:[%s331 + $0x4c0] sm:$0xff]
        %v485 = vld [vmem:[%s331 + $0x4c8] sm:$0xff]
        %v486 = vld [vmem:[%s331 + $0x4d0] sm:$0xff]
        %v487 = vld [vmem:[%s331 + $0x4d8] sm:$0xff]
        %v488 = vld [vmem:[%s331 + $0x4e0] sm:$0xff]
        %v489 = vld [vmem:[%s331 + $0x4e8] sm:$0xff]
        %v490 = vld [vmem:[%s331 + $0x4f0] sm:$0xff]
        %v491 = vld [vmem:[%s331 + $0x4f8] sm:$0xff]
        %v492 = vld [vmem:[%s331 + $0x500] sm:$0xff]
        %v493 = vld [vmem:[%s331 + $0x508] sm:$0xff]
        %v494 = vld [vmem:[%s331 + $0x510] sm:$0xff]
        %v495 = vld [vmem:[%s331 + $0x518] sm:$0xff]
        %v496 = vld [vmem:[%s331 + $0x520] sm:$0xff]
        %v497 = vld [vmem:[%s331 + $0x528] sm:$0xff]
        %v498 = vld [vmem:[%s331 + $0x530] sm:$0xff]
        %v499 = vld [vmem:[%s331 + $0x538] sm:$0xff]
        %v500 = vld [vmem:[%s331 + $0x540] sm:$0xff]
        %v501 = vld [vmem:[%s331 + $0x548] sm:$0xff]
        %v502 = vld [vmem:[%s331 + $0x550] sm:$0xff]
        %v503 = vld [vmem:[%s331 + $0x558] sm:$0xff]
        %v504 = vld [vmem:[%s331 + $0x560] sm:$0xff]
        %v505 = vld [vmem:[%s331 + $0x568] sm:$0xff]
        %v506 = vld [vmem:[%s331 + $0x570] sm:$0xff]
        %v507 = vld [vmem:[%s331 + $0x578] sm:$0xff]
        %v508 = vld [vmem:[%s331 + $0x580] sm:$0xff]
        %v509 = vld [vmem:[%s331 + $0x588] sm:$0xff]
        %v510 = vld [vmem:[%s331 + $0x590] sm:$0xff]
        %v511 = vld [vmem:[%s331 + $0x598] sm:$0xff]
        %v512 = vld [vmem:[%s331 + $0x5a0] sm:$0xff]
        %v513 = vld [vmem:[%s331 + $0x5a8] sm:$0xff]
        %v514 = vld [vmem:[%s331 + $0x5b0] sm:$0xff]
        %v515 = vld [vmem:[%s331 + $0x5b8] sm:$0xff]
        %v516 = vld [vmem:[%s331 + $0x5c0] sm:$0xff]
        %v517 = vld [vmem:[%s331 + $0x5c8] sm:$0xff]
        %v518 = vld [vmem:[%s331 + $0x5d0] sm:$0xff]
        %v519 = vld [vmem:[%s331 + $0x5d8] sm:$0xff]
        %v520 = vld [vmem:[%s331 + $0x5e0] sm:$0xff]
        %v521 = vld [vmem:[%s331 + $0x5e8] sm:$0xff]
        %v522 = vld [vmem:[%s331 + $0x5f0] sm:$0xff]
        %v523 = vld [vmem:[%s331 + $0x5f8] sm:$0xff]
        %v524 = vld [vmem:[%s331 + $0x600] sm:$0xff]
        %v525 = vld [vmem:[%s331 + $0x608] sm:$0xff]
        %v526 = vld [vmem:[%s331 + $0x610] sm:$0xff]
        %v527 = vld [vmem:[%s331 + $0x618] sm:$0xff]
        %v528 = vld [vmem:[%s331 + $0x620] sm:$0xff]
        %v529 = vld [vmem:[%s331 + $0x628] sm:$0xff]
        %v530 = vld [vmem:[%s331 + $0x630] sm:$0xff]
        %v531 = vld [vmem:[%s331 + $0x638] sm:$0xff]
        %v532 = vld [vmem:[%s331 + $0x640] sm:$0xff]
        %v533 = vld [vmem:[%s331 + $0x648] sm:$0xff]
        %v534 = vld [vmem:[%s331 + $0x650] sm:$0xff]
        %v535 = vld [vmem:[%s331 + $0x658] sm:$0xff]
        %v536 = vld [vmem:[%s331 + $0x660] sm:$0xff]
        %v537 = vld [vmem:[%s331 + $0x668] sm:$0xff]
        %v538 = vld [vmem:[%s331 + $0x670] sm:$0xff]
        %v539 = vld [vmem:[%s331 + $0x678] sm:$0xff]
        %v540 = vld [vmem:[%s331 + $0x680] sm:$0xff]
        %v541 = vld [vmem:[%s331 + $0x688] sm:$0xff]
        %v542 = vld [vmem:[%s331 + $0x690] sm:$0xff]
        %v543 = vld [vmem:[%s331 + $0x698] sm:$0xff]
        %v544 = vld [vmem:[%s331 + $0x6a0] sm:$0xff]
        %v545 = vld [vmem:[%s331 + $0x6a8] sm:$0xff]
        %v546 = vld [vmem:[%s331 + $0x6b0] sm:$0xff]
        %v547 = vld [vmem:[%s331 + $0x6b8] sm:$0xff]
        %v548 = vld [vmem:[%s331 + $0x6c0] sm:$0xff]
        %v549 = vld [vmem:[%s331 + $0x6c8] sm:$0xff]
        %v550 = vld [vmem:[%s331 + $0x6d0] sm:$0xff]
        %v551 = vld [vmem:[%s331 + $0x6d8] sm:$0xff]
        %v552 = vld [vmem:[%s331 + $0x6e0] sm:$0xff]
        %v553 = vld [vmem:[%s331 + $0x6e8] sm:$0xff]
        %v554 = vld [vmem:[%s331 + $0x6f0] sm:$0xff]
        %v555 = vld [vmem:[%s331 + $0x6f8] sm:$0xff]
        %v556 = vld [vmem:[%s331 + $0x700] sm:$0xff]
        %v557 = vld [vmem:[%s331 + $0x708] sm:$0xff]
        %v558 = vld [vmem:[%s331 + $0x710] sm:$0xff]
        %v559 = vld [vmem:[%s331 + $0x718] sm:$0xff]
        %v560 = vld [vmem:[%s331 + $0x720] sm:$0xff]
        %v561 = vld [vmem:[%s331 + $0x728] sm:$0xff]
        %v562 = vld [vmem:[%s331 + $0x730] sm:$0xff]
        %v563 = vld [vmem:[%s331 + $0x738] sm:$0xff]
        %v564 = vld [vmem:[%s331 + $0x740] sm:$0xff]
        %v565 = vld [vmem:[%s331 + $0x748] sm:$0xff]
        %v566 = vld [vmem:[%s331 + $0x750] sm:$0xff]
        %v567 = vld [vmem:[%s331 + $0x758] sm:$0xff]
        %v568 = vld [vmem:[%s331 + $0x760] sm:$0xff]
        %v569 = vld [vmem:[%s331 + $0x768] sm:$0xff]
        %v570 = vld [vmem:[%s331 + $0x770] sm:$0xff]
        %v571 = vld [vmem:[%s331 + $0x778] sm:$0xff]
        %v572 = vld [vmem:[%s331 + $0x780] sm:$0xff]
        %v573 = vld [vmem:[%s331 + $0x788] sm:$0xff]
        %v574 = vld [vmem:[%s331 + $0x790] sm:$0xff]
        %v575 = vld [vmem:[%s331 + $0x798] sm:$0xff]
        %v576 = vld [vmem:[%s331 + $0x7a0] sm:$0xff]
        %v577 = vld [vmem:[%s331 + $0x7a8] sm:$0xff]
        %v578 = vld [vmem:[%s331 + $0x7b0] sm:$0xff]
        %v579 = vld [vmem:[%s331 + $0x7b8] sm:$0xff]
        %v580 = vld [vmem:[%s331 + $0x7c0] sm:$0xff]
        %v581 = vld [vmem:[%s331 + $0x7c8] sm:$0xff]
        %v582 = vld [vmem:[%s331 + $0x7d0] sm:$0xff]
        %v583 = vld [vmem:[%s331 + $0x7d8] sm:$0xff]
        %v584 = vld [vmem:[%s331 + $0x7e0] sm:$0xff]
        %v585 = vld [vmem:[%s331 + $0x7e8] sm:$0xff]
        %v586 = vld [vmem:[%s331 + $0x7f0] sm:$0xff]
        %v587 = vld [vmem:[%s331 + $0x7f8] sm:$0xff]
        %v588 = vld [vmem:[%s331 + $0x800] sm:$0xff]
        %v589 = vld [vmem:[%s331 + $0x808] sm:$0xff]
        %v590 = vld [vmem:[%s331 + $0x810] sm:$0xff]
        %v591 = vld [vmem:[%s331 + $0x818] sm:$0xff]
        %v592 = vld [vmem:[%s331 + $0x820] sm:$0xff]
        %v593 = vld [vmem:[%s331 + $0x828] sm:$0xff]
        %v594 = vld [vmem:[%s331 + $0x830] sm:$0xff]
        %v595 = vld [vmem:[%s331 + $0x838] sm:$0xff]
        %v596 = vld [vmem:[%s331 + $0x840] sm:$0xff]
        %v597 = vld [vmem:[%s331 + $0x848] sm:$0xff]
        %v598 = vld [vmem:[%s331 + $0x850] sm:$0xff]
        %v599 = vld [vmem:[%s331 + $0x858] sm:$0xff]
        %v600 = vld [vmem:[%s331 + $0x860] sm:$0xff]
        %v601 = vld [vmem:[%s331 + $0x868] sm:$0xff]
        %v602 = vld [vmem:[%s331 + $0x870] sm:$0xff]
        %v603 = vld [vmem:[%s331 + $0x878] sm:$0xff]
        %v604 = vld [vmem:[%s331 + $0x880] sm:$0xff]
        %v605 = vld [vmem:[%s331 + $0x888] sm:$0xff]
        %v606 = vld [vmem:[%s331 + $0x890] sm:$0xff]
        %v607 = vld [vmem:[%s331 + $0x898] sm:$0xff]
        %v608 = vld [vmem:[%s331 + $0x8a0] sm:$0xff]
        %v609 = vld [vmem:[%s331 + $0x8a8] sm:$0xff]
        %v610 = vld [vmem:[%s331 + $0x8b0] sm:$0xff]
        %v611 = vld [vmem:[%s331 + $0x8b8] sm:$0xff]
        %v612 = vld [vmem:[%s331 + $0x8c0] sm:$0xff]
        %v613 = vld [vmem:[%s331 + $0x8c8] sm:$0xff]
        %v614 = vld [vmem:[%s331 + $0x8d0] sm:$0xff]
        %v615 = vld [vmem:[%s331 + $0x8d8] sm:$0xff]
        %v616 = vld [vmem:[%s331 + $0x8e0] sm:$0xff]
        %v617 = vld [vmem:[%s331 + $0x8e8] sm:$0xff]
        %v618 = vld [vmem:[%s331 + $0x8f0] sm:$0xff]
        %v619 = vld [vmem:[%s331 + $0x8f8] sm:$0xff]
        %v620 = vld [vmem:[%s331 + $0x900] sm:$0xff]
        %v621 = vld [vmem:[%s331 + $0x908] sm:$0xff]
        %v622 = vld [vmem:[%s331 + $0x910] sm:$0xff]
        %v623 = vld [vmem:[%s331 + $0x918] sm:$0xff]
        %v624 = vld [vmem:[%s331 + $0x920] sm:$0xff]
        %v625 = vld [vmem:[%s331 + $0x928] sm:$0xff]
        %v626 = vld [vmem:[%s331 + $0x930] sm:$0xff]
        %v627 = vld [vmem:[%s331 + $0x938] sm:$0xff]
        %v628 = vld [vmem:[%s331 + $0x940] sm:$0xff]
        %v629 = vld [vmem:[%s331 + $0x948] sm:$0xff]
        %v630 = vld [vmem:[%s331 + $0x950] sm:$0xff]
        %v631 = vld [vmem:[%s331 + $0x958] sm:$0xff]
        %v632 = vld [vmem:[%s331 + $0x960] sm:$0xff]
        %v633 = vld [vmem:[%s331 + $0x968] sm:$0xff]
        %v634 = vld [vmem:[%s331 + $0x970] sm:$0xff]
        %v635 = vld [vmem:[%s331 + $0x978] sm:$0xff]
        %v636 = vld [vmem:[%s331 + $0x980] sm:$0xff]
        %v637 = vld [vmem:[%s331 + $0x988] sm:$0xff]
        %v638 = vld [vmem:[%s331 + $0x990] sm:$0xff]
        %v639 = vld [vmem:[%s331 + $0x998] sm:$0xff]
        %v640 = vld [vmem:[%s331 + $0x9a0] sm:$0xff]
        %v641 = vld [vmem:[%s331 + $0x9a8] sm:$0xff]
        %v642 = vld [vmem:[%s331 + $0x9b0] sm:$0xff]
        %v643 = vld [vmem:[%s331 + $0x9b8] sm:$0xff]
        %v644 = vld [vmem:[%s331 + $0x9c0] sm:$0xff]
        %v645 = vld [vmem:[%s331 + $0x9c8] sm:$0xff]
        %v646 = vld [vmem:[%s331 + $0x9d0] sm:$0xff]
        %v647 = vld [vmem:[%s331 + $0x9d8] sm:$0xff]
        %v648 = vld [vmem:[%s331 + $0x9e0] sm:$0xff]
        %v649 = vld [vmem:[%s331 + $0x9e8] sm:$0xff]
        %v650 = vld [vmem:[%s331 + $0x9f0] sm:$0xff]
        %v651 = vld [vmem:[%s331 + $0x9f8] sm:$0xff]
        %v652 = vld [vmem:[%s331 + $0xa00] sm:$0xff]
        %v653 = vld [vmem:[%s331 + $0xa08] sm:$0xff]
        %v654 = vld [vmem:[%s331 + $0xa10] sm:$0xff]
        %v655 = vld [vmem:[%s331 + $0xa18] sm:$0xff]
        %v656 = vld [vmem:[%s331 + $0xa20] sm:$0xff]
        %v657 = vld [vmem:[%s331 + $0xa28] sm:$0xff]
        %v658 = vld [vmem:[%s331 + $0xa30] sm:$0xff]
        %v659 = vld [vmem:[%s331 + $0xa38] sm:$0xff]
        %v660 = vld [vmem:[%s331 + $0xa40] sm:$0xff]
        %v661 = vld [vmem:[%s331 + $0xa48] sm:$0xff]
        %v662 = vld [vmem:[%s331 + $0xa50] sm:$0xff]
        %v663 = vld [vmem:[%s331 + $0xa58] sm:$0xff]
        %v664 = vld [vmem:[%s331 + $0xa60] sm:$0xff]
        %v665 = vld [vmem:[%s331 + $0xa68] sm:$0xff]
        %v666 = vld [vmem:[%s331 + $0xa70] sm:$0xff]
        %v667 = vld [vmem:[%s331 + $0xa78] sm:$0xff]
        %v668 = vld [vmem:[%s331 + $0xa80] sm:$0xff]
        %v669 = vld [vmem:[%s331 + $0xa88] sm:$0xff]
        %v670 = vld [vmem:[%s331 + $0xa90] sm:$0xff]
        %v671 = vld [vmem:[%s331 + $0xa98] sm:$0xff]
        %v672 = vld [vmem:[%s331 + $0xaa0] sm:$0xff]
        %v673 = vld [vmem:[%s331 + $0xaa8] sm:$0xff]
        %v674 = vld [vmem:[%s331 + $0xab0] sm:$0xff]
        %v675 = vld [vmem:[%s331 + $0xab8] sm:$0xff]
        %v676 = vld [vmem:[%s331 + $0xac0] sm:$0xff]
        %v677 = vld [vmem:[%s331 + $0xac8] sm:$0xff]
        %v678 = vld [vmem:[%s331 + $0xad0] sm:$0xff]
        %v679 = vld [vmem:[%s331 + $0xad8] sm:$0xff]
        %v680 = vld [vmem:[%s331 + $0xae0] sm:$0xff]
        %v681 = vld [vmem:[%s331 + $0xae8] sm:$0xff]
        %v682 = vld [vmem:[%s331 + $0xaf0] sm:$0xff]
        %v683 = vld [vmem:[%s331 + $0xaf8] sm:$0xff]
        %v684 = vld [vmem:[%s331 + $0xb00] sm:$0xff]
        %v685 = vld [vmem:[%s331 + $0xb08] sm:$0xff]
        %v686 = vld [vmem:[%s331 + $0xb10] sm:$0xff]
        %v687 = vld [vmem:[%s331 + $0xb18] sm:$0xff]
        %v688 = vld [vmem:[%s331 + $0xb20] sm:$0xff]
        %v689 = vld [vmem:[%s331 + $0xb28] sm:$0xff]
        %v690 = vld [vmem:[%s331 + $0xb30] sm:$0xff]
        %v691 = vld [vmem:[%s331 + $0xb38] sm:$0xff]
        %v692 = vld [vmem:[%s331 + $0xb40] sm:$0xff]
        %v693 = vld [vmem:[%s331 + $0xb48] sm:$0xff]
        %v694 = vld [vmem:[%s331 + $0xb50] sm:$0xff]
        %v695 = vld [vmem:[%s331 + $0xb58] sm:$0xff]
        %v696 = vld [vmem:[%s331 + $0xb60] sm:$0xff]
        %v697 = vld [vmem:[%s331 + $0xb68] sm:$0xff]
        %v698 = vld [vmem:[%s331 + $0xb70] sm:$0xff]
        %v699 = vld [vmem:[%s331 + $0xb78] sm:$0xff]
        %v700 = vld [vmem:[%s331 + $0xb80] sm:$0xff]
        %v701 = vld [vmem:[%s331 + $0xb88] sm:$0xff]
        %v702 = vld [vmem:[%s331 + $0xb90] sm:$0xff]
        %v703 = vld [vmem:[%s331 + $0xb98] sm:$0xff]
        %v704 = vld [vmem:[%s331 + $0xba0] sm:$0xff]
        %v705 = vld [vmem:[%s331 + $0xba8] sm:$0xff]
        %v706 = vld [vmem:[%s331 + $0xbb0] sm:$0xff]
        %v707 = vld [vmem:[%s331 + $0xbb8] sm:$0xff]
        %v708 = vld [vmem:[%s331 + $0xbc0] sm:$0xff]
        %v709 = vld [vmem:[%s331 + $0xbc8] sm:$0xff]
        %v710 = vld [vmem:[%s331 + $0xbd0] sm:$0xff]
        %v711 = vld [vmem:[%s331 + $0xbd8] sm:$0xff]
        %v712 = vld [vmem:[%s331 + $0xbe0] sm:$0xff]
        %v713 = vld [vmem:[%s331 + $0xbe8] sm:$0xff]
        %v714 = vld [vmem:[%s331 + $0xbf0] sm:$0xff]
        %v715 = vld [vmem:[%s331 + $0xbf8] sm:$0xff]
        %v716 = vld [vmem:[%s331 + $0xc00] sm:$0xff]
        %v717 = vld [vmem:[%s331 + $0xc08] sm:$0xff]
        %v718 = vld [vmem:[%s331 + $0xc10] sm:$0xff]
        %v719 = vld [vmem:[%s331 + $0xc18] sm:$0xff]
        %v720 = vld [vmem:[%s331 + $0xc20] sm:$0xff]
        %v721 = vld [vmem:[%s331 + $0xc28] sm:$0xff]
        %v722 = vld [vmem:[%s331 + $0xc30] sm:$0xff]
        %v723 = vld [vmem:[%s331 + $0xc38] sm:$0xff]
        %v724 = vld [vmem:[%s331 + $0xc40] sm:$0xff]
        %v725 = vld [vmem:[%s331 + $0xc48] sm:$0xff]
        %v726 = vld [vmem:[%s331 + $0xc50] sm:$0xff]
        %v727 = vld [vmem:[%s331 + $0xc58] sm:$0xff]
        %v728 = vld [vmem:[%s331 + $0xc60] sm:$0xff]
        %v729 = vld [vmem:[%s331 + $0xc68] sm:$0xff]
        %v730 = vld [vmem:[%s331 + $0xc70] sm:$0xff]
        %v731 = vld [vmem:[%s331 + $0xc78] sm:$0xff]
        %v732 = vld [vmem:[%s331 + $0xc80] sm:$0xff]
        %v733 = vld [vmem:[%s331 + $0xc88] sm:$0xff]
        %v734 = vld [vmem:[%s331 + $0xc90] sm:$0xff]
        %v735 = vld [vmem:[%s331 + $0xc98] sm:$0xff]
        %v736 = vld [vmem:[%s331 + $0xca0] sm:$0xff]
        %v737 = vld [vmem:[%s331 + $0xca8] sm:$0xff]
        %v738 = vld [vmem:[%s331 + $0xcb0] sm:$0xff]
        %v739 = vld [vmem:[%s331 + $0xcb8] sm:$0xff]
        %v740 = vld [vmem:[%s331 + $0xcc0] sm:$0xff]
        %v741 = vld [vmem:[%s331 + $0xcc8] sm:$0xff]
        %v742 = vld [vmem:[%s331 + $0xcd0] sm:$0xff]
        %v743 = vld [vmem:[%s331 + $0xcd8] sm:$0xff]
        %v744 = vld [vmem:[%s331 + $0xce0] sm:$0xff]
        %v745 = vld [vmem:[%s331 + $0xce8] sm:$0xff]
        %v746 = vld [vmem:[%s331 + $0xcf0] sm:$0xff]
        %v747 = vld [vmem:[%s331 + $0xcf8] sm:$0xff]
        %v748 = vld [vmem:[%s331 + $0xd00] sm:$0xff]
        %v749 = vld [vmem:[%s331 + $0xd08] sm:$0xff]
        %v750 = vld [vmem:[%s331 + $0xd10] sm:$0xff]
        %v751 = vld [vmem:[%s331 + $0xd18] sm:$0xff]
        %v752 = vld [vmem:[%s331 + $0xd20] sm:$0xff]
        %v753 = vld [vmem:[%s331 + $0xd28] sm:$0xff]
        %v754 = vld [vmem:[%s331 + $0xd30] sm:$0xff]
        %v755 = vld [vmem:[%s331 + $0xd38] sm:$0xff]
        %v756 = vld [vmem:[%s331 + $0xd40] sm:$0xff]
        %v757 = vld [vmem:[%s331 + $0xd48] sm:$0xff]
        %v758 = vld [vmem:[%s331 + $0xd50] sm:$0xff]
        %v759 = vld [vmem:[%s331 + $0xd58] sm:$0xff]
        %v760 = vld [vmem:[%s331 + $0xd60] sm:$0xff]
        %v761 = vld [vmem:[%s331 + $0xd68] sm:$0xff]
        %v762 = vld [vmem:[%s331 + $0xd70] sm:$0xff]
        %v763 = vld [vmem:[%s331 + $0xd78] sm:$0xff]
        %v764 = vld [vmem:[%s331 + $0xd80] sm:$0xff]
        %v765 = vld [vmem:[%s331 + $0xd88] sm:$0xff]
        %v766 = vld [vmem:[%s331 + $0xd90] sm:$0xff]
        %v767 = vld [vmem:[%s331 + $0xd98] sm:$0xff]
        %v768 = vld [vmem:[%s331 + $0xda0] sm:$0xff]
        %v769 = vld [vmem:[%s331 + $0xda8] sm:$0xff]
        %v770 = vld [vmem:[%s331 + $0xdb0] sm:$0xff]
        %v771 = vld [vmem:[%s331 + $0xdb8] sm:$0xff]
        %v772 = vld [vmem:[%s331 + $0xdc0] sm:$0xff]
        %v773 = vld [vmem:[%s331 + $0xdc8] sm:$0xff]
        %v774 = vld [vmem:[%s331 + $0xdd0] sm:$0xff]
        %v775 = vld [vmem:[%s331 + $0xdd8] sm:$0xff]
        %v776 = vld [vmem:[%s331 + $0xde0] sm:$0xff]
        %v777 = vld [vmem:[%s331 + $0xde8] sm:$0xff]
        %v778 = vld [vmem:[%s331 + $0xdf0] sm:$0xff]
        %v779 = vld [vmem:[%s331 + $0xdf8] sm:$0xff]
        %v780 = vld [vmem:[%s331 + $0xe00] sm:$0xff]
        %v781 = vld [vmem:[%s331 + $0xe08] sm:$0xff]
        %v782 = vld [vmem:[%s331 + $0xe10] sm:$0xff]
        %v783 = vld [vmem:[%s331 + $0xe18] sm:$0xff]
        %v784 = vld [vmem:[%s331 + $0xe20] sm:$0xff]
        %v785 = vld [vmem:[%s331 + $0xe28] sm:$0xff]
        %v786 = vld [vmem:[%s331 + $0xe30] sm:$0xff]
        %v787 = vld [vmem:[%s331 + $0xe38] sm:$0xff]
        %v788 = vld [vmem:[%s331 + $0xe40] sm:$0xff]
        %v789 = vld [vmem:[%s331 + $0xe48] sm:$0xff]
        %v790 = vld [vmem:[%s331 + $0xe50] sm:$0xff]
        %v791 = vld [vmem:[%s331 + $0xe58] sm:$0xff]
        %v792 = vld [vmem:[%s331 + $0xe60] sm:$0xff]
        %v793 = vld [vmem:[%s331 + $0xe68] sm:$0xff]
        %v794 = vld [vmem:[%s331 + $0xe70] sm:$0xff]
        %v795 = vld [vmem:[%s331 + $0xe78] sm:$0xff]
        %v796 = vld [vmem:[%s331 + $0xe80] sm:$0xff]
        %v797 = vld [vmem:[%s331 + $0xe88] sm:$0xff]
        %v798 = vld [vmem:[%s331 + $0xe90] sm:$0xff]
        %v799 = vld [vmem:[%s331 + $0xe98] sm:$0xff]
        %v800 = vld [vmem:[%s331 + $0xea0] sm:$0xff]
        %v801 = vld [vmem:[%s331 + $0xea8] sm:$0xff]
        %v802 = vld [vmem:[%s331 + $0xeb0] sm:$0xff]
        %v803 = vld [vmem:[%s331 + $0xeb8] sm:$0xff]
        %v804 = vld [vmem:[%s331 + $0xec0] sm:$0xff]
        %v805 = vld [vmem:[%s331 + $0xec8] sm:$0xff]
        %v806 = vld [vmem:[%s331 + $0xed0] sm:$0xff]
        %v807 = vld [vmem:[%s331 + $0xed8] sm:$0xff]
        %v808 = vld [vmem:[%s331 + $0xee0] sm:$0xff]
        %v809 = vld [vmem:[%s331 + $0xee8] sm:$0xff]
        %v810 = vld [vmem:[%s331 + $0xef0] sm:$0xff]
        %v811 = vld [vmem:[%s331 + $0xef8] sm:$0xff]
        %v812 = vld [vmem:[%s331 + $0xf00] sm:$0xff]
        %v813 = vld [vmem:[%s331 + $0xf08] sm:$0xff]
        %v814 = vld [vmem:[%s331 + $0xf10] sm:$0xff]
        %v815 = vld [vmem:[%s331 + $0xf18] sm:$0xff]
        %v816 = vld [vmem:[%s331 + $0xf20] sm:$0xff]
        %v817 = vld [vmem:[%s331 + $0xf28] sm:$0xff]
        %v818 = vld [vmem:[%s331 + $0xf30] sm:$0xff]
        %v819 = vld [vmem:[%s331 + $0xf38] sm:$0xff]
        %v820 = vld [vmem:[%s331 + $0xf40] sm:$0xff]
        %v821 = vld [vmem:[%s331 + $0xf48] sm:$0xff]
        %v822 = vld [vmem:[%s331 + $0xf50] sm:$0xff]
        %v823 = vld [vmem:[%s331 + $0xf58] sm:$0xff]
        %v824 = vld [vmem:[%s331 + $0xf60] sm:$0xff]
        %v825 = vld [vmem:[%s331 + $0xf68] sm:$0xff]
        %v826 = vld [vmem:[%s331 + $0xf70] sm:$0xff]
        %v827 = vld [vmem:[%s331 + $0xf78] sm:$0xff]
        %v828 = vld [vmem:[%s331 + $0xf80] sm:$0xff]
        %v829 = vld [vmem:[%s331 + $0xf88] sm:$0xff]
        %v830 = vld [vmem:[%s331 + $0xf90] sm:$0xff]
        %v831 = vld [vmem:[%s331 + $0xf98] sm:$0xff]
        %v832 = vld [vmem:[%s331 + $0xfa0] sm:$0xff]
        %v833 = vld [vmem:[%s331 + $0xfa8] sm:$0xff]
        %v834 = vld [vmem:[%s331 + $0xfb0] sm:$0xff]
        %v835 = vld [vmem:[%s331 + $0xfb8] sm:$0xff]
        %v836 = vld [vmem:[%s331 + $0xfc0] sm:$0xff]
        %v837 = vld [vmem:[%s331 + $0xfc8] sm:$0xff]
        %v838 = vld [vmem:[%s331 + $0xfd0] sm:$0xff]
        %v839 = vld [vmem:[%s331 + $0xfd8] sm:$0xff]
        %v840 = vld [vmem:[%s331 + $0xfe0] sm:$0xff]
        %v841 = vld [vmem:[%s331 + $0xfe8] sm:$0xff]
        %v842 = vld [vmem:[%s331 + $0xff0] sm:$0xff]
        %v843 = vld [vmem:[%s331 + $0xff8] sm:$0xff]
        %v844 = vld [vmem:[%s1] sm:$0xff]
        %v845 = vld [vmem:[%s1 + $0x8] sm:$0xff]
        %v846 = vld [vmem:[%s1 + $0x10] sm:$0xff]
        %v847 = vld [vmem:[%s1 + $0x18] sm:$0xff]
        %v848 = vld [vmem:[%s1 + $0x20] sm:$0xff]
        %v849 = vld [vmem:[%s1 + $0x28] sm:$0xff]
        %v850 = vld [vmem:[%s1 + $0x30] sm:$0xff]
        %v851 = vld [vmem:[%s1 + $0x38] sm:$0xff]
        %v852 = vld [vmem:[%s1 + $0x40] sm:$0xff]
        %v853 = vld [vmem:[%s1 + $0x48] sm:$0xff]
        %v854 = vld [vmem:[%s1 + $0x50] sm:$0xff]
        %v855 = vld [vmem:[%s1 + $0x58] sm:$0xff]
        %v856 = vld [vmem:[%s1 + $0x60] sm:$0xff]
        %v857 = vld [vmem:[%s1 + $0x68] sm:$0xff]
        %v858 = vld [vmem:[%s1 + $0x70] sm:$0xff]
        %v859 = vld [vmem:[%s1 + $0x78] sm:$0xff]
        %v860 = vld [vmem:[%s1 + $0x80] sm:$0xff]
        %v861 = vld [vmem:[%s1 + $0x88] sm:$0xff]
        %v862 = vld [vmem:[%s1 + $0x90] sm:$0xff]
        %v863 = vld [vmem:[%s1 + $0x98] sm:$0xff]
        %v864 = vld [vmem:[%s1 + $0xa0] sm:$0xff]
        %v865 = vld [vmem:[%s1 + $0xa8] sm:$0xff]
        %v866 = vld [vmem:[%s1 + $0xb0] sm:$0xff]
        %v867 = vld [vmem:[%s1 + $0xb8] sm:$0xff]
        %v868 = vld [vmem:[%s1 + $0xc0] sm:$0xff]
        %v869 = vld [vmem:[%s1 + $0xc8] sm:$0xff]
        %v870 = vld [vmem:[%s1 + $0xd0] sm:$0xff]
        %v871 = vld [vmem:[%s1 + $0xd8] sm:$0xff]
        %v872 = vld [vmem:[%s1 + $0xe0] sm:$0xff]
        %v873 = vld [vmem:[%s1 + $0xe8] sm:$0xff]
        %v874 = vld [vmem:[%s1 + $0xf0] sm:$0xff]
        %v875 = vld [vmem:[%s1 + $0xf8] sm:$0xff]
        %v876 = vld [vmem:[%s1 + $0x100] sm:$0xff]
        %v877 = vld [vmem:[%s1 + $0x108] sm:$0xff]
        %v878 = vld [vmem:[%s1 + $0x110] sm:$0xff]
        %v879 = vld [vmem:[%s1 + $0x118] sm:$0xff]
        %v880 = vld [vmem:[%s1 + $0x120] sm:$0xff]
        %v881 = vld [vmem:[%s1 + $0x128] sm:$0xff]
        %v882 = vld [vmem:[%s1 + $0x130] sm:$0xff]
        %v883 = vld [vmem:[%s1 + $0x138] sm:$0xff]
        %v884 = vld [vmem:[%s1 + $0x140] sm:$0xff]
        %v885 = vld [vmem:[%s1 + $0x148] sm:$0xff]
        %v886 = vld [vmem:[%s1 + $0x150] sm:$0xff]
        %v887 = vld [vmem:[%s1 + $0x158] sm:$0xff]
        %v888 = vld [vmem:[%s1 + $0x160] sm:$0xff]
        %v889 = vld [vmem:[%s1 + $0x168] sm:$0xff]
        %v890 = vld [vmem:[%s1 + $0x170] sm:$0xff]
        %v891 = vld [vmem:[%s1 + $0x178] sm:$0xff]
        %v892 = vld [vmem:[%s1 + $0x180] sm:$0xff]
        %v893 = vld [vmem:[%s1 + $0x188] sm:$0xff]
        %v894 = vld [vmem:[%s1 + $0x190] sm:$0xff]
        %v895 = vld [vmem:[%s1 + $0x198] sm:$0xff]
        %v896 = vld [vmem:[%s1 + $0x1a0] sm:$0xff]
        %v897 = vld [vmem:[%s1 + $0x1a8] sm:$0xff]
        %v898 = vld [vmem:[%s1 + $0x1b0] sm:$0xff]
        %v899 = vld [vmem:[%s1 + $0x1b8] sm:$0xff]
        %v900 = vld [vmem:[%s1 + $0x1c0] sm:$0xff]
        %v901 = vld [vmem:[%s1 + $0x1c8] sm:$0xff]
        %v902 = vld [vmem:[%s1 + $0x1d0] sm:$0xff]
        %v903 = vld [vmem:[%s1 + $0x1d8] sm:$0xff]
        %v904 = vld [vmem:[%s1 + $0x1e0] sm:$0xff]
        %v905 = vld [vmem:[%s1 + $0x1e8] sm:$0xff]
        %v906 = vld [vmem:[%s1 + $0x1f0] sm:$0xff]
        %v907 = vld [vmem:[%s1 + $0x1f8] sm:$0xff]
        %s908 = scalar_lea.vmem %s1, 512
        %v909 = vld [vmem:[%s908] sm:$0xff]
        %v910 = vld [vmem:[%s908 + $0x8] sm:$0xff]
        %v911 = vld [vmem:[%s908 + $0x10] sm:$0xff]
        %v912 = vld [vmem:[%s908 + $0x18] sm:$0xff]
        %v913 = vld [vmem:[%s908 + $0x20] sm:$0xff]
        %v914 = vld [vmem:[%s908 + $0x28] sm:$0xff]
        %v915 = vld [vmem:[%s908 + $0x30] sm:$0xff]
        %v916 = vld [vmem:[%s908 + $0x38] sm:$0xff]
        %v917 = vld [vmem:[%s908 + $0x40] sm:$0xff]
        %v918 = vld [vmem:[%s908 + $0x48] sm:$0xff]
        %v919 = vld [vmem:[%s908 + $0x50] sm:$0xff]
        %v920 = vld [vmem:[%s908 + $0x58] sm:$0xff]
        %v921 = vld [vmem:[%s908 + $0x60] sm:$0xff]
        %v922 = vld [vmem:[%s908 + $0x68] sm:$0xff]
        %v923 = vld [vmem:[%s908 + $0x70] sm:$0xff]
        %v924 = vld [vmem:[%s908 + $0x78] sm:$0xff]
        %v925 = vld [vmem:[%s908 + $0x80] sm:$0xff]
        %v926 = vld [vmem:[%s908 + $0x88] sm:$0xff]
        %v927 = vld [vmem:[%s908 + $0x90] sm:$0xff]
        %v928 = vld [vmem:[%s908 + $0x98] sm:$0xff]
        %v929 = vld [vmem:[%s908 + $0xa0] sm:$0xff]
        %v930 = vld [vmem:[%s908 + $0xa8] sm:$0xff]
        %v931 = vld [vmem:[%s908 + $0xb0] sm:$0xff]
        %v932 = vld [vmem:[%s908 + $0xb8] sm:$0xff]
        %v933 = vld [vmem:[%s908 + $0xc0] sm:$0xff]
        %v934 = vld [vmem:[%s908 + $0xc8] sm:$0xff]
        %v935 = vld [vmem:[%s908 + $0xd0] sm:$0xff]
        %v936 = vld [vmem:[%s908 + $0xd8] sm:$0xff]
        %v937 = vld [vmem:[%s908 + $0xe0] sm:$0xff]
        %v938 = vld [vmem:[%s908 + $0xe8] sm:$0xff]
        %v939 = vld [vmem:[%s908 + $0xf0] sm:$0xff]
        %v940 = vld [vmem:[%s908 + $0xf8] sm:$0xff]
        %v941 = vld [vmem:[%s908 + $0x100] sm:$0xff]
        %v942 = vld [vmem:[%s908 + $0x108] sm:$0xff]
        %v943 = vld [vmem:[%s908 + $0x110] sm:$0xff]
        %v944 = vld [vmem:[%s908 + $0x118] sm:$0xff]
        %v945 = vld [vmem:[%s908 + $0x120] sm:$0xff]
        %v946 = vld [vmem:[%s908 + $0x128] sm:$0xff]
        %v947 = vld [vmem:[%s908 + $0x130] sm:$0xff]
        %v948 = vld [vmem:[%s908 + $0x138] sm:$0xff]
        %v949 = vld [vmem:[%s908 + $0x140] sm:$0xff]
        %v950 = vld [vmem:[%s908 + $0x148] sm:$0xff]
        %v951 = vld [vmem:[%s908 + $0x150] sm:$0xff]
        %v952 = vld [vmem:[%s908 + $0x158] sm:$0xff]
        %v953 = vld [vmem:[%s908 + $0x160] sm:$0xff]
        %v954 = vld [vmem:[%s908 + $0x168] sm:$0xff]
        %v955 = vld [vmem:[%s908 + $0x170] sm:$0xff]
        %v956 = vld [vmem:[%s908 + $0x178] sm:$0xff]
        %v957 = vld [vmem:[%s908 + $0x180] sm:$0xff]
        %v958 = vld [vmem:[%s908 + $0x188] sm:$0xff]
        %v959 = vld [vmem:[%s908 + $0x190] sm:$0xff]
        %v960 = vld [vmem:[%s908 + $0x198] sm:$0xff]
        %v961 = vld [vmem:[%s908 + $0x1a0] sm:$0xff]
        %v962 = vld [vmem:[%s908 + $0x1a8] sm:$0xff]
        %v963 = vld [vmem:[%s908 + $0x1b0] sm:$0xff]
        %v964 = vld [vmem:[%s908 + $0x1b8] sm:$0xff]
        %v965 = vld [vmem:[%s908 + $0x1c0] sm:$0xff]
        %v966 = vld [vmem:[%s908 + $0x1c8] sm:$0xff]
        %v967 = vld [vmem:[%s908 + $0x1d0] sm:$0xff]
        %v968 = vld [vmem:[%s908 + $0x1d8] sm:$0xff]
        %v969 = vld [vmem:[%s908 + $0x1e0] sm:$0xff]
        %v970 = vld [vmem:[%s908 + $0x1e8] sm:$0xff]
        %v971 = vld [vmem:[%s908 + $0x1f0] sm:$0xff]
        %v972 = vld [vmem:[%s908 + $0x1f8] sm:$0xff]
        %973 = vmatpush.msra.mxu0 %v924
        %974 = vmatpush.msra.mxu0 %v923
        %975 = vmatpush.msra.mxu0 %v922
        %976 = vmatpush.msra.mxu0 %v921
        %977 = vmatpush.msra.mxu0 %v920
        %978 = vmatpush.msra.mxu0 %v919
        %979 = vmatpush.msra.mxu0 %v918
        %980 = vmatpush.msra.mxu0 %v917
        %981 = vmatpush.msra.mxu0 %v916
        %982 = vmatpush.msra.mxu0 %v915
        %983 = vmatpush.msra.mxu0 %v914
        %984 = vmatpush.msra.mxu0 %v913
        %985 = vmatpush.msra.mxu0 %v912
        %986 = vmatpush.msra.mxu0 %v911
        %987 = vmatpush.msra.mxu0 %v910
        %988 = vmatpush.msra.mxu0 %v909
        %989 = vmatmul.f32.gmra.mxu0 %v396
        %v990 = vpop.f32.mrf.mxu0
        %v991 = vadd.f32 0.0, %v990
        %992 = vmatmul.f32.gmra.mxu0 %v400
        %v993 = vpop.f32.mrf.mxu0
        %v994 = vadd.f32 0.0, %v993
        %995 = vmatmul.f32.gmra.mxu0 %v404
        %v996 = vpop.f32.mrf.mxu0
        %v997 = vadd.f32 0.0, %v996
        %998 = vmatmul.f32.gmra.mxu0 %v408
        %v999 = vpop.f32.mrf.mxu0
        %v1000 = vadd.f32 0.0, %v999
        %1001 = vmatmul.f32.gmra.mxu0 %v412
        %v1002 = vpop.f32.mrf.mxu0
        %v1003 = vadd.f32 0.0, %v1002
        %1004 = vmatmul.f32.gmra.mxu0 %v416
        %v1005 = vpop.f32.mrf.mxu0
        %v1006 = vadd.f32 0.0, %v1005
        %1007 = vmatmul.f32.gmra.mxu0 %v420
        %v1008 = vpop.f32.mrf.mxu0
        %v1009 = vadd.f32 0.0, %v1008
        %1010 = vmatmul.f32.gmra.mxu0 %v424
        %v1011 = vpop.f32.mrf.mxu0
        %v1012 = vadd.f32 0.0, %v1011
        %1013 = vmatmul.f32.gmra.mxu0 %v428
        %v1014 = vpop.f32.mrf.mxu0
        %v1015 = vadd.f32 0.0, %v1014
        %1016 = vmatmul.f32.gmra.mxu0 %v432
        %v1017 = vpop.f32.mrf.mxu0
        %v1018 = vadd.f32 0.0, %v1017
        %1019 = vmatmul.f32.gmra.mxu0 %v436
        %v1020 = vpop.f32.mrf.mxu0
        %v1021 = vadd.f32 0.0, %v1020
        %1022 = vmatmul.f32.gmra.mxu0 %v440
        %v1023 = vpop.f32.mrf.mxu0
        %v1024 = vadd.f32 0.0, %v1023
        %1025 = vmatmul.f32.gmra.mxu0 %v444
        %v1026 = vpop.f32.mrf.mxu0
        %v1027 = vadd.f32 0.0, %v1026
        %1028 = vmatmul.f32.gmra.mxu0 %v448
        %v1029 = vpop.f32.mrf.mxu0
        %v1030 = vadd.f32 0.0, %v1029
        %1031 = vmatmul.f32.gmra.mxu0 %v452
        %v1032 = vpop.f32.mrf.mxu0
        %v1033 = vadd.f32 0.0, %v1032
        %1034 = vmatmul.f32.gmra.mxu0 %v456
        %v1035 = vpop.f32.mrf.mxu0
        %v1036 = vadd.f32 0.0, %v1035
        %1037 = vmatmul.f32.gmra.mxu0 %v460
        %v1038 = vpop.f32.mrf.mxu0
        %v1039 = vadd.f32 0.0, %v1038
        %1040 = vmatmul.f32.gmra.mxu0 %v464
        %v1041 = vpop.f32.mrf.mxu0
        %v1042 = vadd.f32 0.0, %v1041
        %1043 = vmatmul.f32.gmra.mxu0 %v468
        %v1044 = vpop.f32.mrf.mxu0
        %v1045 = vadd.f32 0.0, %v1044
        %1046 = vmatmul.f32.gmra.mxu0 %v472
        %v1047 = vpop.f32.mrf.mxu0
        %v1048 = vadd.f32 0.0, %v1047
        %1049 = vmatmul.f32.gmra.mxu0 %v476
        %v1050 = vpop.f32.mrf.mxu0
        %v1051 = vadd.f32 0.0, %v1050
        %1052 = vmatmul.f32.gmra.mxu0 %v480
        %v1053 = vpop.f32.mrf.mxu0
        %v1054 = vadd.f32 0.0, %v1053
        %1055 = vmatmul.f32.gmra.mxu0 %v484
        %v1056 = vpop.f32.mrf.mxu0
        %v1057 = vadd.f32 0.0, %v1056
        %1058 = vmatmul.f32.gmra.mxu0 %v488
        %v1059 = vpop.f32.mrf.mxu0
        %v1060 = vadd.f32 0.0, %v1059
        %1061 = vmatmul.f32.gmra.mxu0 %v492
        %v1062 = vpop.f32.mrf.mxu0
        %v1063 = vadd.f32 0.0, %v1062
        %1064 = vmatmul.f32.gmra.mxu0 %v496
        %v1065 = vpop.f32.mrf.mxu0
        %v1066 = vadd.f32 0.0, %v1065
        %1067 = vmatmul.f32.gmra.mxu0 %v500
        %v1068 = vpop.f32.mrf.mxu0
        %v1069 = vadd.f32 0.0, %v1068
        %1070 = vmatmul.f32.gmra.mxu0 %v504
        %v1071 = vpop.f32.mrf.mxu0
        %v1072 = vadd.f32 0.0, %v1071
        %1073 = vmatmul.f32.gmra.mxu0 %v508
        %v1074 = vpop.f32.mrf.mxu0
        %v1075 = vadd.f32 0.0, %v1074
        %1076 = vmatmul.f32.gmra.mxu0 %v512
        %v1077 = vpop.f32.mrf.mxu0
        %v1078 = vadd.f32 0.0, %v1077
        %1079 = vmatmul.f32.gmra.mxu0 %v516
        %v1080 = vpop.f32.mrf.mxu0
        %v1081 = vadd.f32 0.0, %v1080
        %1082 = vmatmul.f32.gmra.mxu0 %v520
        %v1083 = vpop.f32.mrf.mxu0
        %v1084 = vadd.f32 0.0, %v1083
        %1085 = vmatmul.f32.gmra.mxu0 %v524
        %v1086 = vpop.f32.mrf.mxu0
        %v1087 = vadd.f32 0.0, %v1086
        %1088 = vmatmul.f32.gmra.mxu0 %v528
        %v1089 = vpop.f32.mrf.mxu0
        %v1090 = vadd.f32 0.0, %v1089
        %1091 = vmatmul.f32.gmra.mxu0 %v532
        %v1092 = vpop.f32.mrf.mxu0
        %v1093 = vadd.f32 0.0, %v1092
        %1094 = vmatmul.f32.gmra.mxu0 %v536
        %v1095 = vpop.f32.mrf.mxu0
        %v1096 = vadd.f32 0.0, %v1095
        %1097 = vmatmul.f32.gmra.mxu0 %v540
        %v1098 = vpop.f32.mrf.mxu0
        %v1099 = vadd.f32 0.0, %v1098
        %1100 = vmatmul.f32.gmra.mxu0 %v544
        %v1101 = vpop.f32.mrf.mxu0
        %v1102 = vadd.f32 0.0, %v1101
        %1103 = vmatmul.f32.gmra.mxu0 %v548
        %v1104 = vpop.f32.mrf.mxu0
        %v1105 = vadd.f32 0.0, %v1104
        %1106 = vmatmul.f32.gmra.mxu0 %v552
        %v1107 = vpop.f32.mrf.mxu0
        %v1108 = vadd.f32 0.0, %v1107
        %1109 = vmatmul.f32.gmra.mxu0 %v556
        %v1110 = vpop.f32.mrf.mxu0
        %v1111 = vadd.f32 0.0, %v1110
        %1112 = vmatmul.f32.gmra.mxu0 %v560
        %v1113 = vpop.f32.mrf.mxu0
        %v1114 = vadd.f32 0.0, %v1113
        %1115 = vmatmul.f32.gmra.mxu0 %v564
        %v1116 = vpop.f32.mrf.mxu0
        %v1117 = vadd.f32 0.0, %v1116
        %1118 = vmatmul.f32.gmra.mxu0 %v568
        %v1119 = vpop.f32.mrf.mxu0
        %v1120 = vadd.f32 0.0, %v1119
        %1121 = vmatmul.f32.gmra.mxu0 %v572
        %v1122 = vpop.f32.mrf.mxu0
        %v1123 = vadd.f32 0.0, %v1122
        %1124 = vmatmul.f32.gmra.mxu0 %v576
        %v1125 = vpop.f32.mrf.mxu0
        %v1126 = vadd.f32 0.0, %v1125
        %1127 = vmatmul.f32.gmra.mxu0 %v580
        %v1128 = vpop.f32.mrf.mxu0
        %v1129 = vadd.f32 0.0, %v1128
        %1130 = vmatmul.f32.gmra.mxu0 %v584
        %v1131 = vpop.f32.mrf.mxu0
        %v1132 = vadd.f32 0.0, %v1131
        %1133 = vmatmul.f32.gmra.mxu0 %v588
        %v1134 = vpop.f32.mrf.mxu0
        %v1135 = vadd.f32 0.0, %v1134
        %1136 = vmatmul.f32.gmra.mxu0 %v592
        %v1137 = vpop.f32.mrf.mxu0
        %v1138 = vadd.f32 0.0, %v1137
        %1139 = vmatmul.f32.gmra.mxu0 %v596
        %v1140 = vpop.f32.mrf.mxu0
        %v1141 = vadd.f32 0.0, %v1140
        %1142 = vmatmul.f32.gmra.mxu0 %v600
        %v1143 = vpop.f32.mrf.mxu0
        %v1144 = vadd.f32 0.0, %v1143
        %1145 = vmatmul.f32.gmra.mxu0 %v604
        %v1146 = vpop.f32.mrf.mxu0
        %v1147 = vadd.f32 0.0, %v1146
        %1148 = vmatmul.f32.gmra.mxu0 %v608
        %v1149 = vpop.f32.mrf.mxu0
        %v1150 = vadd.f32 0.0, %v1149
        %1151 = vmatmul.f32.gmra.mxu0 %v612
        %v1152 = vpop.f32.mrf.mxu0
        %v1153 = vadd.f32 0.0, %v1152
        %1154 = vmatmul.f32.gmra.mxu0 %v616
        %v1155 = vpop.f32.mrf.mxu0
        %v1156 = vadd.f32 0.0, %v1155
        %1157 = vmatmul.f32.gmra.mxu0 %v620
        %v1158 = vpop.f32.mrf.mxu0
        %v1159 = vadd.f32 0.0, %v1158
        %1160 = vmatmul.f32.gmra.mxu0 %v624
        %v1161 = vpop.f32.mrf.mxu0
        %v1162 = vadd.f32 0.0, %v1161
        %1163 = vmatmul.f32.gmra.mxu0 %v628
        %v1164 = vpop.f32.mrf.mxu0
        %v1165 = vadd.f32 0.0, %v1164
        %1166 = vmatmul.f32.gmra.mxu0 %v632
        %v1167 = vpop.f32.mrf.mxu0
        %v1168 = vadd.f32 0.0, %v1167
        %1169 = vmatmul.f32.gmra.mxu0 %v636
        %v1170 = vpop.f32.mrf.mxu0
        %v1171 = vadd.f32 0.0, %v1170
        %1172 = vmatmul.f32.gmra.mxu0 %v640
        %v1173 = vpop.f32.mrf.mxu0
        %v1174 = vadd.f32 0.0, %v1173
        %1175 = vmatmul.f32.gmra.mxu0 %v644
        %v1176 = vpop.f32.mrf.mxu0
        %v1177 = vadd.f32 0.0, %v1176
        %1178 = vmatmul.f32.gmra.mxu0 %v648
        %v1179 = vpop.f32.mrf.mxu0
        %v1180 = vadd.f32 0.0, %v1179
        %1181 = vmatmul.f32.gmra.mxu0 %v652
        %v1182 = vpop.f32.mrf.mxu0
        %v1183 = vadd.f32 0.0, %v1182
        %1184 = vmatmul.f32.gmra.mxu0 %v656
        %v1185 = vpop.f32.mrf.mxu0
        %v1186 = vadd.f32 0.0, %v1185
        %1187 = vmatmul.f32.gmra.mxu0 %v660
        %v1188 = vpop.f32.mrf.mxu0
        %v1189 = vadd.f32 0.0, %v1188
        %1190 = vmatmul.f32.gmra.mxu0 %v664
        %v1191 = vpop.f32.mrf.mxu0
        %v1192 = vadd.f32 0.0, %v1191
        %1193 = vmatmul.f32.gmra.mxu0 %v668
        %v1194 = vpop.f32.mrf.mxu0
        %v1195 = vadd.f32 0.0, %v1194
        %1196 = vmatmul.f32.gmra.mxu0 %v672
        %v1197 = vpop.f32.mrf.mxu0
        %v1198 = vadd.f32 0.0, %v1197
        %1199 = vmatmul.f32.gmra.mxu0 %v676
        %v1200 = vpop.f32.mrf.mxu0
        %v1201 = vadd.f32 0.0, %v1200
        %1202 = vmatmul.f32.gmra.mxu0 %v680
        %v1203 = vpop.f32.mrf.mxu0
        %v1204 = vadd.f32 0.0, %v1203
        %1205 = vmatmul.f32.gmra.mxu0 %v684
        %v1206 = vpop.f32.mrf.mxu0
        %v1207 = vadd.f32 0.0, %v1206
        %1208 = vmatmul.f32.gmra.mxu0 %v688
        %v1209 = vpop.f32.mrf.mxu0
        %v1210 = vadd.f32 0.0, %v1209
        %1211 = vmatmul.f32.gmra.mxu0 %v692
        %v1212 = vpop.f32.mrf.mxu0
        %v1213 = vadd.f32 0.0, %v1212
        %1214 = vmatmul.f32.gmra.mxu0 %v696
        %v1215 = vpop.f32.mrf.mxu0
        %v1216 = vadd.f32 0.0, %v1215
        %1217 = vmatmul.f32.gmra.mxu0 %v700
        %v1218 = vpop.f32.mrf.mxu0
        %v1219 = vadd.f32 0.0, %v1218
        %1220 = vmatmul.f32.gmra.mxu0 %v704
        %v1221 = vpop.f32.mrf.mxu0
        %v1222 = vadd.f32 0.0, %v1221
        %1223 = vmatmul.f32.gmra.mxu0 %v708
        %v1224 = vpop.f32.mrf.mxu0
        %v1225 = vadd.f32 0.0, %v1224
        %1226 = vmatmul.f32.gmra.mxu0 %v712
        %v1227 = vpop.f32.mrf.mxu0
        %v1228 = vadd.f32 0.0, %v1227
        %1229 = vmatmul.f32.gmra.mxu0 %v716
        %v1230 = vpop.f32.mrf.mxu0
        %v1231 = vadd.f32 0.0, %v1230
        %1232 = vmatmul.f32.gmra.mxu0 %v720
        %v1233 = vpop.f32.mrf.mxu0
        %v1234 = vadd.f32 0.0, %v1233
        %1235 = vmatmul.f32.gmra.mxu0 %v724
        %v1236 = vpop.f32.mrf.mxu0
        %v1237 = vadd.f32 0.0, %v1236
        %1238 = vmatmul.f32.gmra.mxu0 %v728
        %v1239 = vpop.f32.mrf.mxu0
        %v1240 = vadd.f32 0.0, %v1239
        %1241 = vmatmul.f32.gmra.mxu0 %v732
        %v1242 = vpop.f32.mrf.mxu0
        %v1243 = vadd.f32 0.0, %v1242
        %1244 = vmatmul.f32.gmra.mxu0 %v736
        %v1245 = vpop.f32.mrf.mxu0
        %v1246 = vadd.f32 0.0, %v1245
        %1247 = vmatmul.f32.gmra.mxu0 %v740
        %v1248 = vpop.f32.mrf.mxu0
        %v1249 = vadd.f32 0.0, %v1248
        %1250 = vmatmul.f32.gmra.mxu0 %v744
        %v1251 = vpop.f32.mrf.mxu0
        %v1252 = vadd.f32 0.0, %v1251
        %1253 = vmatmul.f32.gmra.mxu0 %v748
        %v1254 = vpop.f32.mrf.mxu0
        %v1255 = vadd.f32 0.0, %v1254
        %1256 = vmatmul.f32.gmra.mxu0 %v752
        %v1257 = vpop.f32.mrf.mxu0
        %v1258 = vadd.f32 0.0, %v1257
        %1259 = vmatmul.f32.gmra.mxu0 %v756
        %v1260 = vpop.f32.mrf.mxu0
        %v1261 = vadd.f32 0.0, %v1260
        %1262 = vmatmul.f32.gmra.mxu0 %v760
        %v1263 = vpop.f32.mrf.mxu0
        %v1264 = vadd.f32 0.0, %v1263
        %1265 = vmatmul.f32.gmra.mxu0 %v764
        %v1266 = vpop.f32.mrf.mxu0
        %v1267 = vadd.f32 0.0, %v1266
        %1268 = vmatmul.f32.gmra.mxu0 %v768
        %v1269 = vpop.f32.mrf.mxu0
        %v1270 = vadd.f32 0.0, %v1269
        %1271 = vmatmul.f32.gmra.mxu0 %v772
        %v1272 = vpop.f32.mrf.mxu0
        %v1273 = vadd.f32 0.0, %v1272
        %1274 = vmatmul.f32.gmra.mxu0 %v776
        %v1275 = vpop.f32.mrf.mxu0
        %v1276 = vadd.f32 0.0, %v1275
        %1277 = vmatmul.f32.gmra.mxu0 %v780
        %v1278 = vpop.f32.mrf.mxu0
        %1279 = vmatmul.f32.gmra.mxu0 %v784
        %v1280 = vpop.f32.mrf.mxu0
        %1281 = vmatmul.f32.gmra.mxu0 %v788
        %v1282 = vpop.f32.mrf.mxu0
        %1283 = vmatmul.f32.gmra.mxu0 %v792
        %v1284 = vpop.f32.mrf.mxu0
        %1285 = vmatmul.f32.gmra.mxu0 %v796
        %v1286 = vpop.f32.mrf.mxu0
        %1287 = vmatmul.f32.gmra.mxu0 %v800
        %v1288 = vpop.f32.mrf.mxu0
        %1289 = vmatmul.f32.gmra.mxu0 %v804
        %v1290 = vpop.f32.mrf.mxu0
        %1291 = vmatmul.f32.gmra.mxu0 %v808
        %v1292 = vpop.f32.mrf.mxu0
        %1293 = vmatmul.f32.gmra.mxu0 %v812
        %v1294 = vpop.f32.mrf.mxu0
        %1295 = vmatmul.f32.gmra.mxu0 %v816
        %v1296 = vpop.f32.mrf.mxu0
        %1297 = vmatmul.f32.gmra.mxu0 %v820
        %v1298 = vpop.f32.mrf.mxu0
        %1299 = vmatmul.f32.gmra.mxu0 %v824
        %v1300 = vpop.f32.mrf.mxu0
        %1301 = vmatmul.f32.gmra.mxu0 %v828
        %v1302 = vpop.f32.mrf.mxu0
        %1303 = vmatmul.f32.gmra.mxu0 %v832
        %v1304 = vpop.f32.mrf.mxu0
        %1305 = vmatmul.f32.gmra.mxu0 %v836
        %v1306 = vpop.f32.mrf.mxu0
        %1307 = vmatmul.f32.gmra.mxu0 %v840
        %v1308 = vpop.f32.mrf.mxu0
        %1309 = vdwg.mxu0
        %1310 = vmatpush.msra.mxu0 %v940
        %1311 = vmatpush.msra.mxu0 %v939
        %1312 = vmatpush.msra.mxu0 %v938
        %1313 = vmatpush.msra.mxu0 %v937
        %1314 = vmatpush.msra.mxu0 %v936
        %1315 = vmatpush.msra.mxu0 %v935
        %1316 = vmatpush.msra.mxu0 %v934
        %1317 = vmatpush.msra.mxu0 %v933
        %1318 = vmatpush.msra.mxu0 %v932
        %1319 = vmatpush.msra.mxu0 %v931
        %1320 = vmatpush.msra.mxu0 %v930
        %1321 = vmatpush.msra.mxu0 %v929
        %1322 = vmatpush.msra.mxu0 %v928
        %1323 = vmatpush.msra.mxu0 %v927
        %1324 = vmatpush.msra.mxu0 %v926
        %1325 = vmatpush.msra.mxu0 %v925
        %1326 = vmatmul.f32.gmra.mxu0 %v397
        %v1327 = vpop.f32.mrf.mxu0
        %v1328 = vadd.f32 %v991, %v1327
        %1329 = vmatmul.f32.gmra.mxu0 %v401
        %v1330 = vpop.f32.mrf.mxu0
        %v1331 = vadd.f32 %v994, %v1330
        %1332 = vmatmul.f32.gmra.mxu0 %v405
        %v1333 = vpop.f32.mrf.mxu0
        %v1334 = vadd.f32 %v997, %v1333
        %1335 = vmatmul.f32.gmra.mxu0 %v409
        %v1336 = vpop.f32.mrf.mxu0
        %v1337 = vadd.f32 %v1000, %v1336
        %1338 = vmatmul.f32.gmra.mxu0 %v413
        %v1339 = vpop.f32.mrf.mxu0
        %v1340 = vadd.f32 %v1003, %v1339
        %1341 = vmatmul.f32.gmra.mxu0 %v417
        %v1342 = vpop.f32.mrf.mxu0
        %v1343 = vadd.f32 %v1006, %v1342
        %1344 = vmatmul.f32.gmra.mxu0 %v421
        %v1345 = vpop.f32.mrf.mxu0
        %v1346 = vadd.f32 %v1009, %v1345
        %1347 = vmatmul.f32.gmra.mxu0 %v425
        %v1348 = vpop.f32.mrf.mxu0
        %v1349 = vadd.f32 %v1012, %v1348
        %1350 = vmatmul.f32.gmra.mxu0 %v429
        %v1351 = vpop.f32.mrf.mxu0
        %v1352 = vadd.f32 %v1015, %v1351
        %1353 = vmatmul.f32.gmra.mxu0 %v433
        %v1354 = vpop.f32.mrf.mxu0
        %v1355 = vadd.f32 %v1018, %v1354
        %1356 = vmatmul.f32.gmra.mxu0 %v437
        %v1357 = vpop.f32.mrf.mxu0
        %v1358 = vadd.f32 %v1021, %v1357
        %1359 = vmatmul.f32.gmra.mxu0 %v441
        %v1360 = vpop.f32.mrf.mxu0
        %v1361 = vadd.f32 %v1024, %v1360
        %1362 = vmatmul.f32.gmra.mxu0 %v445
        %v1363 = vpop.f32.mrf.mxu0
        %v1364 = vadd.f32 %v1027, %v1363
        %1365 = vmatmul.f32.gmra.mxu0 %v449
        %v1366 = vpop.f32.mrf.mxu0
        %v1367 = vadd.f32 %v1030, %v1366
        %1368 = vmatmul.f32.gmra.mxu0 %v453
        %v1369 = vpop.f32.mrf.mxu0
        %v1370 = vadd.f32 %v1033, %v1369
        %1371 = vmatmul.f32.gmra.mxu0 %v457
        %v1372 = vpop.f32.mrf.mxu0
        %v1373 = vadd.f32 %v1036, %v1372
        %1374 = vmatmul.f32.gmra.mxu0 %v461
        %v1375 = vpop.f32.mrf.mxu0
        %v1376 = vadd.f32 %v1039, %v1375
        %1377 = vmatmul.f32.gmra.mxu0 %v465
        %v1378 = vpop.f32.mrf.mxu0
        %v1379 = vadd.f32 %v1042, %v1378
        %1380 = vmatmul.f32.gmra.mxu0 %v469
        %v1381 = vpop.f32.mrf.mxu0
        %v1382 = vadd.f32 %v1045, %v1381
        %1383 = vmatmul.f32.gmra.mxu0 %v473
        %v1384 = vpop.f32.mrf.mxu0
        %v1385 = vadd.f32 %v1048, %v1384
        %1386 = vmatmul.f32.gmra.mxu0 %v477
        %v1387 = vpop.f32.mrf.mxu0
        %v1388 = vadd.f32 %v1051, %v1387
        %1389 = vmatmul.f32.gmra.mxu0 %v481
        %v1390 = vpop.f32.mrf.mxu0
        %v1391 = vadd.f32 %v1054, %v1390
        %1392 = vmatmul.f32.gmra.mxu0 %v485
        %v1393 = vpop.f32.mrf.mxu0
        %v1394 = vadd.f32 %v1057, %v1393
        %1395 = vmatmul.f32.gmra.mxu0 %v489
        %v1396 = vpop.f32.mrf.mxu0
        %v1397 = vadd.f32 %v1060, %v1396
        %1398 = vmatmul.f32.gmra.mxu0 %v493
        %v1399 = vpop.f32.mrf.mxu0
        %v1400 = vadd.f32 %v1063, %v1399
        %1401 = vmatmul.f32.gmra.mxu0 %v497
        %v1402 = vpop.f32.mrf.mxu0
        %v1403 = vadd.f32 %v1066, %v1402
        %1404 = vmatmul.f32.gmra.mxu0 %v501
        %v1405 = vpop.f32.mrf.mxu0
        %v1406 = vadd.f32 %v1069, %v1405
        %1407 = vmatmul.f32.gmra.mxu0 %v505
        %v1408 = vpop.f32.mrf.mxu0
        %v1409 = vadd.f32 %v1072, %v1408
        %1410 = vmatmul.f32.gmra.mxu0 %v509
        %v1411 = vpop.f32.mrf.mxu0
        %v1412 = vadd.f32 %v1075, %v1411
        %1413 = vmatmul.f32.gmra.mxu0 %v513
        %v1414 = vpop.f32.mrf.mxu0
        %v1415 = vadd.f32 %v1078, %v1414
        %1416 = vmatmul.f32.gmra.mxu0 %v517
        %v1417 = vpop.f32.mrf.mxu0
        %v1418 = vadd.f32 %v1081, %v1417
        %1419 = vmatmul.f32.gmra.mxu0 %v521
        %v1420 = vpop.f32.mrf.mxu0
        %v1421 = vadd.f32 %v1084, %v1420
        %1422 = vmatmul.f32.gmra.mxu0 %v525
        %v1423 = vpop.f32.mrf.mxu0
        %v1424 = vadd.f32 %v1087, %v1423
        %1425 = vmatmul.f32.gmra.mxu0 %v529
        %v1426 = vpop.f32.mrf.mxu0
        %v1427 = vadd.f32 %v1090, %v1426
        %1428 = vmatmul.f32.gmra.mxu0 %v533
        %v1429 = vpop.f32.mrf.mxu0
        %v1430 = vadd.f32 %v1093, %v1429
        %1431 = vmatmul.f32.gmra.mxu0 %v537
        %v1432 = vpop.f32.mrf.mxu0
        %v1433 = vadd.f32 %v1096, %v1432
        %1434 = vmatmul.f32.gmra.mxu0 %v541
        %v1435 = vpop.f32.mrf.mxu0
        %v1436 = vadd.f32 %v1099, %v1435
        %1437 = vmatmul.f32.gmra.mxu0 %v545
        %v1438 = vpop.f32.mrf.mxu0
        %v1439 = vadd.f32 %v1102, %v1438
        %1440 = vmatmul.f32.gmra.mxu0 %v549
        %v1441 = vpop.f32.mrf.mxu0
        %v1442 = vadd.f32 %v1105, %v1441
        %1443 = vmatmul.f32.gmra.mxu0 %v553
        %v1444 = vpop.f32.mrf.mxu0
        %v1445 = vadd.f32 %v1108, %v1444
        %1446 = vmatmul.f32.gmra.mxu0 %v557
        %v1447 = vpop.f32.mrf.mxu0
        %v1448 = vadd.f32 %v1111, %v1447
        %1449 = vmatmul.f32.gmra.mxu0 %v561
        %v1450 = vpop.f32.mrf.mxu0
        %v1451 = vadd.f32 %v1114, %v1450
        %1452 = vmatmul.f32.gmra.mxu0 %v565
        %v1453 = vpop.f32.mrf.mxu0
        %v1454 = vadd.f32 %v1117, %v1453
        %1455 = vmatmul.f32.gmra.mxu0 %v569
        %v1456 = vpop.f32.mrf.mxu0
        %v1457 = vadd.f32 %v1120, %v1456
        %1458 = vmatmul.f32.gmra.mxu0 %v573
        %v1459 = vpop.f32.mrf.mxu0
        %v1460 = vadd.f32 %v1123, %v1459
        %1461 = vmatmul.f32.gmra.mxu0 %v577
        %v1462 = vpop.f32.mrf.mxu0
        %v1463 = vadd.f32 %v1126, %v1462
        %1464 = vmatmul.f32.gmra.mxu0 %v581
        %v1465 = vpop.f32.mrf.mxu0
        %v1466 = vadd.f32 %v1129, %v1465
        %1467 = vmatmul.f32.gmra.mxu0 %v585
        %v1468 = vpop.f32.mrf.mxu0
        %v1469 = vadd.f32 %v1132, %v1468
        %1470 = vmatmul.f32.gmra.mxu0 %v589
        %v1471 = vpop.f32.mrf.mxu0
        %v1472 = vadd.f32 %v1135, %v1471
        %1473 = vmatmul.f32.gmra.mxu0 %v593
        %v1474 = vpop.f32.mrf.mxu0
        %v1475 = vadd.f32 %v1138, %v1474
        %1476 = vmatmul.f32.gmra.mxu0 %v597
        %v1477 = vpop.f32.mrf.mxu0
        %v1478 = vadd.f32 %v1141, %v1477
        %1479 = vmatmul.f32.gmra.mxu0 %v601
        %v1480 = vpop.f32.mrf.mxu0
        %v1481 = vadd.f32 %v1144, %v1480
        %1482 = vmatmul.f32.gmra.mxu0 %v605
        %v1483 = vpop.f32.mrf.mxu0
        %v1484 = vadd.f32 %v1147, %v1483
        %1485 = vmatmul.f32.gmra.mxu0 %v609
        %v1486 = vpop.f32.mrf.mxu0
        %v1487 = vadd.f32 %v1150, %v1486
        %1488 = vmatmul.f32.gmra.mxu0 %v613
        %v1489 = vpop.f32.mrf.mxu0
        %v1490 = vadd.f32 %v1153, %v1489
        %1491 = vmatmul.f32.gmra.mxu0 %v617
        %v1492 = vpop.f32.mrf.mxu0
        %v1493 = vadd.f32 %v1156, %v1492
        %1494 = vmatmul.f32.gmra.mxu0 %v621
        %v1495 = vpop.f32.mrf.mxu0
        %v1496 = vadd.f32 %v1159, %v1495
        %1497 = vmatmul.f32.gmra.mxu0 %v625
        %v1498 = vpop.f32.mrf.mxu0
        %v1499 = vadd.f32 %v1162, %v1498
        %1500 = vmatmul.f32.gmra.mxu0 %v629
        %v1501 = vpop.f32.mrf.mxu0
        %v1502 = vadd.f32 %v1165, %v1501
        %1503 = vmatmul.f32.gmra.mxu0 %v633
        %v1504 = vpop.f32.mrf.mxu0
        %v1505 = vadd.f32 %v1168, %v1504
        %1506 = vmatmul.f32.gmra.mxu0 %v637
        %v1507 = vpop.f32.mrf.mxu0
        %v1508 = vadd.f32 %v1171, %v1507
        %1509 = vmatmul.f32.gmra.mxu0 %v641
        %v1510 = vpop.f32.mrf.mxu0
        %v1511 = vadd.f32 %v1174, %v1510
        %1512 = vmatmul.f32.gmra.mxu0 %v645
        %v1513 = vpop.f32.mrf.mxu0
        %v1514 = vadd.f32 %v1177, %v1513
        %1515 = vmatmul.f32.gmra.mxu0 %v649
        %v1516 = vpop.f32.mrf.mxu0
        %v1517 = vadd.f32 %v1180, %v1516
        %1518 = vmatmul.f32.gmra.mxu0 %v653
        %v1519 = vpop.f32.mrf.mxu0
        %v1520 = vadd.f32 %v1183, %v1519
        %1521 = vmatmul.f32.gmra.mxu0 %v657
        %v1522 = vpop.f32.mrf.mxu0
        %v1523 = vadd.f32 %v1186, %v1522
        %1524 = vmatmul.f32.gmra.mxu0 %v661
        %v1525 = vpop.f32.mrf.mxu0
        %v1526 = vadd.f32 %v1189, %v1525
        %1527 = vmatmul.f32.gmra.mxu0 %v665
        %v1528 = vpop.f32.mrf.mxu0
        %v1529 = vadd.f32 %v1192, %v1528
        %1530 = vmatmul.f32.gmra.mxu0 %v669
        %v1531 = vpop.f32.mrf.mxu0
        %v1532 = vadd.f32 %v1195, %v1531
        %1533 = vmatmul.f32.gmra.mxu0 %v673
        %v1534 = vpop.f32.mrf.mxu0
        %v1535 = vadd.f32 %v1198, %v1534
        %1536 = vmatmul.f32.gmra.mxu0 %v677
        %v1537 = vpop.f32.mrf.mxu0
        %v1538 = vadd.f32 %v1201, %v1537
        %1539 = vmatmul.f32.gmra.mxu0 %v681
        %v1540 = vpop.f32.mrf.mxu0
        %v1541 = vadd.f32 %v1204, %v1540
        %1542 = vmatmul.f32.gmra.mxu0 %v685
        %v1543 = vpop.f32.mrf.mxu0
        %v1544 = vadd.f32 %v1207, %v1543
        %1545 = vmatmul.f32.gmra.mxu0 %v689
        %v1546 = vpop.f32.mrf.mxu0
        %v1547 = vadd.f32 %v1210, %v1546
        %1548 = vmatmul.f32.gmra.mxu0 %v693
        %v1549 = vpop.f32.mrf.mxu0
        %v1550 = vadd.f32 %v1213, %v1549
        %1551 = vmatmul.f32.gmra.mxu0 %v697
        %v1552 = vpop.f32.mrf.mxu0
        %v1553 = vadd.f32 %v1216, %v1552
        %1554 = vmatmul.f32.gmra.mxu0 %v701
        %v1555 = vpop.f32.mrf.mxu0
        %v1556 = vadd.f32 %v1219, %v1555
        %1557 = vmatmul.f32.gmra.mxu0 %v705
        %v1558 = vpop.f32.mrf.mxu0
        %v1559 = vadd.f32 %v1222, %v1558
        %1560 = vmatmul.f32.gmra.mxu0 %v709
        %v1561 = vpop.f32.mrf.mxu0
        %v1562 = vadd.f32 %v1225, %v1561
        %1563 = vmatmul.f32.gmra.mxu0 %v713
        %v1564 = vpop.f32.mrf.mxu0
        %v1565 = vadd.f32 %v1228, %v1564
        %1566 = vmatmul.f32.gmra.mxu0 %v717
        %v1567 = vpop.f32.mrf.mxu0
        %v1568 = vadd.f32 %v1231, %v1567
        %1569 = vmatmul.f32.gmra.mxu0 %v721
        %v1570 = vpop.f32.mrf.mxu0
        %v1571 = vadd.f32 %v1234, %v1570
        %1572 = vmatmul.f32.gmra.mxu0 %v725
        %v1573 = vpop.f32.mrf.mxu0
        %v1574 = vadd.f32 %v1237, %v1573
        %1575 = vmatmul.f32.gmra.mxu0 %v729
        %v1576 = vpop.f32.mrf.mxu0
        %v1577 = vadd.f32 %v1240, %v1576
        %1578 = vmatmul.f32.gmra.mxu0 %v733
        %v1579 = vpop.f32.mrf.mxu0
        %v1580 = vadd.f32 %v1243, %v1579
        %1581 = vmatmul.f32.gmra.mxu0 %v737
        %v1582 = vpop.f32.mrf.mxu0
        %v1583 = vadd.f32 %v1246, %v1582
        %1584 = vmatmul.f32.gmra.mxu0 %v741
        %v1585 = vpop.f32.mrf.mxu0
        %v1586 = vadd.f32 %v1249, %v1585
        %1587 = vmatmul.f32.gmra.mxu0 %v745
        %v1588 = vpop.f32.mrf.mxu0
        %v1589 = vadd.f32 %v1252, %v1588
        %1590 = vmatmul.f32.gmra.mxu0 %v749
        %v1591 = vpop.f32.mrf.mxu0
        %v1592 = vadd.f32 %v1255, %v1591
        %1593 = vmatmul.f32.gmra.mxu0 %v753
        %v1594 = vpop.f32.mrf.mxu0
        %v1595 = vadd.f32 %v1258, %v1594
        %1596 = vmatmul.f32.gmra.mxu0 %v757
        %v1597 = vpop.f32.mrf.mxu0
        %v1598 = vadd.f32 %v1261, %v1597
        %1599 = vmatmul.f32.gmra.mxu0 %v761
        %v1600 = vpop.f32.mrf.mxu0
        %v1601 = vadd.f32 %v1264, %v1600
        %1602 = vmatmul.f32.gmra.mxu0 %v765
        %v1603 = vpop.f32.mrf.mxu0
        %v1604 = vadd.f32 %v1267, %v1603
        %1605 = vmatmul.f32.gmra.mxu0 %v769
        %v1606 = vpop.f32.mrf.mxu0
        %v1607 = vadd.f32 %v1270, %v1606
        %1608 = vmatmul.f32.gmra.mxu0 %v773
        %v1609 = vpop.f32.mrf.mxu0
        %v1610 = vadd.f32 %v1273, %v1609
        %1611 = vmatmul.f32.gmra.mxu0 %v777
        %v1612 = vpop.f32.mrf.mxu0
        %v1613 = vadd.f32 %v1276, %v1612
        %1614 = vmatmul.f32.gmra.mxu0 %v781
        %v1615 = vpop.f32.mrf.mxu0
        %1616 = vmatmul.f32.gmra.mxu0 %v785
        %v1617 = vpop.f32.mrf.mxu0
        %1618 = vmatmul.f32.gmra.mxu0 %v789
        %v1619 = vpop.f32.mrf.mxu0
        %1620 = vmatmul.f32.gmra.mxu0 %v793
        %v1621 = vpop.f32.mrf.mxu0
        %1622 = vmatmul.f32.gmra.mxu0 %v797
        %v1623 = vpop.f32.mrf.mxu0
        %1624 = vmatmul.f32.gmra.mxu0 %v801
        %v1625 = vpop.f32.mrf.mxu0
        %1626 = vmatmul.f32.gmra.mxu0 %v805
        %v1627 = vpop.f32.mrf.mxu0
        %1628 = vmatmul.f32.gmra.mxu0 %v809
        %v1629 = vpop.f32.mrf.mxu0
        %1630 = vmatmul.f32.gmra.mxu0 %v813
        %v1631 = vpop.f32.mrf.mxu0
        %1632 = vmatmul.f32.gmra.mxu0 %v817
        %v1633 = vpop.f32.mrf.mxu0
        %1634 = vmatmul.f32.gmra.mxu0 %v821
        %v1635 = vpop.f32.mrf.mxu0
        %1636 = vmatmul.f32.gmra.mxu0 %v825
        %v1637 = vpop.f32.mrf.mxu0
        %1638 = vmatmul.f32.gmra.mxu0 %v829
        %v1639 = vpop.f32.mrf.mxu0
        %1640 = vmatmul.f32.gmra.mxu0 %v833
        %v1641 = vpop.f32.mrf.mxu0
        %1642 = vmatmul.f32.gmra.mxu0 %v837
        %v1643 = vpop.f32.mrf.mxu0
        %1644 = vmatmul.f32.gmra.mxu0 %v841
        %v1645 = vpop.f32.mrf.mxu0
        %1646 = vdwg.mxu0
        %1647 = vmatpush.msra.mxu0 %v956
        %1648 = vmatpush.msra.mxu0 %v955
        %1649 = vmatpush.msra.mxu0 %v954
        %1650 = vmatpush.msra.mxu0 %v953
        %1651 = vmatpush.msra.mxu0 %v952
        %1652 = vmatpush.msra.mxu0 %v951
        %1653 = vmatpush.msra.mxu0 %v950
        %1654 = vmatpush.msra.mxu0 %v949
        %1655 = vmatpush.msra.mxu0 %v948
        %1656 = vmatpush.msra.mxu0 %v947
        %1657 = vmatpush.msra.mxu0 %v946
        %1658 = vmatpush.msra.mxu0 %v945
        %1659 = vmatpush.msra.mxu0 %v944
        %1660 = vmatpush.msra.mxu0 %v943
        %1661 = vmatpush.msra.mxu0 %v942
        %1662 = vmatpush.msra.mxu0 %v941
        %1663 = vmatmul.f32.gmra.mxu0 %v398
        %v1664 = vpop.f32.mrf.mxu0
        %v1665 = vadd.f32 %v1328, %v1664
        %1666 = vmatmul.f32.gmra.mxu0 %v402
        %v1667 = vpop.f32.mrf.mxu0
        %v1668 = vadd.f32 %v1331, %v1667
        %1669 = vmatmul.f32.gmra.mxu0 %v406
        %v1670 = vpop.f32.mrf.mxu0
        %v1671 = vadd.f32 %v1334, %v1670
        %1672 = vmatmul.f32.gmra.mxu0 %v410
        %v1673 = vpop.f32.mrf.mxu0
        %v1674 = vadd.f32 %v1337, %v1673
        %1675 = vmatmul.f32.gmra.mxu0 %v414
        %v1676 = vpop.f32.mrf.mxu0
        %v1677 = vadd.f32 %v1340, %v1676
        %1678 = vmatmul.f32.gmra.mxu0 %v418
        %v1679 = vpop.f32.mrf.mxu0
        %v1680 = vadd.f32 %v1343, %v1679
        %1681 = vmatmul.f32.gmra.mxu0 %v422
        %v1682 = vpop.f32.mrf.mxu0
        %v1683 = vadd.f32 %v1346, %v1682
        %1684 = vmatmul.f32.gmra.mxu0 %v426
        %v1685 = vpop.f32.mrf.mxu0
        %v1686 = vadd.f32 %v1349, %v1685
        %1687 = vmatmul.f32.gmra.mxu0 %v430
        %v1688 = vpop.f32.mrf.mxu0
        %v1689 = vadd.f32 %v1352, %v1688
        %1690 = vmatmul.f32.gmra.mxu0 %v434
        %v1691 = vpop.f32.mrf.mxu0
        %v1692 = vadd.f32 %v1355, %v1691
        %1693 = vmatmul.f32.gmra.mxu0 %v438
        %v1694 = vpop.f32.mrf.mxu0
        %v1695 = vadd.f32 %v1358, %v1694
        %1696 = vmatmul.f32.gmra.mxu0 %v442
        %v1697 = vpop.f32.mrf.mxu0
        %v1698 = vadd.f32 %v1361, %v1697
        %1699 = vmatmul.f32.gmra.mxu0 %v446
        %v1700 = vpop.f32.mrf.mxu0
        %v1701 = vadd.f32 %v1364, %v1700
        %1702 = vmatmul.f32.gmra.mxu0 %v450
        %v1703 = vpop.f32.mrf.mxu0
        %v1704 = vadd.f32 %v1367, %v1703
        %1705 = vmatmul.f32.gmra.mxu0 %v454
        %v1706 = vpop.f32.mrf.mxu0
        %v1707 = vadd.f32 %v1370, %v1706
        %1708 = vmatmul.f32.gmra.mxu0 %v458
        %v1709 = vpop.f32.mrf.mxu0
        %v1710 = vadd.f32 %v1373, %v1709
        %1711 = vmatmul.f32.gmra.mxu0 %v462
        %v1712 = vpop.f32.mrf.mxu0
        %v1713 = vadd.f32 %v1376, %v1712
        %1714 = vmatmul.f32.gmra.mxu0 %v466
        %v1715 = vpop.f32.mrf.mxu0
        %v1716 = vadd.f32 %v1379, %v1715
        %1717 = vmatmul.f32.gmra.mxu0 %v470
        %v1718 = vpop.f32.mrf.mxu0
        %v1719 = vadd.f32 %v1382, %v1718
        %1720 = vmatmul.f32.gmra.mxu0 %v474
        %v1721 = vpop.f32.mrf.mxu0
        %v1722 = vadd.f32 %v1385, %v1721
        %1723 = vmatmul.f32.gmra.mxu0 %v478
        %v1724 = vpop.f32.mrf.mxu0
        %v1725 = vadd.f32 %v1388, %v1724
        %1726 = vmatmul.f32.gmra.mxu0 %v482
        %v1727 = vpop.f32.mrf.mxu0
        %v1728 = vadd.f32 %v1391, %v1727
        %1729 = vmatmul.f32.gmra.mxu0 %v486
        %v1730 = vpop.f32.mrf.mxu0
        %v1731 = vadd.f32 %v1394, %v1730
        %1732 = vmatmul.f32.gmra.mxu0 %v490
        %v1733 = vpop.f32.mrf.mxu0
        %v1734 = vadd.f32 %v1397, %v1733
        %1735 = vmatmul.f32.gmra.mxu0 %v494
        %v1736 = vpop.f32.mrf.mxu0
        %v1737 = vadd.f32 %v1400, %v1736
        %1738 = vmatmul.f32.gmra.mxu0 %v498
        %v1739 = vpop.f32.mrf.mxu0
        %v1740 = vadd.f32 %v1403, %v1739
        %1741 = vmatmul.f32.gmra.mxu0 %v502
        %v1742 = vpop.f32.mrf.mxu0
        %v1743 = vadd.f32 %v1406, %v1742
        %1744 = vmatmul.f32.gmra.mxu0 %v506
        %v1745 = vpop.f32.mrf.mxu0
        %v1746 = vadd.f32 %v1409, %v1745
        %1747 = vmatmul.f32.gmra.mxu0 %v510
        %v1748 = vpop.f32.mrf.mxu0
        %v1749 = vadd.f32 %v1412, %v1748
        %1750 = vmatmul.f32.gmra.mxu0 %v514
        %v1751 = vpop.f32.mrf.mxu0
        %v1752 = vadd.f32 %v1415, %v1751
        %1753 = vmatmul.f32.gmra.mxu0 %v518
        %v1754 = vpop.f32.mrf.mxu0
        %v1755 = vadd.f32 %v1418, %v1754
        %1756 = vmatmul.f32.gmra.mxu0 %v522
        %v1757 = vpop.f32.mrf.mxu0
        %v1758 = vadd.f32 %v1421, %v1757
        %1759 = vmatmul.f32.gmra.mxu0 %v526
        %v1760 = vpop.f32.mrf.mxu0
        %v1761 = vadd.f32 %v1424, %v1760
        %1762 = vmatmul.f32.gmra.mxu0 %v530
        %v1763 = vpop.f32.mrf.mxu0
        %v1764 = vadd.f32 %v1427, %v1763
        %1765 = vmatmul.f32.gmra.mxu0 %v534
        %v1766 = vpop.f32.mrf.mxu0
        %v1767 = vadd.f32 %v1430, %v1766
        %1768 = vmatmul.f32.gmra.mxu0 %v538
        %v1769 = vpop.f32.mrf.mxu0
        %v1770 = vadd.f32 %v1433, %v1769
        %1771 = vmatmul.f32.gmra.mxu0 %v542
        %v1772 = vpop.f32.mrf.mxu0
        %v1773 = vadd.f32 %v1436, %v1772
        %1774 = vmatmul.f32.gmra.mxu0 %v546
        %v1775 = vpop.f32.mrf.mxu0
        %v1776 = vadd.f32 %v1439, %v1775
        %1777 = vmatmul.f32.gmra.mxu0 %v550
        %v1778 = vpop.f32.mrf.mxu0
        %v1779 = vadd.f32 %v1442, %v1778
        %1780 = vmatmul.f32.gmra.mxu0 %v554
        %v1781 = vpop.f32.mrf.mxu0
        %v1782 = vadd.f32 %v1445, %v1781
        %1783 = vmatmul.f32.gmra.mxu0 %v558
        %v1784 = vpop.f32.mrf.mxu0
        %v1785 = vadd.f32 %v1448, %v1784
        %1786 = vmatmul.f32.gmra.mxu0 %v562
        %v1787 = vpop.f32.mrf.mxu0
        %v1788 = vadd.f32 %v1451, %v1787
        %1789 = vmatmul.f32.gmra.mxu0 %v566
        %v1790 = vpop.f32.mrf.mxu0
        %v1791 = vadd.f32 %v1454, %v1790
        %1792 = vmatmul.f32.gmra.mxu0 %v570
        %v1793 = vpop.f32.mrf.mxu0
        %v1794 = vadd.f32 %v1457, %v1793
        %1795 = vmatmul.f32.gmra.mxu0 %v574
        %v1796 = vpop.f32.mrf.mxu0
        %v1797 = vadd.f32 %v1460, %v1796
        %1798 = vmatmul.f32.gmra.mxu0 %v578
        %v1799 = vpop.f32.mrf.mxu0
        %v1800 = vadd.f32 %v1463, %v1799
        %1801 = vmatmul.f32.gmra.mxu0 %v582
        %v1802 = vpop.f32.mrf.mxu0
        %v1803 = vadd.f32 %v1466, %v1802
        %1804 = vmatmul.f32.gmra.mxu0 %v586
        %v1805 = vpop.f32.mrf.mxu0
        %v1806 = vadd.f32 %v1469, %v1805
        %1807 = vmatmul.f32.gmra.mxu0 %v590
        %v1808 = vpop.f32.mrf.mxu0
        %v1809 = vadd.f32 %v1472, %v1808
        %1810 = vmatmul.f32.gmra.mxu0 %v594
        %v1811 = vpop.f32.mrf.mxu0
        %v1812 = vadd.f32 %v1475, %v1811
        %1813 = vmatmul.f32.gmra.mxu0 %v598
        %v1814 = vpop.f32.mrf.mxu0
        %v1815 = vadd.f32 %v1478, %v1814
        %1816 = vmatmul.f32.gmra.mxu0 %v602
        %v1817 = vpop.f32.mrf.mxu0
        %v1818 = vadd.f32 %v1481, %v1817
        %1819 = vmatmul.f32.gmra.mxu0 %v606
        %v1820 = vpop.f32.mrf.mxu0
        %v1821 = vadd.f32 %v1484, %v1820
        %1822 = vmatmul.f32.gmra.mxu0 %v610
        %v1823 = vpop.f32.mrf.mxu0
        %v1824 = vadd.f32 %v1487, %v1823
        %1825 = vmatmul.f32.gmra.mxu0 %v614
        %v1826 = vpop.f32.mrf.mxu0
        %v1827 = vadd.f32 %v1490, %v1826
        %1828 = vmatmul.f32.gmra.mxu0 %v618
        %v1829 = vpop.f32.mrf.mxu0
        %v1830 = vadd.f32 %v1493, %v1829
        %1831 = vmatmul.f32.gmra.mxu0 %v622
        %v1832 = vpop.f32.mrf.mxu0
        %v1833 = vadd.f32 %v1496, %v1832
        %1834 = vmatmul.f32.gmra.mxu0 %v626
        %v1835 = vpop.f32.mrf.mxu0
        %v1836 = vadd.f32 %v1499, %v1835
        %1837 = vmatmul.f32.gmra.mxu0 %v630
        %v1838 = vpop.f32.mrf.mxu0
        %v1839 = vadd.f32 %v1502, %v1838
        %1840 = vmatmul.f32.gmra.mxu0 %v634
        %v1841 = vpop.f32.mrf.mxu0
        %v1842 = vadd.f32 %v1505, %v1841
        %1843 = vmatmul.f32.gmra.mxu0 %v638
        %v1844 = vpop.f32.mrf.mxu0
        %v1845 = vadd.f32 %v1508, %v1844
        %1846 = vmatmul.f32.gmra.mxu0 %v642
        %v1847 = vpop.f32.mrf.mxu0
        %v1848 = vadd.f32 %v1511, %v1847
        %1849 = vmatmul.f32.gmra.mxu0 %v646
        %v1850 = vpop.f32.mrf.mxu0
        %v1851 = vadd.f32 %v1514, %v1850
        %1852 = vmatmul.f32.gmra.mxu0 %v650
        %v1853 = vpop.f32.mrf.mxu0
        %v1854 = vadd.f32 %v1517, %v1853
        %1855 = vmatmul.f32.gmra.mxu0 %v654
        %v1856 = vpop.f32.mrf.mxu0
        %v1857 = vadd.f32 %v1520, %v1856
        %1858 = vmatmul.f32.gmra.mxu0 %v658
        %v1859 = vpop.f32.mrf.mxu0
        %v1860 = vadd.f32 %v1523, %v1859
        %1861 = vmatmul.f32.gmra.mxu0 %v662
        %v1862 = vpop.f32.mrf.mxu0
        %v1863 = vadd.f32 %v1526, %v1862
        %1864 = vmatmul.f32.gmra.mxu0 %v666
        %v1865 = vpop.f32.mrf.mxu0
        %v1866 = vadd.f32 %v1529, %v1865
        %1867 = vmatmul.f32.gmra.mxu0 %v670
        %v1868 = vpop.f32.mrf.mxu0
        %v1869 = vadd.f32 %v1532, %v1868
        %1870 = vmatmul.f32.gmra.mxu0 %v674
        %v1871 = vpop.f32.mrf.mxu0
        %v1872 = vadd.f32 %v1535, %v1871
        %1873 = vmatmul.f32.gmra.mxu0 %v678
        %v1874 = vpop.f32.mrf.mxu0
        %v1875 = vadd.f32 %v1538, %v1874
        %1876 = vmatmul.f32.gmra.mxu0 %v682
        %v1877 = vpop.f32.mrf.mxu0
        %v1878 = vadd.f32 %v1541, %v1877
        %1879 = vmatmul.f32.gmra.mxu0 %v686
        %v1880 = vpop.f32.mrf.mxu0
        %v1881 = vadd.f32 %v1544, %v1880
        %1882 = vmatmul.f32.gmra.mxu0 %v690
        %v1883 = vpop.f32.mrf.mxu0
        %v1884 = vadd.f32 %v1547, %v1883
        %1885 = vmatmul.f32.gmra.mxu0 %v694
        %v1886 = vpop.f32.mrf.mxu0
        %v1887 = vadd.f32 %v1550, %v1886
        %1888 = vmatmul.f32.gmra.mxu0 %v698
        %v1889 = vpop.f32.mrf.mxu0
        %v1890 = vadd.f32 %v1553, %v1889
        %1891 = vmatmul.f32.gmra.mxu0 %v702
        %v1892 = vpop.f32.mrf.mxu0
        %v1893 = vadd.f32 %v1556, %v1892
        %1894 = vmatmul.f32.gmra.mxu0 %v706
        %v1895 = vpop.f32.mrf.mxu0
        %v1896 = vadd.f32 %v1559, %v1895
        %1897 = vmatmul.f32.gmra.mxu0 %v710
        %v1898 = vpop.f32.mrf.mxu0
        %v1899 = vadd.f32 %v1562, %v1898
        %1900 = vmatmul.f32.gmra.mxu0 %v714
        %v1901 = vpop.f32.mrf.mxu0
        %v1902 = vadd.f32 %v1565, %v1901
        %1903 = vmatmul.f32.gmra.mxu0 %v718
        %v1904 = vpop.f32.mrf.mxu0
        %v1905 = vadd.f32 %v1568, %v1904
        %1906 = vmatmul.f32.gmra.mxu0 %v722
        %v1907 = vpop.f32.mrf.mxu0
        %v1908 = vadd.f32 %v1571, %v1907
        %1909 = vmatmul.f32.gmra.mxu0 %v726
        %v1910 = vpop.f32.mrf.mxu0
        %v1911 = vadd.f32 %v1574, %v1910
        %1912 = vmatmul.f32.gmra.mxu0 %v730
        %v1913 = vpop.f32.mrf.mxu0
        %v1914 = vadd.f32 %v1577, %v1913
        %1915 = vmatmul.f32.gmra.mxu0 %v734
        %v1916 = vpop.f32.mrf.mxu0
        %v1917 = vadd.f32 %v1580, %v1916
        %1918 = vmatmul.f32.gmra.mxu0 %v738
        %v1919 = vpop.f32.mrf.mxu0
        %v1920 = vadd.f32 %v1583, %v1919
        %1921 = vmatmul.f32.gmra.mxu0 %v742
        %v1922 = vpop.f32.mrf.mxu0
        %v1923 = vadd.f32 %v1586, %v1922
        %1924 = vmatmul.f32.gmra.mxu0 %v746
        %v1925 = vpop.f32.mrf.mxu0
        %v1926 = vadd.f32 %v1589, %v1925
        %1927 = vmatmul.f32.gmra.mxu0 %v750
        %v1928 = vpop.f32.mrf.mxu0
        %v1929 = vadd.f32 %v1592, %v1928
        %1930 = vmatmul.f32.gmra.mxu0 %v754
        %v1931 = vpop.f32.mrf.mxu0
        %v1932 = vadd.f32 %v1595, %v1931
        %1933 = vmatmul.f32.gmra.mxu0 %v758
        %v1934 = vpop.f32.mrf.mxu0
        %v1935 = vadd.f32 %v1598, %v1934
        %1936 = vmatmul.f32.gmra.mxu0 %v762
        %v1937 = vpop.f32.mrf.mxu0
        %v1938 = vadd.f32 %v1601, %v1937
        %1939 = vmatmul.f32.gmra.mxu0 %v766
        %v1940 = vpop.f32.mrf.mxu0
        %v1941 = vadd.f32 %v1604, %v1940
        %1942 = vmatmul.f32.gmra.mxu0 %v770
        %v1943 = vpop.f32.mrf.mxu0
        %v1944 = vadd.f32 %v1607, %v1943
        %1945 = vmatmul.f32.gmra.mxu0 %v774
        %v1946 = vpop.f32.mrf.mxu0
        %v1947 = vadd.f32 %v1610, %v1946
        %1948 = vmatmul.f32.gmra.mxu0 %v778
        %v1949 = vpop.f32.mrf.mxu0
        %v1950 = vadd.f32 %v1613, %v1949
        %1951 = vmatmul.f32.gmra.mxu0 %v782
        %v1952 = vpop.f32.mrf.mxu0
        %1953 = vmatmul.f32.gmra.mxu0 %v786
        %v1954 = vpop.f32.mrf.mxu0
        %1955 = vmatmul.f32.gmra.mxu0 %v790
        %v1956 = vpop.f32.mrf.mxu0
        %1957 = vmatmul.f32.gmra.mxu0 %v794
        %v1958 = vpop.f32.mrf.mxu0
        %1959 = vmatmul.f32.gmra.mxu0 %v798
        %v1960 = vpop.f32.mrf.mxu0
        %1961 = vmatmul.f32.gmra.mxu0 %v802
        %v1962 = vpop.f32.mrf.mxu0
        %1963 = vmatmul.f32.gmra.mxu0 %v806
        %v1964 = vpop.f32.mrf.mxu0
        %1965 = vmatmul.f32.gmra.mxu0 %v810
        %v1966 = vpop.f32.mrf.mxu0
        %1967 = vmatmul.f32.gmra.mxu0 %v814
        %v1968 = vpop.f32.mrf.mxu0
        %1969 = vmatmul.f32.gmra.mxu0 %v818
        %v1970 = vpop.f32.mrf.mxu0
        %1971 = vmatmul.f32.gmra.mxu0 %v822
        %v1972 = vpop.f32.mrf.mxu0
        %1973 = vmatmul.f32.gmra.mxu0 %v826
        %v1974 = vpop.f32.mrf.mxu0
        %1975 = vmatmul.f32.gmra.mxu0 %v830
        %v1976 = vpop.f32.mrf.mxu0
        %1977 = vmatmul.f32.gmra.mxu0 %v834
        %v1978 = vpop.f32.mrf.mxu0
        %1979 = vmatmul.f32.gmra.mxu0 %v838
        %v1980 = vpop.f32.mrf.mxu0
        %1981 = vmatmul.f32.gmra.mxu0 %v842
        %v1982 = vpop.f32.mrf.mxu0
        %1983 = vdwg.mxu0
        %1984 = vmatpush.msra.mxu0 %v972
        %1985 = vmatpush.msra.mxu0 %v971
        %1986 = vmatpush.msra.mxu0 %v970
        %1987 = vmatpush.msra.mxu0 %v969
        %1988 = vmatpush.msra.mxu0 %v968
        %1989 = vmatpush.msra.mxu0 %v967
        %1990 = vmatpush.msra.mxu0 %v966
        %1991 = vmatpush.msra.mxu0 %v965
        %1992 = vmatpush.msra.mxu0 %v964
        %1993 = vmatpush.msra.mxu0 %v963
        %1994 = vmatpush.msra.mxu0 %v962
        %1995 = vmatpush.msra.mxu0 %v961
        %1996 = vmatpush.msra.mxu0 %v960
        %1997 = vmatpush.msra.mxu0 %v959
        %1998 = vmatpush.msra.mxu0 %v958
        %1999 = vmatpush.msra.mxu0 %v957
        %2000 = vmatmul.f32.gmra.mxu0 %v399
        %v2001 = vpop.f32.mrf.mxu0
        %v2002 = vadd.f32 %v1665, %v2001
        %2003 = vmatmul.f32.gmra.mxu0 %v403
        %v2004 = vpop.f32.mrf.mxu0
        %v2005 = vadd.f32 %v1668, %v2004
        %2006 = vmatmul.f32.gmra.mxu0 %v407
        %v2007 = vpop.f32.mrf.mxu0
        %v2008 = vadd.f32 %v1671, %v2007
        %2009 = vmatmul.f32.gmra.mxu0 %v411
        %v2010 = vpop.f32.mrf.mxu0
        %v2011 = vadd.f32 %v1674, %v2010
        %2012 = vmatmul.f32.gmra.mxu0 %v415
        %v2013 = vpop.f32.mrf.mxu0
        %v2014 = vadd.f32 %v1677, %v2013
        %2015 = vmatmul.f32.gmra.mxu0 %v419
        %v2016 = vpop.f32.mrf.mxu0
        %v2017 = vadd.f32 %v1680, %v2016
        %2018 = vmatmul.f32.gmra.mxu0 %v423
        %v2019 = vpop.f32.mrf.mxu0
        %v2020 = vadd.f32 %v1683, %v2019
        %2021 = vmatmul.f32.gmra.mxu0 %v427
        %v2022 = vpop.f32.mrf.mxu0
        %v2023 = vadd.f32 %v1686, %v2022
        %2024 = vmatmul.f32.gmra.mxu0 %v431
        %v2025 = vpop.f32.mrf.mxu0
        %v2026 = vadd.f32 %v1689, %v2025
        %2027 = vmatmul.f32.gmra.mxu0 %v435
        %v2028 = vpop.f32.mrf.mxu0
        %v2029 = vadd.f32 %v1692, %v2028
        %2030 = vmatmul.f32.gmra.mxu0 %v439
        %v2031 = vpop.f32.mrf.mxu0
        %v2032 = vadd.f32 %v1695, %v2031
        %2033 = vmatmul.f32.gmra.mxu0 %v443
        %v2034 = vpop.f32.mrf.mxu0
        %v2035 = vadd.f32 %v1698, %v2034
        %2036 = vmatmul.f32.gmra.mxu0 %v447
        %v2037 = vpop.f32.mrf.mxu0
        %v2038 = vadd.f32 %v1701, %v2037
        %2039 = vmatmul.f32.gmra.mxu0 %v451
        %v2040 = vpop.f32.mrf.mxu0
        %v2041 = vadd.f32 %v1704, %v2040
        %2042 = vmatmul.f32.gmra.mxu0 %v455
        %v2043 = vpop.f32.mrf.mxu0
        %v2044 = vadd.f32 %v1707, %v2043
        %2045 = vmatmul.f32.gmra.mxu0 %v459
        %v2046 = vpop.f32.mrf.mxu0
        %v2047 = vadd.f32 %v1710, %v2046
        %2048 = vmatmul.f32.gmra.mxu0 %v463
        %v2049 = vpop.f32.mrf.mxu0
        %v2050 = vadd.f32 %v1713, %v2049
        %2051 = vmatmul.f32.gmra.mxu0 %v467
        %v2052 = vpop.f32.mrf.mxu0
        %v2053 = vadd.f32 %v1716, %v2052
        %2054 = vmatmul.f32.gmra.mxu0 %v471
        %v2055 = vpop.f32.mrf.mxu0
        %v2056 = vadd.f32 %v1719, %v2055
        %2057 = vmatmul.f32.gmra.mxu0 %v475
        %v2058 = vpop.f32.mrf.mxu0
        %v2059 = vadd.f32 %v1722, %v2058
        %2060 = vmatmul.f32.gmra.mxu0 %v479
        %v2061 = vpop.f32.mrf.mxu0
        %v2062 = vadd.f32 %v1725, %v2061
        %2063 = vmatmul.f32.gmra.mxu0 %v483
        %v2064 = vpop.f32.mrf.mxu0
        %v2065 = vadd.f32 %v1728, %v2064
        %2066 = vmatmul.f32.gmra.mxu0 %v487
        %v2067 = vpop.f32.mrf.mxu0
        %v2068 = vadd.f32 %v1731, %v2067
        %2069 = vmatmul.f32.gmra.mxu0 %v491
        %v2070 = vpop.f32.mrf.mxu0
        %v2071 = vadd.f32 %v1734, %v2070
        %2072 = vmatmul.f32.gmra.mxu0 %v495
        %v2073 = vpop.f32.mrf.mxu0
        %v2074 = vadd.f32 %v1737, %v2073
        %2075 = vmatmul.f32.gmra.mxu0 %v499
        %v2076 = vpop.f32.mrf.mxu0
        %v2077 = vadd.f32 %v1740, %v2076
        %2078 = vmatmul.f32.gmra.mxu0 %v503
        %v2079 = vpop.f32.mrf.mxu0
        %v2080 = vadd.f32 %v1743, %v2079
        %2081 = vmatmul.f32.gmra.mxu0 %v507
        %v2082 = vpop.f32.mrf.mxu0
        %v2083 = vadd.f32 %v1746, %v2082
        %2084 = vmatmul.f32.gmra.mxu0 %v511
        %v2085 = vpop.f32.mrf.mxu0
        %v2086 = vadd.f32 %v1749, %v2085
        %2087 = vmatmul.f32.gmra.mxu0 %v515
        %v2088 = vpop.f32.mrf.mxu0
        %v2089 = vadd.f32 %v1752, %v2088
        %2090 = vmatmul.f32.gmra.mxu0 %v519
        %v2091 = vpop.f32.mrf.mxu0
        %v2092 = vadd.f32 %v1755, %v2091
        %2093 = vmatmul.f32.gmra.mxu0 %v523
        %v2094 = vpop.f32.mrf.mxu0
        %v2095 = vadd.f32 %v1758, %v2094
        %2096 = vmatmul.f32.gmra.mxu0 %v527
        %v2097 = vpop.f32.mrf.mxu0
        %v2098 = vadd.f32 %v1761, %v2097
        %2099 = vmatmul.f32.gmra.mxu0 %v531
        %v2100 = vpop.f32.mrf.mxu0
        %v2101 = vadd.f32 %v1764, %v2100
        %2102 = vmatmul.f32.gmra.mxu0 %v535
        %v2103 = vpop.f32.mrf.mxu0
        %v2104 = vadd.f32 %v1767, %v2103
        %2105 = vmatmul.f32.gmra.mxu0 %v539
        %v2106 = vpop.f32.mrf.mxu0
        %v2107 = vadd.f32 %v1770, %v2106
        %2108 = vmatmul.f32.gmra.mxu0 %v543
        %v2109 = vpop.f32.mrf.mxu0
        %v2110 = vadd.f32 %v1773, %v2109
        %2111 = vmatmul.f32.gmra.mxu0 %v547
        %v2112 = vpop.f32.mrf.mxu0
        %v2113 = vadd.f32 %v1776, %v2112
        %2114 = vmatmul.f32.gmra.mxu0 %v551
        %v2115 = vpop.f32.mrf.mxu0
        %v2116 = vadd.f32 %v1779, %v2115
        %2117 = vmatmul.f32.gmra.mxu0 %v555
        %v2118 = vpop.f32.mrf.mxu0
        %v2119 = vadd.f32 %v1782, %v2118
        %2120 = vmatmul.f32.gmra.mxu0 %v559
        %v2121 = vpop.f32.mrf.mxu0
        %v2122 = vadd.f32 %v1785, %v2121
        %2123 = vmatmul.f32.gmra.mxu0 %v563
        %v2124 = vpop.f32.mrf.mxu0
        %v2125 = vadd.f32 %v1788, %v2124
        %2126 = vmatmul.f32.gmra.mxu0 %v567
        %v2127 = vpop.f32.mrf.mxu0
        %v2128 = vadd.f32 %v1791, %v2127
        %2129 = vmatmul.f32.gmra.mxu0 %v571
        %v2130 = vpop.f32.mrf.mxu0
        %v2131 = vadd.f32 %v1794, %v2130
        %2132 = vmatmul.f32.gmra.mxu0 %v575
        %v2133 = vpop.f32.mrf.mxu0
        %v2134 = vadd.f32 %v1797, %v2133
        %2135 = vmatmul.f32.gmra.mxu0 %v579
        %v2136 = vpop.f32.mrf.mxu0
        %v2137 = vadd.f32 %v1800, %v2136
        %2138 = vmatmul.f32.gmra.mxu0 %v583
        %v2139 = vpop.f32.mrf.mxu0
        %v2140 = vadd.f32 %v1803, %v2139
        %2141 = vmatmul.f32.gmra.mxu0 %v587
        %v2142 = vpop.f32.mrf.mxu0
        %v2143 = vadd.f32 %v1806, %v2142
        %2144 = vmatmul.f32.gmra.mxu0 %v591
        %v2145 = vpop.f32.mrf.mxu0
        %v2146 = vadd.f32 %v1809, %v2145
        %2147 = vmatmul.f32.gmra.mxu0 %v595
        %v2148 = vpop.f32.mrf.mxu0
        %v2149 = vadd.f32 %v1812, %v2148
        %2150 = vmatmul.f32.gmra.mxu0 %v599
        %v2151 = vpop.f32.mrf.mxu0
        %v2152 = vadd.f32 %v1815, %v2151
        %2153 = vmatmul.f32.gmra.mxu0 %v603
        %v2154 = vpop.f32.mrf.mxu0
        %v2155 = vadd.f32 %v1818, %v2154
        %2156 = vmatmul.f32.gmra.mxu0 %v607
        %v2157 = vpop.f32.mrf.mxu0
        %v2158 = vadd.f32 %v1821, %v2157
        %2159 = vmatmul.f32.gmra.mxu0 %v611
        %v2160 = vpop.f32.mrf.mxu0
        %v2161 = vadd.f32 %v1824, %v2160
        %2162 = vmatmul.f32.gmra.mxu0 %v615
        %v2163 = vpop.f32.mrf.mxu0
        %v2164 = vadd.f32 %v1827, %v2163
        %2165 = vmatmul.f32.gmra.mxu0 %v619
        %v2166 = vpop.f32.mrf.mxu0
        %v2167 = vadd.f32 %v1830, %v2166
        %2168 = vmatmul.f32.gmra.mxu0 %v623
        %v2169 = vpop.f32.mrf.mxu0
        %v2170 = vadd.f32 %v1833, %v2169
        %2171 = vmatmul.f32.gmra.mxu0 %v627
        %v2172 = vpop.f32.mrf.mxu0
        %v2173 = vadd.f32 %v1836, %v2172
        %2174 = vmatmul.f32.gmra.mxu0 %v631
        %v2175 = vpop.f32.mrf.mxu0
        %v2176 = vadd.f32 %v1839, %v2175
        %2177 = vmatmul.f32.gmra.mxu0 %v635
        %v2178 = vpop.f32.mrf.mxu0
        %v2179 = vadd.f32 %v1842, %v2178
        %2180 = vmatmul.f32.gmra.mxu0 %v639
        %v2181 = vpop.f32.mrf.mxu0
        %v2182 = vadd.f32 %v1845, %v2181
        %2183 = vmatmul.f32.gmra.mxu0 %v643
        %v2184 = vpop.f32.mrf.mxu0
        %v2185 = vadd.f32 %v1848, %v2184
        %2186 = vmatmul.f32.gmra.mxu0 %v647
        %v2187 = vpop.f32.mrf.mxu0
        %v2188 = vadd.f32 %v1851, %v2187
        %2189 = vmatmul.f32.gmra.mxu0 %v651
        %v2190 = vpop.f32.mrf.mxu0
        %v2191 = vadd.f32 %v1854, %v2190
        %2192 = vmatmul.f32.gmra.mxu0 %v655
        %v2193 = vpop.f32.mrf.mxu0
        %v2194 = vadd.f32 %v1857, %v2193
        %2195 = vmatmul.f32.gmra.mxu0 %v659
        %v2196 = vpop.f32.mrf.mxu0
        %v2197 = vadd.f32 %v1860, %v2196
        %2198 = vmatmul.f32.gmra.mxu0 %v663
        %v2199 = vpop.f32.mrf.mxu0
        %v2200 = vadd.f32 %v1863, %v2199
        %2201 = vmatmul.f32.gmra.mxu0 %v667
        %v2202 = vpop.f32.mrf.mxu0
        %v2203 = vadd.f32 %v1866, %v2202
        %2204 = vmatmul.f32.gmra.mxu0 %v671
        %v2205 = vpop.f32.mrf.mxu0
        %v2206 = vadd.f32 %v1869, %v2205
        %2207 = vmatmul.f32.gmra.mxu0 %v675
        %v2208 = vpop.f32.mrf.mxu0
        %v2209 = vadd.f32 %v1872, %v2208
        %2210 = vmatmul.f32.gmra.mxu0 %v679
        %v2211 = vpop.f32.mrf.mxu0
        %v2212 = vadd.f32 %v1875, %v2211
        %2213 = vmatmul.f32.gmra.mxu0 %v683
        %v2214 = vpop.f32.mrf.mxu0
        %v2215 = vadd.f32 %v1878, %v2214
        %2216 = vmatmul.f32.gmra.mxu0 %v687
        %v2217 = vpop.f32.mrf.mxu0
        %v2218 = vadd.f32 %v1881, %v2217
        %2219 = vmatmul.f32.gmra.mxu0 %v691
        %v2220 = vpop.f32.mrf.mxu0
        %v2221 = vadd.f32 %v1884, %v2220
        %2222 = vmatmul.f32.gmra.mxu0 %v695
        %v2223 = vpop.f32.mrf.mxu0
        %v2224 = vadd.f32 %v1887, %v2223
        %2225 = vmatmul.f32.gmra.mxu0 %v699
        %v2226 = vpop.f32.mrf.mxu0
        %v2227 = vadd.f32 %v1890, %v2226
        %2228 = vmatmul.f32.gmra.mxu0 %v703
        %v2229 = vpop.f32.mrf.mxu0
        %v2230 = vadd.f32 %v1893, %v2229
        %2231 = vmatmul.f32.gmra.mxu0 %v707
        %v2232 = vpop.f32.mrf.mxu0
        %v2233 = vadd.f32 %v1896, %v2232
        %2234 = vmatmul.f32.gmra.mxu0 %v711
        %v2235 = vpop.f32.mrf.mxu0
        %v2236 = vadd.f32 %v1899, %v2235
        %2237 = vmatmul.f32.gmra.mxu0 %v715
        %v2238 = vpop.f32.mrf.mxu0
        %v2239 = vadd.f32 %v1902, %v2238
        %2240 = vmatmul.f32.gmra.mxu0 %v719
        %v2241 = vpop.f32.mrf.mxu0
        %v2242 = vadd.f32 %v1905, %v2241
        %2243 = vmatmul.f32.gmra.mxu0 %v723
        %v2244 = vpop.f32.mrf.mxu0
        %v2245 = vadd.f32 %v1908, %v2244
        %2246 = vmatmul.f32.gmra.mxu0 %v727
        %v2247 = vpop.f32.mrf.mxu0
        %v2248 = vadd.f32 %v1911, %v2247
        %2249 = vmatmul.f32.gmra.mxu0 %v731
        %v2250 = vpop.f32.mrf.mxu0
        %v2251 = vadd.f32 %v1914, %v2250
        %2252 = vmatmul.f32.gmra.mxu0 %v735
        %v2253 = vpop.f32.mrf.mxu0
        %v2254 = vadd.f32 %v1917, %v2253
        %2255 = vmatmul.f32.gmra.mxu0 %v739
        %v2256 = vpop.f32.mrf.mxu0
        %v2257 = vadd.f32 %v1920, %v2256
        %2258 = vmatmul.f32.gmra.mxu0 %v743
        %v2259 = vpop.f32.mrf.mxu0
        %v2260 = vadd.f32 %v1923, %v2259
        %2261 = vmatmul.f32.gmra.mxu0 %v747
        %v2262 = vpop.f32.mrf.mxu0
        %v2263 = vadd.f32 %v1926, %v2262
        %2264 = vmatmul.f32.gmra.mxu0 %v751
        %v2265 = vpop.f32.mrf.mxu0
        %v2266 = vadd.f32 %v1929, %v2265
        %2267 = vmatmul.f32.gmra.mxu0 %v755
        %v2268 = vpop.f32.mrf.mxu0
        %v2269 = vadd.f32 %v1932, %v2268
        %2270 = vmatmul.f32.gmra.mxu0 %v759
        %v2271 = vpop.f32.mrf.mxu0
        %v2272 = vadd.f32 %v1935, %v2271
        %2273 = vmatmul.f32.gmra.mxu0 %v763
        %v2274 = vpop.f32.mrf.mxu0
        %v2275 = vadd.f32 %v1938, %v2274
        %2276 = vmatmul.f32.gmra.mxu0 %v767
        %v2277 = vpop.f32.mrf.mxu0
        %v2278 = vadd.f32 %v1941, %v2277
        %2279 = vmatmul.f32.gmra.mxu0 %v771
        %v2280 = vpop.f32.mrf.mxu0
        %v2281 = vadd.f32 %v1944, %v2280
        %2282 = vmatmul.f32.gmra.mxu0 %v775
        %v2283 = vpop.f32.mrf.mxu0
        %v2284 = vadd.f32 %v1947, %v2283
        %2285 = vmatmul.f32.gmra.mxu0 %v779
        %v2286 = vpop.f32.mrf.mxu0
        %v2287 = vadd.f32 %v1950, %v2286
        %2288 = vmatmul.f32.gmra.mxu0 %v783
        %v2289 = vpop.f32.mrf.mxu0
        %2290 = vmatmul.f32.gmra.mxu0 %v787
        %v2291 = vpop.f32.mrf.mxu0
        %2292 = vmatmul.f32.gmra.mxu0 %v791
        %v2293 = vpop.f32.mrf.mxu0
        %2294 = vmatmul.f32.gmra.mxu0 %v795
        %v2295 = vpop.f32.mrf.mxu0
        %2296 = vmatmul.f32.gmra.mxu0 %v799
        %v2297 = vpop.f32.mrf.mxu0
        %2298 = vmatmul.f32.gmra.mxu0 %v803
        %v2299 = vpop.f32.mrf.mxu0
        %2300 = vmatmul.f32.gmra.mxu0 %v807
        %v2301 = vpop.f32.mrf.mxu0
        %2302 = vmatmul.f32.gmra.mxu0 %v811
        %v2303 = vpop.f32.mrf.mxu0
        %2304 = vmatmul.f32.gmra.mxu0 %v815
        %v2305 = vpop.f32.mrf.mxu0
        %2306 = vmatmul.f32.gmra.mxu0 %v819
        %v2307 = vpop.f32.mrf.mxu0
        %2308 = vmatmul.f32.gmra.mxu0 %v823
        %v2309 = vpop.f32.mrf.mxu0
        %2310 = vmatmul.f32.gmra.mxu0 %v827
        %v2311 = vpop.f32.mrf.mxu0
        %2312 = vmatmul.f32.gmra.mxu0 %v831
        %v2313 = vpop.f32.mrf.mxu0
        %2314 = vmatmul.f32.gmra.mxu0 %v835
        %v2315 = vpop.f32.mrf.mxu0
        %2316 = vmatmul.f32.gmra.mxu0 %v839
        %v2317 = vpop.f32.mrf.mxu0
        %2318 = vmatmul.f32.gmra.mxu0 %v843
        %v2319 = vpop.f32.mrf.mxu0
        %2320 = vdwg.mxu0
        %2321 = vmatpush.msra.mxu0 %v859
        %2322 = vmatpush.msra.mxu0 %v858
        %2323 = vmatpush.msra.mxu0 %v857
        %2324 = vmatpush.msra.mxu0 %v856
        %2325 = vmatpush.msra.mxu0 %v855
        %2326 = vmatpush.msra.mxu0 %v854
        %2327 = vmatpush.msra.mxu0 %v853
        %2328 = vmatpush.msra.mxu0 %v852
        %2329 = vmatpush.msra.mxu0 %v851
        %2330 = vmatpush.msra.mxu0 %v850
        %2331 = vmatpush.msra.mxu0 %v849
        %2332 = vmatpush.msra.mxu0 %v848
        %2333 = vmatpush.msra.mxu0 %v847
        %2334 = vmatpush.msra.mxu0 %v846
        %2335 = vmatpush.msra.mxu0 %v845
        %2336 = vmatpush.msra.mxu0 %v844
        %2337 = vmatmul.f32.gmra.mxu0 %v332
        %v2338 = vpop.f32.mrf.mxu0
        %v2339 = vadd.f32 %v2002, %v2338
        %2340 = vmatmul.f32.gmra.mxu0 %v336
        %v2341 = vpop.f32.mrf.mxu0
        %v2342 = vadd.f32 %v2005, %v2341
        %2343 = vmatmul.f32.gmra.mxu0 %v340
        %v2344 = vpop.f32.mrf.mxu0
        %v2345 = vadd.f32 %v2008, %v2344
        %2346 = vmatmul.f32.gmra.mxu0 %v344
        %v2347 = vpop.f32.mrf.mxu0
        %v2348 = vadd.f32 %v2011, %v2347
        %2349 = vmatmul.f32.gmra.mxu0 %v348
        %v2350 = vpop.f32.mrf.mxu0
        %v2351 = vadd.f32 %v2014, %v2350
        %2352 = vmatmul.f32.gmra.mxu0 %v352
        %v2353 = vpop.f32.mrf.mxu0
        %v2354 = vadd.f32 %v2017, %v2353
        %2355 = vmatmul.f32.gmra.mxu0 %v356
        %v2356 = vpop.f32.mrf.mxu0
        %v2357 = vadd.f32 %v2020, %v2356
        %2358 = vmatmul.f32.gmra.mxu0 %v360
        %v2359 = vpop.f32.mrf.mxu0
        %v2360 = vadd.f32 %v2023, %v2359
        %2361 = vmatmul.f32.gmra.mxu0 %v364
        %v2362 = vpop.f32.mrf.mxu0
        %v2363 = vadd.f32 %v2026, %v2362
        %2364 = vmatmul.f32.gmra.mxu0 %v368
        %v2365 = vpop.f32.mrf.mxu0
        %v2366 = vadd.f32 %v2029, %v2365
        %2367 = vmatmul.f32.gmra.mxu0 %v372
        %v2368 = vpop.f32.mrf.mxu0
        %v2369 = vadd.f32 %v2032, %v2368
        %2370 = vmatmul.f32.gmra.mxu0 %v376
        %v2371 = vpop.f32.mrf.mxu0
        %v2372 = vadd.f32 %v2035, %v2371
        %2373 = vmatmul.f32.gmra.mxu0 %v380
        %v2374 = vpop.f32.mrf.mxu0
        %v2375 = vadd.f32 %v2038, %v2374
        %2376 = vmatmul.f32.gmra.mxu0 %v384
        %v2377 = vpop.f32.mrf.mxu0
        %v2378 = vadd.f32 %v2041, %v2377
        %2379 = vmatmul.f32.gmra.mxu0 %v388
        %v2380 = vpop.f32.mrf.mxu0
        %v2381 = vadd.f32 %v2044, %v2380
        %2382 = vmatmul.f32.gmra.mxu0 %v392
        %v2383 = vpop.f32.mrf.mxu0
        %v2384 = vadd.f32 %v2047, %v2383
        %2385 = vmatmul.f32.gmra.mxu0 %v396
        %v2386 = vpop.f32.mrf.mxu0
        %v2387 = vadd.f32 %v2050, %v2386
        %2388 = vmatmul.f32.gmra.mxu0 %v400
        %v2389 = vpop.f32.mrf.mxu0
        %v2390 = vadd.f32 %v2053, %v2389
        %2391 = vmatmul.f32.gmra.mxu0 %v404
        %v2392 = vpop.f32.mrf.mxu0
        %v2393 = vadd.f32 %v2056, %v2392
        %2394 = vmatmul.f32.gmra.mxu0 %v408
        %v2395 = vpop.f32.mrf.mxu0
        %v2396 = vadd.f32 %v2059, %v2395
        %2397 = vmatmul.f32.gmra.mxu0 %v412
        %v2398 = vpop.f32.mrf.mxu0
        %v2399 = vadd.f32 %v2062, %v2398
        %2400 = vmatmul.f32.gmra.mxu0 %v416
        %v2401 = vpop.f32.mrf.mxu0
        %v2402 = vadd.f32 %v2065, %v2401
        %2403 = vmatmul.f32.gmra.mxu0 %v420
        %v2404 = vpop.f32.mrf.mxu0
        %v2405 = vadd.f32 %v2068, %v2404
        %2406 = vmatmul.f32.gmra.mxu0 %v424
        %v2407 = vpop.f32.mrf.mxu0
        %v2408 = vadd.f32 %v2071, %v2407
        %2409 = vmatmul.f32.gmra.mxu0 %v428
        %v2410 = vpop.f32.mrf.mxu0
        %v2411 = vadd.f32 %v2074, %v2410
        %2412 = vmatmul.f32.gmra.mxu0 %v432
        %v2413 = vpop.f32.mrf.mxu0
        %v2414 = vadd.f32 %v2077, %v2413
        %2415 = vmatmul.f32.gmra.mxu0 %v436
        %v2416 = vpop.f32.mrf.mxu0
        %v2417 = vadd.f32 %v2080, %v2416
        %2418 = vmatmul.f32.gmra.mxu0 %v440
        %v2419 = vpop.f32.mrf.mxu0
        %v2420 = vadd.f32 %v2083, %v2419
        %2421 = vmatmul.f32.gmra.mxu0 %v444
        %v2422 = vpop.f32.mrf.mxu0
        %v2423 = vadd.f32 %v2086, %v2422
        %2424 = vmatmul.f32.gmra.mxu0 %v448
        %v2425 = vpop.f32.mrf.mxu0
        %v2426 = vadd.f32 %v2089, %v2425
        %2427 = vmatmul.f32.gmra.mxu0 %v452
        %v2428 = vpop.f32.mrf.mxu0
        %v2429 = vadd.f32 %v2092, %v2428
        %2430 = vmatmul.f32.gmra.mxu0 %v456
        %v2431 = vpop.f32.mrf.mxu0
        %v2432 = vadd.f32 %v2095, %v2431
        %2433 = vmatmul.f32.gmra.mxu0 %v460
        %v2434 = vpop.f32.mrf.mxu0
        %v2435 = vadd.f32 %v2098, %v2434
        %2436 = vmatmul.f32.gmra.mxu0 %v464
        %v2437 = vpop.f32.mrf.mxu0
        %v2438 = vadd.f32 %v2101, %v2437
        %2439 = vmatmul.f32.gmra.mxu0 %v468
        %v2440 = vpop.f32.mrf.mxu0
        %v2441 = vadd.f32 %v2104, %v2440
        %2442 = vmatmul.f32.gmra.mxu0 %v472
        %v2443 = vpop.f32.mrf.mxu0
        %v2444 = vadd.f32 %v2107, %v2443
        %2445 = vmatmul.f32.gmra.mxu0 %v476
        %v2446 = vpop.f32.mrf.mxu0
        %v2447 = vadd.f32 %v2110, %v2446
        %2448 = vmatmul.f32.gmra.mxu0 %v480
        %v2449 = vpop.f32.mrf.mxu0
        %v2450 = vadd.f32 %v2113, %v2449
        %2451 = vmatmul.f32.gmra.mxu0 %v484
        %v2452 = vpop.f32.mrf.mxu0
        %v2453 = vadd.f32 %v2116, %v2452
        %2454 = vmatmul.f32.gmra.mxu0 %v488
        %v2455 = vpop.f32.mrf.mxu0
        %v2456 = vadd.f32 %v2119, %v2455
        %2457 = vmatmul.f32.gmra.mxu0 %v492
        %v2458 = vpop.f32.mrf.mxu0
        %v2459 = vadd.f32 %v2122, %v2458
        %2460 = vmatmul.f32.gmra.mxu0 %v496
        %v2461 = vpop.f32.mrf.mxu0
        %v2462 = vadd.f32 %v2125, %v2461
        %2463 = vmatmul.f32.gmra.mxu0 %v500
        %v2464 = vpop.f32.mrf.mxu0
        %v2465 = vadd.f32 %v2128, %v2464
        %2466 = vmatmul.f32.gmra.mxu0 %v504
        %v2467 = vpop.f32.mrf.mxu0
        %v2468 = vadd.f32 %v2131, %v2467
        %2469 = vmatmul.f32.gmra.mxu0 %v508
        %v2470 = vpop.f32.mrf.mxu0
        %v2471 = vadd.f32 %v2134, %v2470
        %2472 = vmatmul.f32.gmra.mxu0 %v512
        %v2473 = vpop.f32.mrf.mxu0
        %v2474 = vadd.f32 %v2137, %v2473
        %2475 = vmatmul.f32.gmra.mxu0 %v516
        %v2476 = vpop.f32.mrf.mxu0
        %v2477 = vadd.f32 %v2140, %v2476
        %2478 = vmatmul.f32.gmra.mxu0 %v520
        %v2479 = vpop.f32.mrf.mxu0
        %v2480 = vadd.f32 %v2143, %v2479
        %2481 = vmatmul.f32.gmra.mxu0 %v524
        %v2482 = vpop.f32.mrf.mxu0
        %v2483 = vadd.f32 %v2146, %v2482
        %2484 = vmatmul.f32.gmra.mxu0 %v528
        %v2485 = vpop.f32.mrf.mxu0
        %v2486 = vadd.f32 %v2149, %v2485
        %2487 = vmatmul.f32.gmra.mxu0 %v532
        %v2488 = vpop.f32.mrf.mxu0
        %v2489 = vadd.f32 %v2152, %v2488
        %2490 = vmatmul.f32.gmra.mxu0 %v536
        %v2491 = vpop.f32.mrf.mxu0
        %v2492 = vadd.f32 %v2155, %v2491
        %2493 = vmatmul.f32.gmra.mxu0 %v540
        %v2494 = vpop.f32.mrf.mxu0
        %v2495 = vadd.f32 %v2158, %v2494
        %2496 = vmatmul.f32.gmra.mxu0 %v544
        %v2497 = vpop.f32.mrf.mxu0
        %v2498 = vadd.f32 %v2161, %v2497
        %2499 = vmatmul.f32.gmra.mxu0 %v548
        %v2500 = vpop.f32.mrf.mxu0
        %v2501 = vadd.f32 %v2164, %v2500
        %2502 = vmatmul.f32.gmra.mxu0 %v552
        %v2503 = vpop.f32.mrf.mxu0
        %v2504 = vadd.f32 %v2167, %v2503
        %2505 = vmatmul.f32.gmra.mxu0 %v556
        %v2506 = vpop.f32.mrf.mxu0
        %v2507 = vadd.f32 %v2170, %v2506
        %2508 = vmatmul.f32.gmra.mxu0 %v560
        %v2509 = vpop.f32.mrf.mxu0
        %v2510 = vadd.f32 %v2173, %v2509
        %2511 = vmatmul.f32.gmra.mxu0 %v564
        %v2512 = vpop.f32.mrf.mxu0
        %v2513 = vadd.f32 %v2176, %v2512
        %2514 = vmatmul.f32.gmra.mxu0 %v568
        %v2515 = vpop.f32.mrf.mxu0
        %v2516 = vadd.f32 %v2179, %v2515
        %2517 = vmatmul.f32.gmra.mxu0 %v572
        %v2518 = vpop.f32.mrf.mxu0
        %v2519 = vadd.f32 %v2182, %v2518
        %2520 = vmatmul.f32.gmra.mxu0 %v576
        %v2521 = vpop.f32.mrf.mxu0
        %v2522 = vadd.f32 %v2185, %v2521
        %2523 = vmatmul.f32.gmra.mxu0 %v580
        %v2524 = vpop.f32.mrf.mxu0
        %v2525 = vadd.f32 %v2188, %v2524
        %2526 = vmatmul.f32.gmra.mxu0 %v584
        %v2527 = vpop.f32.mrf.mxu0
        %v2528 = vadd.f32 %v2191, %v2527
        %2529 = vmatmul.f32.gmra.mxu0 %v588
        %v2530 = vpop.f32.mrf.mxu0
        %v2531 = vadd.f32 %v2194, %v2530
        %2532 = vmatmul.f32.gmra.mxu0 %v592
        %v2533 = vpop.f32.mrf.mxu0
        %v2534 = vadd.f32 %v2197, %v2533
        %2535 = vmatmul.f32.gmra.mxu0 %v596
        %v2536 = vpop.f32.mrf.mxu0
        %v2537 = vadd.f32 %v2200, %v2536
        %2538 = vmatmul.f32.gmra.mxu0 %v600
        %v2539 = vpop.f32.mrf.mxu0
        %v2540 = vadd.f32 %v2203, %v2539
        %2541 = vmatmul.f32.gmra.mxu0 %v604
        %v2542 = vpop.f32.mrf.mxu0
        %v2543 = vadd.f32 %v2206, %v2542
        %2544 = vmatmul.f32.gmra.mxu0 %v608
        %v2545 = vpop.f32.mrf.mxu0
        %v2546 = vadd.f32 %v2209, %v2545
        %2547 = vmatmul.f32.gmra.mxu0 %v612
        %v2548 = vpop.f32.mrf.mxu0
        %v2549 = vadd.f32 %v2212, %v2548
        %2550 = vmatmul.f32.gmra.mxu0 %v616
        %v2551 = vpop.f32.mrf.mxu0
        %v2552 = vadd.f32 %v2215, %v2551
        %2553 = vmatmul.f32.gmra.mxu0 %v620
        %v2554 = vpop.f32.mrf.mxu0
        %v2555 = vadd.f32 %v2218, %v2554
        %2556 = vmatmul.f32.gmra.mxu0 %v624
        %v2557 = vpop.f32.mrf.mxu0
        %v2558 = vadd.f32 %v2221, %v2557
        %2559 = vmatmul.f32.gmra.mxu0 %v628
        %v2560 = vpop.f32.mrf.mxu0
        %v2561 = vadd.f32 %v2224, %v2560
        %2562 = vmatmul.f32.gmra.mxu0 %v632
        %v2563 = vpop.f32.mrf.mxu0
        %v2564 = vadd.f32 %v2227, %v2563
        %2565 = vmatmul.f32.gmra.mxu0 %v636
        %v2566 = vpop.f32.mrf.mxu0
        %v2567 = vadd.f32 %v2230, %v2566
        %2568 = vmatmul.f32.gmra.mxu0 %v640
        %v2569 = vpop.f32.mrf.mxu0
        %v2570 = vadd.f32 %v2233, %v2569
        %2571 = vmatmul.f32.gmra.mxu0 %v644
        %v2572 = vpop.f32.mrf.mxu0
        %v2573 = vadd.f32 %v2236, %v2572
        %2574 = vmatmul.f32.gmra.mxu0 %v648
        %v2575 = vpop.f32.mrf.mxu0
        %v2576 = vadd.f32 %v2239, %v2575
        %2577 = vmatmul.f32.gmra.mxu0 %v652
        %v2578 = vpop.f32.mrf.mxu0
        %v2579 = vadd.f32 %v2242, %v2578
        %2580 = vmatmul.f32.gmra.mxu0 %v656
        %v2581 = vpop.f32.mrf.mxu0
        %v2582 = vadd.f32 %v2245, %v2581
        %2583 = vmatmul.f32.gmra.mxu0 %v660
        %v2584 = vpop.f32.mrf.mxu0
        %v2585 = vadd.f32 %v2248, %v2584
        %2586 = vmatmul.f32.gmra.mxu0 %v664
        %v2587 = vpop.f32.mrf.mxu0
        %v2588 = vadd.f32 %v2251, %v2587
        %2589 = vmatmul.f32.gmra.mxu0 %v668
        %v2590 = vpop.f32.mrf.mxu0
        %v2591 = vadd.f32 %v2254, %v2590
        %2592 = vmatmul.f32.gmra.mxu0 %v672
        %v2593 = vpop.f32.mrf.mxu0
        %v2594 = vadd.f32 %v2257, %v2593
        %2595 = vmatmul.f32.gmra.mxu0 %v676
        %v2596 = vpop.f32.mrf.mxu0
        %v2597 = vadd.f32 %v2260, %v2596
        %2598 = vmatmul.f32.gmra.mxu0 %v680
        %v2599 = vpop.f32.mrf.mxu0
        %v2600 = vadd.f32 %v2263, %v2599
        %2601 = vmatmul.f32.gmra.mxu0 %v684
        %v2602 = vpop.f32.mrf.mxu0
        %v2603 = vadd.f32 %v2266, %v2602
        %2604 = vmatmul.f32.gmra.mxu0 %v688
        %v2605 = vpop.f32.mrf.mxu0
        %v2606 = vadd.f32 %v2269, %v2605
        %2607 = vmatmul.f32.gmra.mxu0 %v692
        %v2608 = vpop.f32.mrf.mxu0
        %v2609 = vadd.f32 %v2272, %v2608
        %2610 = vmatmul.f32.gmra.mxu0 %v696
        %v2611 = vpop.f32.mrf.mxu0
        %v2612 = vadd.f32 %v2275, %v2611
        %2613 = vmatmul.f32.gmra.mxu0 %v700
        %v2614 = vpop.f32.mrf.mxu0
        %v2615 = vadd.f32 %v2278, %v2614
        %2616 = vmatmul.f32.gmra.mxu0 %v704
        %v2617 = vpop.f32.mrf.mxu0
        %v2618 = vadd.f32 %v2281, %v2617
        %2619 = vmatmul.f32.gmra.mxu0 %v708
        %v2620 = vpop.f32.mrf.mxu0
        %v2621 = vadd.f32 %v2284, %v2620
        %2622 = vmatmul.f32.gmra.mxu0 %v712
        %v2623 = vpop.f32.mrf.mxu0
        %v2624 = vadd.f32 %v2287, %v2623
        %2625 = vmatmul.f32.gmra.mxu0 %v716
        %v2626 = vpop.f32.mrf.mxu0
        %2627 = vmatmul.f32.gmra.mxu0 %v720
        %v2628 = vpop.f32.mrf.mxu0
        %2629 = vmatmul.f32.gmra.mxu0 %v724
        %v2630 = vpop.f32.mrf.mxu0
        %2631 = vmatmul.f32.gmra.mxu0 %v728
        %v2632 = vpop.f32.mrf.mxu0
        %2633 = vmatmul.f32.gmra.mxu0 %v732
        %v2634 = vpop.f32.mrf.mxu0
        %2635 = vmatmul.f32.gmra.mxu0 %v736
        %v2636 = vpop.f32.mrf.mxu0
        %2637 = vmatmul.f32.gmra.mxu0 %v740
        %v2638 = vpop.f32.mrf.mxu0
        %2639 = vmatmul.f32.gmra.mxu0 %v744
        %v2640 = vpop.f32.mrf.mxu0
        %2641 = vmatmul.f32.gmra.mxu0 %v748
        %v2642 = vpop.f32.mrf.mxu0
        %2643 = vmatmul.f32.gmra.mxu0 %v752
        %v2644 = vpop.f32.mrf.mxu0
        %2645 = vmatmul.f32.gmra.mxu0 %v756
        %v2646 = vpop.f32.mrf.mxu0
        %2647 = vmatmul.f32.gmra.mxu0 %v760
        %v2648 = vpop.f32.mrf.mxu0
        %2649 = vmatmul.f32.gmra.mxu0 %v764
        %v2650 = vpop.f32.mrf.mxu0
        %2651 = vmatmul.f32.gmra.mxu0 %v768
        %v2652 = vpop.f32.mrf.mxu0
        %2653 = vmatmul.f32.gmra.mxu0 %v772
        %v2654 = vpop.f32.mrf.mxu0
        %2655 = vmatmul.f32.gmra.mxu0 %v776
        %v2656 = vpop.f32.mrf.mxu0
        %2657 = vdwg.mxu0
        %2658 = vmatpush.msra.mxu0 %v875
        %2659 = vmatpush.msra.mxu0 %v874
        %2660 = vmatpush.msra.mxu0 %v873
        %2661 = vmatpush.msra.mxu0 %v872
        %2662 = vmatpush.msra.mxu0 %v871
        %2663 = vmatpush.msra.mxu0 %v870
        %2664 = vmatpush.msra.mxu0 %v869
        %2665 = vmatpush.msra.mxu0 %v868
        %2666 = vmatpush.msra.mxu0 %v867
        %2667 = vmatpush.msra.mxu0 %v866
        %2668 = vmatpush.msra.mxu0 %v865
        %2669 = vmatpush.msra.mxu0 %v864
        %2670 = vmatpush.msra.mxu0 %v863
        %2671 = vmatpush.msra.mxu0 %v862
        %2672 = vmatpush.msra.mxu0 %v861
        %2673 = vmatpush.msra.mxu0 %v860
        %2674 = vmatmul.f32.gmra.mxu0 %v333
        %v2675 = vpop.f32.mrf.mxu0
        %v2676 = vadd.f32 %v2339, %v2675
        %2677 = vmatmul.f32.gmra.mxu0 %v337
        %v2678 = vpop.f32.mrf.mxu0
        %v2679 = vadd.f32 %v2342, %v2678
        %2680 = vmatmul.f32.gmra.mxu0 %v341
        %v2681 = vpop.f32.mrf.mxu0
        %v2682 = vadd.f32 %v2345, %v2681
        %2683 = vmatmul.f32.gmra.mxu0 %v345
        %v2684 = vpop.f32.mrf.mxu0
        %v2685 = vadd.f32 %v2348, %v2684
        %2686 = vmatmul.f32.gmra.mxu0 %v349
        %v2687 = vpop.f32.mrf.mxu0
        %v2688 = vadd.f32 %v2351, %v2687
        %2689 = vmatmul.f32.gmra.mxu0 %v353
        %v2690 = vpop.f32.mrf.mxu0
        %v2691 = vadd.f32 %v2354, %v2690
        %2692 = vmatmul.f32.gmra.mxu0 %v357
        %v2693 = vpop.f32.mrf.mxu0
        %v2694 = vadd.f32 %v2357, %v2693
        %2695 = vmatmul.f32.gmra.mxu0 %v361
        %v2696 = vpop.f32.mrf.mxu0
        %v2697 = vadd.f32 %v2360, %v2696
        %2698 = vmatmul.f32.gmra.mxu0 %v365
        %v2699 = vpop.f32.mrf.mxu0
        %v2700 = vadd.f32 %v2363, %v2699
        %2701 = vmatmul.f32.gmra.mxu0 %v369
        %v2702 = vpop.f32.mrf.mxu0
        %v2703 = vadd.f32 %v2366, %v2702
        %2704 = vmatmul.f32.gmra.mxu0 %v373
        %v2705 = vpop.f32.mrf.mxu0
        %v2706 = vadd.f32 %v2369, %v2705
        %2707 = vmatmul.f32.gmra.mxu0 %v377
        %v2708 = vpop.f32.mrf.mxu0
        %v2709 = vadd.f32 %v2372, %v2708
        %2710 = vmatmul.f32.gmra.mxu0 %v381
        %v2711 = vpop.f32.mrf.mxu0
        %v2712 = vadd.f32 %v2375, %v2711
        %2713 = vmatmul.f32.gmra.mxu0 %v385
        %v2714 = vpop.f32.mrf.mxu0
        %v2715 = vadd.f32 %v2378, %v2714
        %2716 = vmatmul.f32.gmra.mxu0 %v389
        %v2717 = vpop.f32.mrf.mxu0
        %v2718 = vadd.f32 %v2381, %v2717
        %2719 = vmatmul.f32.gmra.mxu0 %v393
        %v2720 = vpop.f32.mrf.mxu0
        %v2721 = vadd.f32 %v2384, %v2720
        %2722 = vmatmul.f32.gmra.mxu0 %v397
        %v2723 = vpop.f32.mrf.mxu0
        %v2724 = vadd.f32 %v2387, %v2723
        %2725 = vmatmul.f32.gmra.mxu0 %v401
        %v2726 = vpop.f32.mrf.mxu0
        %v2727 = vadd.f32 %v2390, %v2726
        %2728 = vmatmul.f32.gmra.mxu0 %v405
        %v2729 = vpop.f32.mrf.mxu0
        %v2730 = vadd.f32 %v2393, %v2729
        %2731 = vmatmul.f32.gmra.mxu0 %v409
        %v2732 = vpop.f32.mrf.mxu0
        %v2733 = vadd.f32 %v2396, %v2732
        %2734 = vmatmul.f32.gmra.mxu0 %v413
        %v2735 = vpop.f32.mrf.mxu0
        %v2736 = vadd.f32 %v2399, %v2735
        %2737 = vmatmul.f32.gmra.mxu0 %v417
        %v2738 = vpop.f32.mrf.mxu0
        %v2739 = vadd.f32 %v2402, %v2738
        %2740 = vmatmul.f32.gmra.mxu0 %v421
        %v2741 = vpop.f32.mrf.mxu0
        %v2742 = vadd.f32 %v2405, %v2741
        %2743 = vmatmul.f32.gmra.mxu0 %v425
        %v2744 = vpop.f32.mrf.mxu0
        %v2745 = vadd.f32 %v2408, %v2744
        %2746 = vmatmul.f32.gmra.mxu0 %v429
        %v2747 = vpop.f32.mrf.mxu0
        %v2748 = vadd.f32 %v2411, %v2747
        %2749 = vmatmul.f32.gmra.mxu0 %v433
        %v2750 = vpop.f32.mrf.mxu0
        %v2751 = vadd.f32 %v2414, %v2750
        %2752 = vmatmul.f32.gmra.mxu0 %v437
        %v2753 = vpop.f32.mrf.mxu0
        %v2754 = vadd.f32 %v2417, %v2753
        %2755 = vmatmul.f32.gmra.mxu0 %v441
        %v2756 = vpop.f32.mrf.mxu0
        %v2757 = vadd.f32 %v2420, %v2756
        %2758 = vmatmul.f32.gmra.mxu0 %v445
        %v2759 = vpop.f32.mrf.mxu0
        %v2760 = vadd.f32 %v2423, %v2759
        %2761 = vmatmul.f32.gmra.mxu0 %v449
        %v2762 = vpop.f32.mrf.mxu0
        %v2763 = vadd.f32 %v2426, %v2762
        %2764 = vmatmul.f32.gmra.mxu0 %v453
        %v2765 = vpop.f32.mrf.mxu0
        %v2766 = vadd.f32 %v2429, %v2765
        %2767 = vmatmul.f32.gmra.mxu0 %v457
        %v2768 = vpop.f32.mrf.mxu0
        %v2769 = vadd.f32 %v2432, %v2768
        %2770 = vmatmul.f32.gmra.mxu0 %v461
        %v2771 = vpop.f32.mrf.mxu0
        %v2772 = vadd.f32 %v2435, %v2771
        %2773 = vmatmul.f32.gmra.mxu0 %v465
        %v2774 = vpop.f32.mrf.mxu0
        %v2775 = vadd.f32 %v2438, %v2774
        %2776 = vmatmul.f32.gmra.mxu0 %v469
        %v2777 = vpop.f32.mrf.mxu0
        %v2778 = vadd.f32 %v2441, %v2777
        %2779 = vmatmul.f32.gmra.mxu0 %v473
        %v2780 = vpop.f32.mrf.mxu0
        %v2781 = vadd.f32 %v2444, %v2780
        %2782 = vmatmul.f32.gmra.mxu0 %v477
        %v2783 = vpop.f32.mrf.mxu0
        %v2784 = vadd.f32 %v2447, %v2783
        %2785 = vmatmul.f32.gmra.mxu0 %v481
        %v2786 = vpop.f32.mrf.mxu0
        %v2787 = vadd.f32 %v2450, %v2786
        %2788 = vmatmul.f32.gmra.mxu0 %v485
        %v2789 = vpop.f32.mrf.mxu0
        %v2790 = vadd.f32 %v2453, %v2789
        %2791 = vmatmul.f32.gmra.mxu0 %v489
        %v2792 = vpop.f32.mrf.mxu0
        %v2793 = vadd.f32 %v2456, %v2792
        %2794 = vmatmul.f32.gmra.mxu0 %v493
        %v2795 = vpop.f32.mrf.mxu0
        %v2796 = vadd.f32 %v2459, %v2795
        %2797 = vmatmul.f32.gmra.mxu0 %v497
        %v2798 = vpop.f32.mrf.mxu0
        %v2799 = vadd.f32 %v2462, %v2798
        %2800 = vmatmul.f32.gmra.mxu0 %v501
        %v2801 = vpop.f32.mrf.mxu0
        %v2802 = vadd.f32 %v2465, %v2801
        %2803 = vmatmul.f32.gmra.mxu0 %v505
        %v2804 = vpop.f32.mrf.mxu0
        %v2805 = vadd.f32 %v2468, %v2804
        %2806 = vmatmul.f32.gmra.mxu0 %v509
        %v2807 = vpop.f32.mrf.mxu0
        %v2808 = vadd.f32 %v2471, %v2807
        %2809 = vmatmul.f32.gmra.mxu0 %v513
        %v2810 = vpop.f32.mrf.mxu0
        %v2811 = vadd.f32 %v2474, %v2810
        %2812 = vmatmul.f32.gmra.mxu0 %v517
        %v2813 = vpop.f32.mrf.mxu0
        %v2814 = vadd.f32 %v2477, %v2813
        %2815 = vmatmul.f32.gmra.mxu0 %v521
        %v2816 = vpop.f32.mrf.mxu0
        %v2817 = vadd.f32 %v2480, %v2816
        %2818 = vmatmul.f32.gmra.mxu0 %v525
        %v2819 = vpop.f32.mrf.mxu0
        %v2820 = vadd.f32 %v2483, %v2819
        %2821 = vmatmul.f32.gmra.mxu0 %v529
        %v2822 = vpop.f32.mrf.mxu0
        %v2823 = vadd.f32 %v2486, %v2822
        %2824 = vmatmul.f32.gmra.mxu0 %v533
        %v2825 = vpop.f32.mrf.mxu0
        %v2826 = vadd.f32 %v2489, %v2825
        %2827 = vmatmul.f32.gmra.mxu0 %v537
        %v2828 = vpop.f32.mrf.mxu0
        %v2829 = vadd.f32 %v2492, %v2828
        %2830 = vmatmul.f32.gmra.mxu0 %v541
        %v2831 = vpop.f32.mrf.mxu0
        %v2832 = vadd.f32 %v2495, %v2831
        %2833 = vmatmul.f32.gmra.mxu0 %v545
        %v2834 = vpop.f32.mrf.mxu0
        %v2835 = vadd.f32 %v2498, %v2834
        %2836 = vmatmul.f32.gmra.mxu0 %v549
        %v2837 = vpop.f32.mrf.mxu0
        %v2838 = vadd.f32 %v2501, %v2837
        %2839 = vmatmul.f32.gmra.mxu0 %v553
        %v2840 = vpop.f32.mrf.mxu0
        %v2841 = vadd.f32 %v2504, %v2840
        %2842 = vmatmul.f32.gmra.mxu0 %v557
        %v2843 = vpop.f32.mrf.mxu0
        %v2844 = vadd.f32 %v2507, %v2843
        %2845 = vmatmul.f32.gmra.mxu0 %v561
        %v2846 = vpop.f32.mrf.mxu0
        %v2847 = vadd.f32 %v2510, %v2846
        %2848 = vmatmul.f32.gmra.mxu0 %v565
        %v2849 = vpop.f32.mrf.mxu0
        %v2850 = vadd.f32 %v2513, %v2849
        %2851 = vmatmul.f32.gmra.mxu0 %v569
        %v2852 = vpop.f32.mrf.mxu0
        %v2853 = vadd.f32 %v2516, %v2852
        %2854 = vmatmul.f32.gmra.mxu0 %v573
        %v2855 = vpop.f32.mrf.mxu0
        %v2856 = vadd.f32 %v2519, %v2855
        %2857 = vmatmul.f32.gmra.mxu0 %v577
        %v2858 = vpop.f32.mrf.mxu0
        %v2859 = vadd.f32 %v2522, %v2858
        %2860 = vmatmul.f32.gmra.mxu0 %v581
        %v2861 = vpop.f32.mrf.mxu0
        %v2862 = vadd.f32 %v2525, %v2861
        %2863 = vmatmul.f32.gmra.mxu0 %v585
        %v2864 = vpop.f32.mrf.mxu0
        %v2865 = vadd.f32 %v2528, %v2864
        %2866 = vmatmul.f32.gmra.mxu0 %v589
        %v2867 = vpop.f32.mrf.mxu0
        %v2868 = vadd.f32 %v2531, %v2867
        %2869 = vmatmul.f32.gmra.mxu0 %v593
        %v2870 = vpop.f32.mrf.mxu0
        %v2871 = vadd.f32 %v2534, %v2870
        %2872 = vmatmul.f32.gmra.mxu0 %v597
        %v2873 = vpop.f32.mrf.mxu0
        %v2874 = vadd.f32 %v2537, %v2873
        %2875 = vmatmul.f32.gmra.mxu0 %v601
        %v2876 = vpop.f32.mrf.mxu0
        %v2877 = vadd.f32 %v2540, %v2876
        %2878 = vmatmul.f32.gmra.mxu0 %v605
        %v2879 = vpop.f32.mrf.mxu0
        %v2880 = vadd.f32 %v2543, %v2879
        %2881 = vmatmul.f32.gmra.mxu0 %v609
        %v2882 = vpop.f32.mrf.mxu0
        %v2883 = vadd.f32 %v2546, %v2882
        %2884 = vmatmul.f32.gmra.mxu0 %v613
        %v2885 = vpop.f32.mrf.mxu0
        %v2886 = vadd.f32 %v2549, %v2885
        %2887 = vmatmul.f32.gmra.mxu0 %v617
        %v2888 = vpop.f32.mrf.mxu0
        %v2889 = vadd.f32 %v2552, %v2888
        %2890 = vmatmul.f32.gmra.mxu0 %v621
        %v2891 = vpop.f32.mrf.mxu0
        %v2892 = vadd.f32 %v2555, %v2891
        %2893 = vmatmul.f32.gmra.mxu0 %v625
        %v2894 = vpop.f32.mrf.mxu0
        %v2895 = vadd.f32 %v2558, %v2894
        %2896 = vmatmul.f32.gmra.mxu0 %v629
        %v2897 = vpop.f32.mrf.mxu0
        %v2898 = vadd.f32 %v2561, %v2897
        %2899 = vmatmul.f32.gmra.mxu0 %v633
        %v2900 = vpop.f32.mrf.mxu0
        %v2901 = vadd.f32 %v2564, %v2900
        %2902 = vmatmul.f32.gmra.mxu0 %v637
        %v2903 = vpop.f32.mrf.mxu0
        %v2904 = vadd.f32 %v2567, %v2903
        %2905 = vmatmul.f32.gmra.mxu0 %v641
        %v2906 = vpop.f32.mrf.mxu0
        %v2907 = vadd.f32 %v2570, %v2906
        %2908 = vmatmul.f32.gmra.mxu0 %v645
        %v2909 = vpop.f32.mrf.mxu0
        %v2910 = vadd.f32 %v2573, %v2909
        %2911 = vmatmul.f32.gmra.mxu0 %v649
        %v2912 = vpop.f32.mrf.mxu0
        %v2913 = vadd.f32 %v2576, %v2912
        %2914 = vmatmul.f32.gmra.mxu0 %v653
        %v2915 = vpop.f32.mrf.mxu0
        %v2916 = vadd.f32 %v2579, %v2915
        %2917 = vmatmul.f32.gmra.mxu0 %v657
        %v2918 = vpop.f32.mrf.mxu0
        %v2919 = vadd.f32 %v2582, %v2918
        %2920 = vmatmul.f32.gmra.mxu0 %v661
        %v2921 = vpop.f32.mrf.mxu0
        %v2922 = vadd.f32 %v2585, %v2921
        %2923 = vmatmul.f32.gmra.mxu0 %v665
        %v2924 = vpop.f32.mrf.mxu0
        %v2925 = vadd.f32 %v2588, %v2924
        %2926 = vmatmul.f32.gmra.mxu0 %v669
        %v2927 = vpop.f32.mrf.mxu0
        %v2928 = vadd.f32 %v2591, %v2927
        %2929 = vmatmul.f32.gmra.mxu0 %v673
        %v2930 = vpop.f32.mrf.mxu0
        %v2931 = vadd.f32 %v2594, %v2930
        %2932 = vmatmul.f32.gmra.mxu0 %v677
        %v2933 = vpop.f32.mrf.mxu0
        %v2934 = vadd.f32 %v2597, %v2933
        %2935 = vmatmul.f32.gmra.mxu0 %v681
        %v2936 = vpop.f32.mrf.mxu0
        %v2937 = vadd.f32 %v2600, %v2936
        %2938 = vmatmul.f32.gmra.mxu0 %v685
        %v2939 = vpop.f32.mrf.mxu0
        %v2940 = vadd.f32 %v2603, %v2939
        %2941 = vmatmul.f32.gmra.mxu0 %v689
        %v2942 = vpop.f32.mrf.mxu0
        %v2943 = vadd.f32 %v2606, %v2942
        %2944 = vmatmul.f32.gmra.mxu0 %v693
        %v2945 = vpop.f32.mrf.mxu0
        %v2946 = vadd.f32 %v2609, %v2945
        %2947 = vmatmul.f32.gmra.mxu0 %v697
        %v2948 = vpop.f32.mrf.mxu0
        %v2949 = vadd.f32 %v2612, %v2948
        %2950 = vmatmul.f32.gmra.mxu0 %v701
        %v2951 = vpop.f32.mrf.mxu0
        %v2952 = vadd.f32 %v2615, %v2951
        %2953 = vmatmul.f32.gmra.mxu0 %v705
        %v2954 = vpop.f32.mrf.mxu0
        %v2955 = vadd.f32 %v2618, %v2954
        %2956 = vmatmul.f32.gmra.mxu0 %v709
        %v2957 = vpop.f32.mrf.mxu0
        %v2958 = vadd.f32 %v2621, %v2957
        %2959 = vmatmul.f32.gmra.mxu0 %v713
        %v2960 = vpop.f32.mrf.mxu0
        %v2961 = vadd.f32 %v2624, %v2960
        %2962 = vmatmul.f32.gmra.mxu0 %v717
        %v2963 = vpop.f32.mrf.mxu0
        %2964 = vmatmul.f32.gmra.mxu0 %v721
        %v2965 = vpop.f32.mrf.mxu0
        %2966 = vmatmul.f32.gmra.mxu0 %v725
        %v2967 = vpop.f32.mrf.mxu0
        %2968 = vmatmul.f32.gmra.mxu0 %v729
        %v2969 = vpop.f32.mrf.mxu0
        %2970 = vmatmul.f32.gmra.mxu0 %v733
        %v2971 = vpop.f32.mrf.mxu0
        %2972 = vmatmul.f32.gmra.mxu0 %v737
        %v2973 = vpop.f32.mrf.mxu0
        %2974 = vmatmul.f32.gmra.mxu0 %v741
        %v2975 = vpop.f32.mrf.mxu0
        %2976 = vmatmul.f32.gmra.mxu0 %v745
        %v2977 = vpop.f32.mrf.mxu0
        %2978 = vmatmul.f32.gmra.mxu0 %v749
        %v2979 = vpop.f32.mrf.mxu0
        %2980 = vmatmul.f32.gmra.mxu0 %v753
        %v2981 = vpop.f32.mrf.mxu0
        %2982 = vmatmul.f32.gmra.mxu0 %v757
        %v2983 = vpop.f32.mrf.mxu0
        %2984 = vmatmul.f32.gmra.mxu0 %v761
        %v2985 = vpop.f32.mrf.mxu0
        %2986 = vmatmul.f32.gmra.mxu0 %v765
        %v2987 = vpop.f32.mrf.mxu0
        %2988 = vmatmul.f32.gmra.mxu0 %v769
        %v2989 = vpop.f32.mrf.mxu0
        %2990 = vmatmul.f32.gmra.mxu0 %v773
        %v2991 = vpop.f32.mrf.mxu0
        %2992 = vmatmul.f32.gmra.mxu0 %v777
        %v2993 = vpop.f32.mrf.mxu0
        %2994 = vdwg.mxu0
        %2995 = vmatpush.msra.mxu0 %v891
        %2996 = vmatpush.msra.mxu0 %v890
        %2997 = vmatpush.msra.mxu0 %v889
        %2998 = vmatpush.msra.mxu0 %v888
        %2999 = vmatpush.msra.mxu0 %v887
        %3000 = vmatpush.msra.mxu0 %v886
        %3001 = vmatpush.msra.mxu0 %v885
        %3002 = vmatpush.msra.mxu0 %v884
        %3003 = vmatpush.msra.mxu0 %v883
        %3004 = vmatpush.msra.mxu0 %v882
        %3005 = vmatpush.msra.mxu0 %v881
        %3006 = vmatpush.msra.mxu0 %v880
        %3007 = vmatpush.msra.mxu0 %v879
        %3008 = vmatpush.msra.mxu0 %v878
        %3009 = vmatpush.msra.mxu0 %v877
        %3010 = vmatpush.msra.mxu0 %v876
        %3011 = vmatmul.f32.gmra.mxu0 %v334
        %v3012 = vpop.f32.mrf.mxu0
        %v3013 = vadd.f32 %v2676, %v3012
        %3014 = vmatmul.f32.gmra.mxu0 %v338
        %v3015 = vpop.f32.mrf.mxu0
        %v3016 = vadd.f32 %v2679, %v3015
        %3017 = vmatmul.f32.gmra.mxu0 %v342
        %v3018 = vpop.f32.mrf.mxu0
        %v3019 = vadd.f32 %v2682, %v3018
        %3020 = vmatmul.f32.gmra.mxu0 %v346
        %v3021 = vpop.f32.mrf.mxu0
        %v3022 = vadd.f32 %v2685, %v3021
        %3023 = vmatmul.f32.gmra.mxu0 %v350
        %v3024 = vpop.f32.mrf.mxu0
        %v3025 = vadd.f32 %v2688, %v3024
        %3026 = vmatmul.f32.gmra.mxu0 %v354
        %v3027 = vpop.f32.mrf.mxu0
        %v3028 = vadd.f32 %v2691, %v3027
        %3029 = vmatmul.f32.gmra.mxu0 %v358
        %v3030 = vpop.f32.mrf.mxu0
        %v3031 = vadd.f32 %v2694, %v3030
        %3032 = vmatmul.f32.gmra.mxu0 %v362
        %v3033 = vpop.f32.mrf.mxu0
        %v3034 = vadd.f32 %v2697, %v3033
        %3035 = vmatmul.f32.gmra.mxu0 %v366
        %v3036 = vpop.f32.mrf.mxu0
        %v3037 = vadd.f32 %v2700, %v3036
        %3038 = vmatmul.f32.gmra.mxu0 %v370
        %v3039 = vpop.f32.mrf.mxu0
        %v3040 = vadd.f32 %v2703, %v3039
        %3041 = vmatmul.f32.gmra.mxu0 %v374
        %v3042 = vpop.f32.mrf.mxu0
        %v3043 = vadd.f32 %v2706, %v3042
        %3044 = vmatmul.f32.gmra.mxu0 %v378
        %v3045 = vpop.f32.mrf.mxu0
        %v3046 = vadd.f32 %v2709, %v3045
        %3047 = vmatmul.f32.gmra.mxu0 %v382
        %v3048 = vpop.f32.mrf.mxu0
        %v3049 = vadd.f32 %v2712, %v3048
        %3050 = vmatmul.f32.gmra.mxu0 %v386
        %v3051 = vpop.f32.mrf.mxu0
        %v3052 = vadd.f32 %v2715, %v3051
        %3053 = vmatmul.f32.gmra.mxu0 %v390
        %v3054 = vpop.f32.mrf.mxu0
        %v3055 = vadd.f32 %v2718, %v3054
        %3056 = vmatmul.f32.gmra.mxu0 %v394
        %v3057 = vpop.f32.mrf.mxu0
        %v3058 = vadd.f32 %v2721, %v3057
        %3059 = vmatmul.f32.gmra.mxu0 %v398
        %v3060 = vpop.f32.mrf.mxu0
        %v3061 = vadd.f32 %v2724, %v3060
        %3062 = vmatmul.f32.gmra.mxu0 %v402
        %v3063 = vpop.f32.mrf.mxu0
        %v3064 = vadd.f32 %v2727, %v3063
        %3065 = vmatmul.f32.gmra.mxu0 %v406
        %v3066 = vpop.f32.mrf.mxu0
        %v3067 = vadd.f32 %v2730, %v3066
        %3068 = vmatmul.f32.gmra.mxu0 %v410
        %v3069 = vpop.f32.mrf.mxu0
        %v3070 = vadd.f32 %v2733, %v3069
        %3071 = vmatmul.f32.gmra.mxu0 %v414
        %v3072 = vpop.f32.mrf.mxu0
        %v3073 = vadd.f32 %v2736, %v3072
        %3074 = vmatmul.f32.gmra.mxu0 %v418
        %v3075 = vpop.f32.mrf.mxu0
        %v3076 = vadd.f32 %v2739, %v3075
        %3077 = vmatmul.f32.gmra.mxu0 %v422
        %v3078 = vpop.f32.mrf.mxu0
        %v3079 = vadd.f32 %v2742, %v3078
        %3080 = vmatmul.f32.gmra.mxu0 %v426
        %v3081 = vpop.f32.mrf.mxu0
        %v3082 = vadd.f32 %v2745, %v3081
        %3083 = vmatmul.f32.gmra.mxu0 %v430
        %v3084 = vpop.f32.mrf.mxu0
        %v3085 = vadd.f32 %v2748, %v3084
        %3086 = vmatmul.f32.gmra.mxu0 %v434
        %v3087 = vpop.f32.mrf.mxu0
        %v3088 = vadd.f32 %v2751, %v3087
        %3089 = vmatmul.f32.gmra.mxu0 %v438
        %v3090 = vpop.f32.mrf.mxu0
        %v3091 = vadd.f32 %v2754, %v3090
        %3092 = vmatmul.f32.gmra.mxu0 %v442
        %v3093 = vpop.f32.mrf.mxu0
        %v3094 = vadd.f32 %v2757, %v3093
        %3095 = vmatmul.f32.gmra.mxu0 %v446
        %v3096 = vpop.f32.mrf.mxu0
        %v3097 = vadd.f32 %v2760, %v3096
        %3098 = vmatmul.f32.gmra.mxu0 %v450
        %v3099 = vpop.f32.mrf.mxu0
        %v3100 = vadd.f32 %v2763, %v3099
        %3101 = vmatmul.f32.gmra.mxu0 %v454
        %v3102 = vpop.f32.mrf.mxu0
        %v3103 = vadd.f32 %v2766, %v3102
        %3104 = vmatmul.f32.gmra.mxu0 %v458
        %v3105 = vpop.f32.mrf.mxu0
        %v3106 = vadd.f32 %v2769, %v3105
        %3107 = vmatmul.f32.gmra.mxu0 %v462
        %v3108 = vpop.f32.mrf.mxu0
        %v3109 = vadd.f32 %v2772, %v3108
        %3110 = vmatmul.f32.gmra.mxu0 %v466
        %v3111 = vpop.f32.mrf.mxu0
        %v3112 = vadd.f32 %v2775, %v3111
        %3113 = vmatmul.f32.gmra.mxu0 %v470
        %v3114 = vpop.f32.mrf.mxu0
        %v3115 = vadd.f32 %v2778, %v3114
        %3116 = vmatmul.f32.gmra.mxu0 %v474
        %v3117 = vpop.f32.mrf.mxu0
        %v3118 = vadd.f32 %v2781, %v3117
        %3119 = vmatmul.f32.gmra.mxu0 %v478
        %v3120 = vpop.f32.mrf.mxu0
        %v3121 = vadd.f32 %v2784, %v3120
        %3122 = vmatmul.f32.gmra.mxu0 %v482
        %v3123 = vpop.f32.mrf.mxu0
        %v3124 = vadd.f32 %v2787, %v3123
        %3125 = vmatmul.f32.gmra.mxu0 %v486
        %v3126 = vpop.f32.mrf.mxu0
        %v3127 = vadd.f32 %v2790, %v3126
        %3128 = vmatmul.f32.gmra.mxu0 %v490
        %v3129 = vpop.f32.mrf.mxu0
        %v3130 = vadd.f32 %v2793, %v3129
        %3131 = vmatmul.f32.gmra.mxu0 %v494
        %v3132 = vpop.f32.mrf.mxu0
        %v3133 = vadd.f32 %v2796, %v3132
        %3134 = vmatmul.f32.gmra.mxu0 %v498
        %v3135 = vpop.f32.mrf.mxu0
        %v3136 = vadd.f32 %v2799, %v3135
        %3137 = vmatmul.f32.gmra.mxu0 %v502
        %v3138 = vpop.f32.mrf.mxu0
        %v3139 = vadd.f32 %v2802, %v3138
        %3140 = vmatmul.f32.gmra.mxu0 %v506
        %v3141 = vpop.f32.mrf.mxu0
        %v3142 = vadd.f32 %v2805, %v3141
        %3143 = vmatmul.f32.gmra.mxu0 %v510
        %v3144 = vpop.f32.mrf.mxu0
        %v3145 = vadd.f32 %v2808, %v3144
        %3146 = vmatmul.f32.gmra.mxu0 %v514
        %v3147 = vpop.f32.mrf.mxu0
        %v3148 = vadd.f32 %v2811, %v3147
        %3149 = vmatmul.f32.gmra.mxu0 %v518
        %v3150 = vpop.f32.mrf.mxu0
        %v3151 = vadd.f32 %v2814, %v3150
        %3152 = vmatmul.f32.gmra.mxu0 %v522
        %v3153 = vpop.f32.mrf.mxu0
        %v3154 = vadd.f32 %v2817, %v3153
        %3155 = vmatmul.f32.gmra.mxu0 %v526
        %v3156 = vpop.f32.mrf.mxu0
        %v3157 = vadd.f32 %v2820, %v3156
        %3158 = vmatmul.f32.gmra.mxu0 %v530
        %v3159 = vpop.f32.mrf.mxu0
        %v3160 = vadd.f32 %v2823, %v3159
        %3161 = vmatmul.f32.gmra.mxu0 %v534
        %v3162 = vpop.f32.mrf.mxu0
        %v3163 = vadd.f32 %v2826, %v3162
        %3164 = vmatmul.f32.gmra.mxu0 %v538
        %v3165 = vpop.f32.mrf.mxu0
        %v3166 = vadd.f32 %v2829, %v3165
        %3167 = vmatmul.f32.gmra.mxu0 %v542
        %v3168 = vpop.f32.mrf.mxu0
        %v3169 = vadd.f32 %v2832, %v3168
        %3170 = vmatmul.f32.gmra.mxu0 %v546
        %v3171 = vpop.f32.mrf.mxu0
        %v3172 = vadd.f32 %v2835, %v3171
        %3173 = vmatmul.f32.gmra.mxu0 %v550
        %v3174 = vpop.f32.mrf.mxu0
        %v3175 = vadd.f32 %v2838, %v3174
        %3176 = vmatmul.f32.gmra.mxu0 %v554
        %v3177 = vpop.f32.mrf.mxu0
        %v3178 = vadd.f32 %v2841, %v3177
        %3179 = vmatmul.f32.gmra.mxu0 %v558
        %v3180 = vpop.f32.mrf.mxu0
        %v3181 = vadd.f32 %v2844, %v3180
        %3182 = vmatmul.f32.gmra.mxu0 %v562
        %v3183 = vpop.f32.mrf.mxu0
        %v3184 = vadd.f32 %v2847, %v3183
        %3185 = vmatmul.f32.gmra.mxu0 %v566
        %v3186 = vpop.f32.mrf.mxu0
        %v3187 = vadd.f32 %v2850, %v3186
        %3188 = vmatmul.f32.gmra.mxu0 %v570
        %v3189 = vpop.f32.mrf.mxu0
        %v3190 = vadd.f32 %v2853, %v3189
        %3191 = vmatmul.f32.gmra.mxu0 %v574
        %v3192 = vpop.f32.mrf.mxu0
        %v3193 = vadd.f32 %v2856, %v3192
        %3194 = vmatmul.f32.gmra.mxu0 %v578
        %v3195 = vpop.f32.mrf.mxu0
        %v3196 = vadd.f32 %v2859, %v3195
        %3197 = vmatmul.f32.gmra.mxu0 %v582
        %v3198 = vpop.f32.mrf.mxu0
        %v3199 = vadd.f32 %v2862, %v3198
        %3200 = vmatmul.f32.gmra.mxu0 %v586
        %v3201 = vpop.f32.mrf.mxu0
        %v3202 = vadd.f32 %v2865, %v3201
        %3203 = vmatmul.f32.gmra.mxu0 %v590
        %v3204 = vpop.f32.mrf.mxu0
        %v3205 = vadd.f32 %v2868, %v3204
        %3206 = vmatmul.f32.gmra.mxu0 %v594
        %v3207 = vpop.f32.mrf.mxu0
        %v3208 = vadd.f32 %v2871, %v3207
        %3209 = vmatmul.f32.gmra.mxu0 %v598
        %v3210 = vpop.f32.mrf.mxu0
        %v3211 = vadd.f32 %v2874, %v3210
        %3212 = vmatmul.f32.gmra.mxu0 %v602
        %v3213 = vpop.f32.mrf.mxu0
        %v3214 = vadd.f32 %v2877, %v3213
        %3215 = vmatmul.f32.gmra.mxu0 %v606
        %v3216 = vpop.f32.mrf.mxu0
        %v3217 = vadd.f32 %v2880, %v3216
        %3218 = vmatmul.f32.gmra.mxu0 %v610
        %v3219 = vpop.f32.mrf.mxu0
        %v3220 = vadd.f32 %v2883, %v3219
        %3221 = vmatmul.f32.gmra.mxu0 %v614
        %v3222 = vpop.f32.mrf.mxu0
        %v3223 = vadd.f32 %v2886, %v3222
        %3224 = vmatmul.f32.gmra.mxu0 %v618
        %v3225 = vpop.f32.mrf.mxu0
        %v3226 = vadd.f32 %v2889, %v3225
        %3227 = vmatmul.f32.gmra.mxu0 %v622
        %v3228 = vpop.f32.mrf.mxu0
        %v3229 = vadd.f32 %v2892, %v3228
        %3230 = vmatmul.f32.gmra.mxu0 %v626
        %v3231 = vpop.f32.mrf.mxu0
        %v3232 = vadd.f32 %v2895, %v3231
        %3233 = vmatmul.f32.gmra.mxu0 %v630
        %v3234 = vpop.f32.mrf.mxu0
        %v3235 = vadd.f32 %v2898, %v3234
        %3236 = vmatmul.f32.gmra.mxu0 %v634
        %v3237 = vpop.f32.mrf.mxu0
        %v3238 = vadd.f32 %v2901, %v3237
        %3239 = vmatmul.f32.gmra.mxu0 %v638
        %v3240 = vpop.f32.mrf.mxu0
        %v3241 = vadd.f32 %v2904, %v3240
        %3242 = vmatmul.f32.gmra.mxu0 %v642
        %v3243 = vpop.f32.mrf.mxu0
        %v3244 = vadd.f32 %v2907, %v3243
        %3245 = vmatmul.f32.gmra.mxu0 %v646
        %v3246 = vpop.f32.mrf.mxu0
        %v3247 = vadd.f32 %v2910, %v3246
        %3248 = vmatmul.f32.gmra.mxu0 %v650
        %v3249 = vpop.f32.mrf.mxu0
        %v3250 = vadd.f32 %v2913, %v3249
        %3251 = vmatmul.f32.gmra.mxu0 %v654
        %v3252 = vpop.f32.mrf.mxu0
        %v3253 = vadd.f32 %v2916, %v3252
        %3254 = vmatmul.f32.gmra.mxu0 %v658
        %v3255 = vpop.f32.mrf.mxu0
        %v3256 = vadd.f32 %v2919, %v3255
        %3257 = vmatmul.f32.gmra.mxu0 %v662
        %v3258 = vpop.f32.mrf.mxu0
        %v3259 = vadd.f32 %v2922, %v3258
        %3260 = vmatmul.f32.gmra.mxu0 %v666
        %v3261 = vpop.f32.mrf.mxu0
        %v3262 = vadd.f32 %v2925, %v3261
        %3263 = vmatmul.f32.gmra.mxu0 %v670
        %v3264 = vpop.f32.mrf.mxu0
        %v3265 = vadd.f32 %v2928, %v3264
        %3266 = vmatmul.f32.gmra.mxu0 %v674
        %v3267 = vpop.f32.mrf.mxu0
        %v3268 = vadd.f32 %v2931, %v3267
        %3269 = vmatmul.f32.gmra.mxu0 %v678
        %v3270 = vpop.f32.mrf.mxu0
        %v3271 = vadd.f32 %v2934, %v3270
        %3272 = vmatmul.f32.gmra.mxu0 %v682
        %v3273 = vpop.f32.mrf.mxu0
        %v3274 = vadd.f32 %v2937, %v3273
        %3275 = vmatmul.f32.gmra.mxu0 %v686
        %v3276 = vpop.f32.mrf.mxu0
        %v3277 = vadd.f32 %v2940, %v3276
        %3278 = vmatmul.f32.gmra.mxu0 %v690
        %v3279 = vpop.f32.mrf.mxu0
        %v3280 = vadd.f32 %v2943, %v3279
        %3281 = vmatmul.f32.gmra.mxu0 %v694
        %v3282 = vpop.f32.mrf.mxu0
        %v3283 = vadd.f32 %v2946, %v3282
        %3284 = vmatmul.f32.gmra.mxu0 %v698
        %v3285 = vpop.f32.mrf.mxu0
        %v3286 = vadd.f32 %v2949, %v3285
        %3287 = vmatmul.f32.gmra.mxu0 %v702
        %v3288 = vpop.f32.mrf.mxu0
        %v3289 = vadd.f32 %v2952, %v3288
        %3290 = vmatmul.f32.gmra.mxu0 %v706
        %v3291 = vpop.f32.mrf.mxu0
        %v3292 = vadd.f32 %v2955, %v3291
        %3293 = vmatmul.f32.gmra.mxu0 %v710
        %v3294 = vpop.f32.mrf.mxu0
        %v3295 = vadd.f32 %v2958, %v3294
        %3296 = vmatmul.f32.gmra.mxu0 %v714
        %v3297 = vpop.f32.mrf.mxu0
        %v3298 = vadd.f32 %v2961, %v3297
        %3299 = vmatmul.f32.gmra.mxu0 %v718
        %v3300 = vpop.f32.mrf.mxu0
        %3301 = vmatmul.f32.gmra.mxu0 %v722
        %v3302 = vpop.f32.mrf.mxu0
        %3303 = vmatmul.f32.gmra.mxu0 %v726
        %v3304 = vpop.f32.mrf.mxu0
        %3305 = vmatmul.f32.gmra.mxu0 %v730
        %v3306 = vpop.f32.mrf.mxu0
        %3307 = vmatmul.f32.gmra.mxu0 %v734
        %v3308 = vpop.f32.mrf.mxu0
        %3309 = vmatmul.f32.gmra.mxu0 %v738
        %v3310 = vpop.f32.mrf.mxu0
        %3311 = vmatmul.f32.gmra.mxu0 %v742
        %v3312 = vpop.f32.mrf.mxu0
        %3313 = vmatmul.f32.gmra.mxu0 %v746
        %v3314 = vpop.f32.mrf.mxu0
        %3315 = vmatmul.f32.gmra.mxu0 %v750
        %v3316 = vpop.f32.mrf.mxu0
        %3317 = vmatmul.f32.gmra.mxu0 %v754
        %v3318 = vpop.f32.mrf.mxu0
        %3319 = vmatmul.f32.gmra.mxu0 %v758
        %v3320 = vpop.f32.mrf.mxu0
        %3321 = vmatmul.f32.gmra.mxu0 %v762
        %v3322 = vpop.f32.mrf.mxu0
        %3323 = vmatmul.f32.gmra.mxu0 %v766
        %v3324 = vpop.f32.mrf.mxu0
        %3325 = vmatmul.f32.gmra.mxu0 %v770
        %v3326 = vpop.f32.mrf.mxu0
        %3327 = vmatmul.f32.gmra.mxu0 %v774
        %v3328 = vpop.f32.mrf.mxu0
        %3329 = vmatmul.f32.gmra.mxu0 %v778
        %v3330 = vpop.f32.mrf.mxu0
        %3331 = vdwg.mxu0
        %3332 = vmatpush.msra.mxu0 %v907
        %3333 = vmatpush.msra.mxu0 %v906
        %3334 = vmatpush.msra.mxu0 %v905
        %3335 = vmatpush.msra.mxu0 %v904
        %3336 = vmatpush.msra.mxu0 %v903
        %3337 = vmatpush.msra.mxu0 %v902
        %3338 = vmatpush.msra.mxu0 %v901
        %3339 = vmatpush.msra.mxu0 %v900
        %3340 = vmatpush.msra.mxu0 %v899
        %3341 = vmatpush.msra.mxu0 %v898
        %3342 = vmatpush.msra.mxu0 %v897
        %3343 = vmatpush.msra.mxu0 %v896
        %3344 = vmatpush.msra.mxu0 %v895
        %3345 = vmatpush.msra.mxu0 %v894
        %3346 = vmatpush.msra.mxu0 %v893
        %3347 = vmatpush.msra.mxu0 %v892
        %3348 = vmatmul.f32.gmra.mxu0 %v335
        %v3349 = vpop.f32.mrf.mxu0
        %v3350 = vadd.f32 %v3013, %v3349
        %3351 = vmatmul.f32.gmra.mxu0 %v339
        %v3352 = vpop.f32.mrf.mxu0
        %v3353 = vadd.f32 %v3016, %v3352
        %3354 = vmatmul.f32.gmra.mxu0 %v343
        %v3355 = vpop.f32.mrf.mxu0
        %v3356 = vadd.f32 %v3019, %v3355
        %3357 = vmatmul.f32.gmra.mxu0 %v347
        %v3358 = vpop.f32.mrf.mxu0
        %v3359 = vadd.f32 %v3022, %v3358
        %3360 = vmatmul.f32.gmra.mxu0 %v351
        %v3361 = vpop.f32.mrf.mxu0
        %v3362 = vadd.f32 %v3025, %v3361
        %3363 = vmatmul.f32.gmra.mxu0 %v355
        %v3364 = vpop.f32.mrf.mxu0
        %v3365 = vadd.f32 %v3028, %v3364
        %3366 = vmatmul.f32.gmra.mxu0 %v359
        %v3367 = vpop.f32.mrf.mxu0
        %v3368 = vadd.f32 %v3031, %v3367
        %3369 = vmatmul.f32.gmra.mxu0 %v363
        %v3370 = vpop.f32.mrf.mxu0
        %v3371 = vadd.f32 %v3034, %v3370
        %3372 = vmatmul.f32.gmra.mxu0 %v367
        %v3373 = vpop.f32.mrf.mxu0
        %v3374 = vadd.f32 %v3037, %v3373
        %3375 = vmatmul.f32.gmra.mxu0 %v371
        %v3376 = vpop.f32.mrf.mxu0
        %v3377 = vadd.f32 %v3040, %v3376
        %3378 = vmatmul.f32.gmra.mxu0 %v375
        %v3379 = vpop.f32.mrf.mxu0
        %v3380 = vadd.f32 %v3043, %v3379
        %3381 = vmatmul.f32.gmra.mxu0 %v379
        %v3382 = vpop.f32.mrf.mxu0
        %v3383 = vadd.f32 %v3046, %v3382
        %3384 = vmatmul.f32.gmra.mxu0 %v383
        %v3385 = vpop.f32.mrf.mxu0
        %v3386 = vadd.f32 %v3049, %v3385
        %3387 = vmatmul.f32.gmra.mxu0 %v387
        %v3388 = vpop.f32.mrf.mxu0
        %v3389 = vadd.f32 %v3052, %v3388
        %3390 = vmatmul.f32.gmra.mxu0 %v391
        %v3391 = vpop.f32.mrf.mxu0
        %v3392 = vadd.f32 %v3055, %v3391
        %3393 = vmatmul.f32.gmra.mxu0 %v395
        %v3394 = vpop.f32.mrf.mxu0
        %v3395 = vadd.f32 %v3058, %v3394
        %3396 = vmatmul.f32.gmra.mxu0 %v399
        %v3397 = vpop.f32.mrf.mxu0
        %v3398 = vadd.f32 %v3061, %v3397
        %3399 = vmatmul.f32.gmra.mxu0 %v403
        %v3400 = vpop.f32.mrf.mxu0
        %v3401 = vadd.f32 %v3064, %v3400
        %3402 = vmatmul.f32.gmra.mxu0 %v407
        %v3403 = vpop.f32.mrf.mxu0
        %v3404 = vadd.f32 %v3067, %v3403
        %3405 = vmatmul.f32.gmra.mxu0 %v411
        %v3406 = vpop.f32.mrf.mxu0
        %v3407 = vadd.f32 %v3070, %v3406
        %3408 = vmatmul.f32.gmra.mxu0 %v415
        %v3409 = vpop.f32.mrf.mxu0
        %v3410 = vadd.f32 %v3073, %v3409
        %3411 = vmatmul.f32.gmra.mxu0 %v419
        %v3412 = vpop.f32.mrf.mxu0
        %v3413 = vadd.f32 %v3076, %v3412
        %3414 = vmatmul.f32.gmra.mxu0 %v423
        %v3415 = vpop.f32.mrf.mxu0
        %v3416 = vadd.f32 %v3079, %v3415
        %3417 = vmatmul.f32.gmra.mxu0 %v427
        %v3418 = vpop.f32.mrf.mxu0
        %v3419 = vadd.f32 %v3082, %v3418
        %3420 = vmatmul.f32.gmra.mxu0 %v431
        %v3421 = vpop.f32.mrf.mxu0
        %v3422 = vadd.f32 %v3085, %v3421
        %3423 = vmatmul.f32.gmra.mxu0 %v435
        %v3424 = vpop.f32.mrf.mxu0
        %v3425 = vadd.f32 %v3088, %v3424
        %3426 = vmatmul.f32.gmra.mxu0 %v439
        %v3427 = vpop.f32.mrf.mxu0
        %v3428 = vadd.f32 %v3091, %v3427
        %3429 = vmatmul.f32.gmra.mxu0 %v443
        %v3430 = vpop.f32.mrf.mxu0
        %v3431 = vadd.f32 %v3094, %v3430
        %3432 = vmatmul.f32.gmra.mxu0 %v447
        %v3433 = vpop.f32.mrf.mxu0
        %v3434 = vadd.f32 %v3097, %v3433
        %3435 = vmatmul.f32.gmra.mxu0 %v451
        %v3436 = vpop.f32.mrf.mxu0
        %v3437 = vadd.f32 %v3100, %v3436
        %3438 = vmatmul.f32.gmra.mxu0 %v455
        %v3439 = vpop.f32.mrf.mxu0
        %v3440 = vadd.f32 %v3103, %v3439
        %3441 = vmatmul.f32.gmra.mxu0 %v459
        %v3442 = vpop.f32.mrf.mxu0
        %v3443 = vadd.f32 %v3106, %v3442
        %3444 = vmatmul.f32.gmra.mxu0 %v463
        %v3445 = vpop.f32.mrf.mxu0
        %v3446 = vadd.f32 %v3109, %v3445
        %3447 = vmatmul.f32.gmra.mxu0 %v467
        %v3448 = vpop.f32.mrf.mxu0
        %v3449 = vadd.f32 %v3112, %v3448
        %3450 = vmatmul.f32.gmra.mxu0 %v471
        %v3451 = vpop.f32.mrf.mxu0
        %v3452 = vadd.f32 %v3115, %v3451
        %3453 = vmatmul.f32.gmra.mxu0 %v475
        %v3454 = vpop.f32.mrf.mxu0
        %v3455 = vadd.f32 %v3118, %v3454
        %3456 = vmatmul.f32.gmra.mxu0 %v479
        %v3457 = vpop.f32.mrf.mxu0
        %v3458 = vadd.f32 %v3121, %v3457
        %3459 = vmatmul.f32.gmra.mxu0 %v483
        %v3460 = vpop.f32.mrf.mxu0
        %v3461 = vadd.f32 %v3124, %v3460
        %3462 = vmatmul.f32.gmra.mxu0 %v487
        %v3463 = vpop.f32.mrf.mxu0
        %v3464 = vadd.f32 %v3127, %v3463
        %3465 = vmatmul.f32.gmra.mxu0 %v491
        %v3466 = vpop.f32.mrf.mxu0
        %v3467 = vadd.f32 %v3130, %v3466
        %3468 = vmatmul.f32.gmra.mxu0 %v495
        %v3469 = vpop.f32.mrf.mxu0
        %v3470 = vadd.f32 %v3133, %v3469
        %3471 = vmatmul.f32.gmra.mxu0 %v499
        %v3472 = vpop.f32.mrf.mxu0
        %v3473 = vadd.f32 %v3136, %v3472
        %3474 = vmatmul.f32.gmra.mxu0 %v503
        %v3475 = vpop.f32.mrf.mxu0
        %v3476 = vadd.f32 %v3139, %v3475
        %3477 = vmatmul.f32.gmra.mxu0 %v507
        %v3478 = vpop.f32.mrf.mxu0
        %v3479 = vadd.f32 %v3142, %v3478
        %3480 = vmatmul.f32.gmra.mxu0 %v511
        %v3481 = vpop.f32.mrf.mxu0
        %v3482 = vadd.f32 %v3145, %v3481
        %3483 = vmatmul.f32.gmra.mxu0 %v515
        %v3484 = vpop.f32.mrf.mxu0
        %v3485 = vadd.f32 %v3148, %v3484
        %3486 = vmatmul.f32.gmra.mxu0 %v519
        %v3487 = vpop.f32.mrf.mxu0
        %v3488 = vadd.f32 %v3151, %v3487
        %3489 = vmatmul.f32.gmra.mxu0 %v523
        %v3490 = vpop.f32.mrf.mxu0
        %v3491 = vadd.f32 %v3154, %v3490
        %3492 = vmatmul.f32.gmra.mxu0 %v527
        %v3493 = vpop.f32.mrf.mxu0
        %v3494 = vadd.f32 %v3157, %v3493
        %3495 = vmatmul.f32.gmra.mxu0 %v531
        %v3496 = vpop.f32.mrf.mxu0
        %v3497 = vadd.f32 %v3160, %v3496
        %3498 = vmatmul.f32.gmra.mxu0 %v535
        %v3499 = vpop.f32.mrf.mxu0
        %v3500 = vadd.f32 %v3163, %v3499
        %3501 = vmatmul.f32.gmra.mxu0 %v539
        %v3502 = vpop.f32.mrf.mxu0
        %v3503 = vadd.f32 %v3166, %v3502
        %3504 = vmatmul.f32.gmra.mxu0 %v543
        %v3505 = vpop.f32.mrf.mxu0
        %v3506 = vadd.f32 %v3169, %v3505
        %3507 = vmatmul.f32.gmra.mxu0 %v547
        %v3508 = vpop.f32.mrf.mxu0
        %v3509 = vadd.f32 %v3172, %v3508
        %3510 = vmatmul.f32.gmra.mxu0 %v551
        %v3511 = vpop.f32.mrf.mxu0
        %v3512 = vadd.f32 %v3175, %v3511
        %3513 = vmatmul.f32.gmra.mxu0 %v555
        %v3514 = vpop.f32.mrf.mxu0
        %v3515 = vadd.f32 %v3178, %v3514
        %3516 = vmatmul.f32.gmra.mxu0 %v559
        %v3517 = vpop.f32.mrf.mxu0
        %v3518 = vadd.f32 %v3181, %v3517
        %3519 = vmatmul.f32.gmra.mxu0 %v563
        %v3520 = vpop.f32.mrf.mxu0
        %v3521 = vadd.f32 %v3184, %v3520
        %3522 = vmatmul.f32.gmra.mxu0 %v567
        %v3523 = vpop.f32.mrf.mxu0
        %v3524 = vadd.f32 %v3187, %v3523
        %3525 = vmatmul.f32.gmra.mxu0 %v571
        %v3526 = vpop.f32.mrf.mxu0
        %v3527 = vadd.f32 %v3190, %v3526
        %3528 = vmatmul.f32.gmra.mxu0 %v575
        %v3529 = vpop.f32.mrf.mxu0
        %v3530 = vadd.f32 %v3193, %v3529
        %3531 = vmatmul.f32.gmra.mxu0 %v579
        %v3532 = vpop.f32.mrf.mxu0
        %v3533 = vadd.f32 %v3196, %v3532
        %3534 = vmatmul.f32.gmra.mxu0 %v583
        %v3535 = vpop.f32.mrf.mxu0
        %v3536 = vadd.f32 %v3199, %v3535
        %3537 = vmatmul.f32.gmra.mxu0 %v587
        %v3538 = vpop.f32.mrf.mxu0
        %v3539 = vadd.f32 %v3202, %v3538
        %3540 = vmatmul.f32.gmra.mxu0 %v591
        %v3541 = vpop.f32.mrf.mxu0
        %v3542 = vadd.f32 %v3205, %v3541
        %3543 = vmatmul.f32.gmra.mxu0 %v595
        %v3544 = vpop.f32.mrf.mxu0
        %v3545 = vadd.f32 %v3208, %v3544
        %3546 = vmatmul.f32.gmra.mxu0 %v599
        %v3547 = vpop.f32.mrf.mxu0
        %v3548 = vadd.f32 %v3211, %v3547
        %3549 = vmatmul.f32.gmra.mxu0 %v603
        %v3550 = vpop.f32.mrf.mxu0
        %v3551 = vadd.f32 %v3214, %v3550
        %3552 = vmatmul.f32.gmra.mxu0 %v607
        %v3553 = vpop.f32.mrf.mxu0
        %v3554 = vadd.f32 %v3217, %v3553
        %3555 = vmatmul.f32.gmra.mxu0 %v611
        %v3556 = vpop.f32.mrf.mxu0
        %v3557 = vadd.f32 %v3220, %v3556
        %3558 = vmatmul.f32.gmra.mxu0 %v615
        %v3559 = vpop.f32.mrf.mxu0
        %v3560 = vadd.f32 %v3223, %v3559
        %3561 = vmatmul.f32.gmra.mxu0 %v619
        %v3562 = vpop.f32.mrf.mxu0
        %v3563 = vadd.f32 %v3226, %v3562
        %3564 = vmatmul.f32.gmra.mxu0 %v623
        %v3565 = vpop.f32.mrf.mxu0
        %v3566 = vadd.f32 %v3229, %v3565
        %3567 = vmatmul.f32.gmra.mxu0 %v627
        %v3568 = vpop.f32.mrf.mxu0
        %v3569 = vadd.f32 %v3232, %v3568
        %3570 = vmatmul.f32.gmra.mxu0 %v631
        %v3571 = vpop.f32.mrf.mxu0
        %v3572 = vadd.f32 %v3235, %v3571
        %3573 = vmatmul.f32.gmra.mxu0 %v635
        %v3574 = vpop.f32.mrf.mxu0
        %v3575 = vadd.f32 %v3238, %v3574
        %3576 = vmatmul.f32.gmra.mxu0 %v639
        %v3577 = vpop.f32.mrf.mxu0
        %v3578 = vadd.f32 %v3241, %v3577
        %3579 = vmatmul.f32.gmra.mxu0 %v643
        %v3580 = vpop.f32.mrf.mxu0
        %v3581 = vadd.f32 %v3244, %v3580
        %3582 = vmatmul.f32.gmra.mxu0 %v647
        %v3583 = vpop.f32.mrf.mxu0
        %v3584 = vadd.f32 %v3247, %v3583
        %3585 = vmatmul.f32.gmra.mxu0 %v651
        %v3586 = vpop.f32.mrf.mxu0
        %v3587 = vadd.f32 %v3250, %v3586
        %3588 = vmatmul.f32.gmra.mxu0 %v655
        %v3589 = vpop.f32.mrf.mxu0
        %v3590 = vadd.f32 %v3253, %v3589
        %3591 = vmatmul.f32.gmra.mxu0 %v659
        %v3592 = vpop.f32.mrf.mxu0
        %v3593 = vadd.f32 %v3256, %v3592
        %3594 = vmatmul.f32.gmra.mxu0 %v663
        %v3595 = vpop.f32.mrf.mxu0
        %v3596 = vadd.f32 %v3259, %v3595
        %3597 = vmatmul.f32.gmra.mxu0 %v667
        %v3598 = vpop.f32.mrf.mxu0
        %v3599 = vadd.f32 %v3262, %v3598
        %3600 = vmatmul.f32.gmra.mxu0 %v671
        %v3601 = vpop.f32.mrf.mxu0
        %v3602 = vadd.f32 %v3265, %v3601
        %3603 = vmatmul.f32.gmra.mxu0 %v675
        %v3604 = vpop.f32.mrf.mxu0
        %v3605 = vadd.f32 %v3268, %v3604
        %3606 = vmatmul.f32.gmra.mxu0 %v679
        %v3607 = vpop.f32.mrf.mxu0
        %v3608 = vadd.f32 %v3271, %v3607
        %3609 = vmatmul.f32.gmra.mxu0 %v683
        %v3610 = vpop.f32.mrf.mxu0
        %v3611 = vadd.f32 %v3274, %v3610
        %3612 = vmatmul.f32.gmra.mxu0 %v687
        %v3613 = vpop.f32.mrf.mxu0
        %v3614 = vadd.f32 %v3277, %v3613
        %3615 = vmatmul.f32.gmra.mxu0 %v691
        %v3616 = vpop.f32.mrf.mxu0
        %v3617 = vadd.f32 %v3280, %v3616
        %3618 = vmatmul.f32.gmra.mxu0 %v695
        %v3619 = vpop.f32.mrf.mxu0
        %v3620 = vadd.f32 %v3283, %v3619
        %3621 = vmatmul.f32.gmra.mxu0 %v699
        %v3622 = vpop.f32.mrf.mxu0
        %v3623 = vadd.f32 %v3286, %v3622
        %3624 = vmatmul.f32.gmra.mxu0 %v703
        %v3625 = vpop.f32.mrf.mxu0
        %v3626 = vadd.f32 %v3289, %v3625
        %3627 = vmatmul.f32.gmra.mxu0 %v707
        %v3628 = vpop.f32.mrf.mxu0
        %v3629 = vadd.f32 %v3292, %v3628
        %3630 = vmatmul.f32.gmra.mxu0 %v711
        %v3631 = vpop.f32.mrf.mxu0
        %v3632 = vadd.f32 %v3295, %v3631
        %3633 = vmatmul.f32.gmra.mxu0 %v715
        %v3634 = vpop.f32.mrf.mxu0
        %v3635 = vadd.f32 %v3298, %v3634
        %3636 = vmatmul.f32.gmra.mxu0 %v719
        %v3637 = vpop.f32.mrf.mxu0
        %3638 = vmatmul.f32.gmra.mxu0 %v723
        %v3639 = vpop.f32.mrf.mxu0
        %3640 = vmatmul.f32.gmra.mxu0 %v727
        %v3641 = vpop.f32.mrf.mxu0
        %3642 = vmatmul.f32.gmra.mxu0 %v731
        %v3643 = vpop.f32.mrf.mxu0
        %3644 = vmatmul.f32.gmra.mxu0 %v735
        %v3645 = vpop.f32.mrf.mxu0
        %3646 = vmatmul.f32.gmra.mxu0 %v739
        %v3647 = vpop.f32.mrf.mxu0
        %3648 = vmatmul.f32.gmra.mxu0 %v743
        %v3649 = vpop.f32.mrf.mxu0
        %3650 = vmatmul.f32.gmra.mxu0 %v747
        %v3651 = vpop.f32.mrf.mxu0
        %3652 = vmatmul.f32.gmra.mxu0 %v751
        %v3653 = vpop.f32.mrf.mxu0
        %3654 = vmatmul.f32.gmra.mxu0 %v755
        %v3655 = vpop.f32.mrf.mxu0
        %3656 = vmatmul.f32.gmra.mxu0 %v759
        %v3657 = vpop.f32.mrf.mxu0
        %3658 = vmatmul.f32.gmra.mxu0 %v763
        %v3659 = vpop.f32.mrf.mxu0
        %3660 = vmatmul.f32.gmra.mxu0 %v767
        %v3661 = vpop.f32.mrf.mxu0
        %3662 = vmatmul.f32.gmra.mxu0 %v771
        %v3663 = vpop.f32.mrf.mxu0
        %3664 = vmatmul.f32.gmra.mxu0 %v775
        %v3665 = vpop.f32.mrf.mxu0
        %3666 = vmatmul.f32.gmra.mxu0 %v779
        %v3667 = vpop.f32.mrf.mxu0
        %3668 = vdwg.mxu0
        %v3669 = vld [vmem:[%s2] sm:$0x1]
        %v3671 = vperm.slane %v3669, 0
        %v3673 = vadd.f32 %v3350, %v3671
        %v3674 = vadd.f32 %v3353, %v3671
        %v3675 = vadd.f32 %v3356, %v3671
        %v3676 = vadd.f32 %v3359, %v3671
        %v3677 = vadd.f32 %v3362, %v3671
        %v3678 = vadd.f32 %v3365, %v3671
        %v3679 = vadd.f32 %v3368, %v3671
        %v3680 = vadd.f32 %v3371, %v3671
        %v3681 = vadd.f32 %v3374, %v3671
        %v3682 = vadd.f32 %v3377, %v3671
        %v3683 = vadd.f32 %v3380, %v3671
        %v3684 = vadd.f32 %v3383, %v3671
        %v3685 = vadd.f32 %v3386, %v3671
        %v3686 = vadd.f32 %v3389, %v3671
        %v3687 = vadd.f32 %v3392, %v3671
        %v3688 = vadd.f32 %v3395, %v3671
        %v3689 = vadd.f32 %v3398, %v3671
        %v3690 = vadd.f32 %v3401, %v3671
        %v3691 = vadd.f32 %v3404, %v3671
        %v3692 = vadd.f32 %v3407, %v3671
        %v3693 = vadd.f32 %v3410, %v3671
        %v3694 = vadd.f32 %v3413, %v3671
        %v3695 = vadd.f32 %v3416, %v3671
        %v3696 = vadd.f32 %v3419, %v3671
        %v3697 = vadd.f32 %v3422, %v3671
        %v3698 = vadd.f32 %v3425, %v3671
        %v3699 = vadd.f32 %v3428, %v3671
        %v3700 = vadd.f32 %v3431, %v3671
        %v3701 = vadd.f32 %v3434, %v3671
        %v3702 = vadd.f32 %v3437, %v3671
        %v3703 = vadd.f32 %v3440, %v3671
        %v3704 = vadd.f32 %v3443, %v3671
        %v3705 = vadd.f32 %v3446, %v3671
        %v3706 = vadd.f32 %v3449, %v3671
        %v3707 = vadd.f32 %v3452, %v3671
        %v3708 = vadd.f32 %v3455, %v3671
        %v3709 = vadd.f32 %v3458, %v3671
        %v3710 = vadd.f32 %v3461, %v3671
        %v3711 = vadd.f32 %v3464, %v3671
        %v3712 = vadd.f32 %v3467, %v3671
        %v3713 = vadd.f32 %v3470, %v3671
        %v3714 = vadd.f32 %v3473, %v3671
        %v3715 = vadd.f32 %v3476, %v3671
        %v3716 = vadd.f32 %v3479, %v3671
        %v3717 = vadd.f32 %v3482, %v3671
        %v3718 = vadd.f32 %v3485, %v3671
        %v3719 = vadd.f32 %v3488, %v3671
        %v3720 = vadd.f32 %v3491, %v3671
        %v3721 = vadd.f32 %v3494, %v3671
        %v3722 = vadd.f32 %v3497, %v3671
        %v3723 = vadd.f32 %v3500, %v3671
        %v3724 = vadd.f32 %v3503, %v3671
        %v3725 = vadd.f32 %v3506, %v3671
        %v3726 = vadd.f32 %v3509, %v3671
        %v3727 = vadd.f32 %v3512, %v3671
        %v3728 = vadd.f32 %v3515, %v3671
        %v3729 = vadd.f32 %v3518, %v3671
        %v3730 = vadd.f32 %v3521, %v3671
        %v3731 = vadd.f32 %v3524, %v3671
        %v3732 = vadd.f32 %v3527, %v3671
        %v3733 = vadd.f32 %v3530, %v3671
        %v3734 = vadd.f32 %v3533, %v3671
        %v3735 = vadd.f32 %v3536, %v3671
        %v3736 = vadd.f32 %v3539, %v3671
        %v3737 = vadd.f32 %v3542, %v3671
        %v3738 = vadd.f32 %v3545, %v3671
        %v3739 = vadd.f32 %v3548, %v3671
        %v3740 = vadd.f32 %v3551, %v3671
        %v3741 = vadd.f32 %v3554, %v3671
        %v3742 = vadd.f32 %v3557, %v3671
        %v3743 = vadd.f32 %v3560, %v3671
        %v3744 = vadd.f32 %v3563, %v3671
        %v3745 = vadd.f32 %v3566, %v3671
        %v3746 = vadd.f32 %v3569, %v3671
        %v3747 = vadd.f32 %v3572, %v3671
        %v3748 = vadd.f32 %v3575, %v3671
        %v3749 = vadd.f32 %v3578, %v3671
        %v3750 = vadd.f32 %v3581, %v3671
        %v3751 = vadd.f32 %v3584, %v3671
        %v3752 = vadd.f32 %v3587, %v3671
        %v3753 = vadd.f32 %v3590, %v3671
        %v3754 = vadd.f32 %v3593, %v3671
        %v3755 = vadd.f32 %v3596, %v3671
        %v3756 = vadd.f32 %v3599, %v3671
        %v3757 = vadd.f32 %v3602, %v3671
        %v3758 = vadd.f32 %v3605, %v3671
        %v3759 = vadd.f32 %v3608, %v3671
        %v3760 = vadd.f32 %v3611, %v3671
        %v3761 = vadd.f32 %v3614, %v3671
        %v3762 = vadd.f32 %v3617, %v3671
        %v3763 = vadd.f32 %v3620, %v3671
        %v3764 = vadd.f32 %v3623, %v3671
        %v3765 = vadd.f32 %v3626, %v3671
        %v3766 = vadd.f32 %v3629, %v3671
        %v3767 = vadd.f32 %v3632, %v3671
        %v3768 = vadd.f32 %v3635, %v3671
        %v3769 = vmax.f32 %v3673, 0.0
        %v3770 = vmax.f32 %v3674, 0.0
        %v3771 = vmax.f32 %v3675, 0.0
        %v3772 = vmax.f32 %v3676, 0.0
        %v3773 = vmax.f32 %v3677, 0.0
        %v3774 = vmax.f32 %v3678, 0.0
        %v3775 = vmax.f32 %v3679, 0.0
        %v3776 = vmax.f32 %v3680, 0.0
        %v3777 = vmax.f32 %v3681, 0.0
        %v3778 = vmax.f32 %v3682, 0.0
        %v3779 = vmax.f32 %v3683, 0.0
        %v3780 = vmax.f32 %v3684, 0.0
        %v3781 = vmax.f32 %v3685, 0.0
        %v3782 = vmax.f32 %v3686, 0.0
        %v3783 = vmax.f32 %v3687, 0.0
        %v3784 = vmax.f32 %v3688, 0.0
        %v3785 = vmax.f32 %v3689, 0.0
        %v3786 = vmax.f32 %v3690, 0.0
        %v3787 = vmax.f32 %v3691, 0.0
        %v3788 = vmax.f32 %v3692, 0.0
        %v3789 = vmax.f32 %v3693, 0.0
        %v3790 = vmax.f32 %v3694, 0.0
        %v3791 = vmax.f32 %v3695, 0.0
        %v3792 = vmax.f32 %v3696, 0.0
        %v3793 = vmax.f32 %v3697, 0.0
        %v3794 = vmax.f32 %v3698, 0.0
        %v3795 = vmax.f32 %v3699, 0.0
        %v3796 = vmax.f32 %v3700, 0.0
        %v3797 = vmax.f32 %v3701, 0.0
        %v3798 = vmax.f32 %v3702, 0.0
        %v3799 = vmax.f32 %v3703, 0.0
        %v3800 = vmax.f32 %v3704, 0.0
        %v3801 = vmax.f32 %v3705, 0.0
        %v3802 = vmax.f32 %v3706, 0.0
        %v3803 = vmax.f32 %v3707, 0.0
        %v3804 = vmax.f32 %v3708, 0.0
        %v3805 = vmax.f32 %v3709, 0.0
        %v3806 = vmax.f32 %v3710, 0.0
        %v3807 = vmax.f32 %v3711, 0.0
        %v3808 = vmax.f32 %v3712, 0.0
        %v3809 = vmax.f32 %v3713, 0.0
        %v3810 = vmax.f32 %v3714, 0.0
        %v3811 = vmax.f32 %v3715, 0.0
        %v3812 = vmax.f32 %v3716, 0.0
        %v3813 = vmax.f32 %v3717, 0.0
        %v3814 = vmax.f32 %v3718, 0.0
        %v3815 = vmax.f32 %v3719, 0.0
        %v3816 = vmax.f32 %v3720, 0.0
        %v3817 = vmax.f32 %v3721, 0.0
        %v3818 = vmax.f32 %v3722, 0.0
        %v3819 = vmax.f32 %v3723, 0.0
        %v3820 = vmax.f32 %v3724, 0.0
        %v3821 = vmax.f32 %v3725, 0.0
        %v3822 = vmax.f32 %v3726, 0.0
        %v3823 = vmax.f32 %v3727, 0.0
        %v3824 = vmax.f32 %v3728, 0.0
        %v3825 = vmax.f32 %v3729, 0.0
        %v3826 = vmax.f32 %v3730, 0.0
        %v3827 = vmax.f32 %v3731, 0.0
        %v3828 = vmax.f32 %v3732, 0.0
        %v3829 = vmax.f32 %v3733, 0.0
        %v3830 = vmax.f32 %v3734, 0.0
        %v3831 = vmax.f32 %v3735, 0.0
        %v3832 = vmax.f32 %v3736, 0.0
        %v3833 = vmax.f32 %v3737, 0.0
        %v3834 = vmax.f32 %v3738, 0.0
        %v3835 = vmax.f32 %v3739, 0.0
        %v3836 = vmax.f32 %v3740, 0.0
        %v3837 = vmax.f32 %v3741, 0.0
        %v3838 = vmax.f32 %v3742, 0.0
        %v3839 = vmax.f32 %v3743, 0.0
        %v3840 = vmax.f32 %v3744, 0.0
        %v3841 = vmax.f32 %v3745, 0.0
        %v3842 = vmax.f32 %v3746, 0.0
        %v3843 = vmax.f32 %v3747, 0.0
        %v3844 = vmax.f32 %v3748, 0.0
        %v3845 = vmax.f32 %v3749, 0.0
        %v3846 = vmax.f32 %v3750, 0.0
        %v3847 = vmax.f32 %v3751, 0.0
        %v3848 = vmax.f32 %v3752, 0.0
        %v3849 = vmax.f32 %v3753, 0.0
        %v3850 = vmax.f32 %v3754, 0.0
        %v3851 = vmax.f32 %v3755, 0.0
        %v3852 = vmax.f32 %v3756, 0.0
        %v3853 = vmax.f32 %v3757, 0.0
        %v3854 = vmax.f32 %v3758, 0.0
        %v3855 = vmax.f32 %v3759, 0.0
        %v3856 = vmax.f32 %v3760, 0.0
        %v3857 = vmax.f32 %v3761, 0.0
        %v3858 = vmax.f32 %v3762, 0.0
        %v3859 = vmax.f32 %v3763, 0.0
        %v3860 = vmax.f32 %v3764, 0.0
        %v3861 = vmax.f32 %v3765, 0.0
        %v3862 = vmax.f32 %v3766, 0.0
        %v3863 = vmax.f32 %v3767, 0.0
        %v3864 = vmax.f32 %v3768, 0.0
        %v3865 = vld [vmem:[%s3] sm:$0xff]
        %v3866 = vld [vmem:[%s3 + $0x8] sm:$0xff]
        %v3867 = vld [vmem:[%s3 + $0x10] sm:$0xff]
        %v3868 = vld [vmem:[%s3 + $0x18] sm:$0xff]
        %v3869 = vld [vmem:[%s3 + $0x20] sm:$0xff]
        %v3870 = vld [vmem:[%s3 + $0x28] sm:$0xff]
        %v3871 = vld [vmem:[%s3 + $0x30] sm:$0xff]
        %v3872 = vld [vmem:[%s3 + $0x38] sm:$0xff]
        %v3873 = vld [vmem:[%s3 + $0x40] sm:$0xff]
        %v3874 = vld [vmem:[%s3 + $0x48] sm:$0xff]
        %v3875 = vld [vmem:[%s3 + $0x50] sm:$0xff]
        %v3876 = vld [vmem:[%s3 + $0x58] sm:$0xff]
        %v3877 = vld [vmem:[%s3 + $0x60] sm:$0xff]
        %v3878 = vld [vmem:[%s3 + $0x68] sm:$0xff]
        %v3879 = vld [vmem:[%s3 + $0x70] sm:$0xff]
        %v3880 = vld [vmem:[%s3 + $0x78] sm:$0xff]
        %s3881 = scalar_lea.vmem %s3, 128
        %v3882 = vld [vmem:[%s3881] sm:$0xff]
        %v3883 = vld [vmem:[%s3881 + $0x8] sm:$0xff]
        %v3884 = vld [vmem:[%s3881 + $0x10] sm:$0xff]
        %v3885 = vld [vmem:[%s3881 + $0x18] sm:$0xff]
        %v3886 = vld [vmem:[%s3881 + $0x20] sm:$0xff]
        %v3887 = vld [vmem:[%s3881 + $0x28] sm:$0xff]
        %v3888 = vld [vmem:[%s3881 + $0x30] sm:$0xff]
        %v3889 = vld [vmem:[%s3881 + $0x38] sm:$0xff]
        %v3890 = vld [vmem:[%s3881 + $0x40] sm:$0xff]
        %v3891 = vld [vmem:[%s3881 + $0x48] sm:$0xff]
        %v3892 = vld [vmem:[%s3881 + $0x50] sm:$0xff]
        %v3893 = vld [vmem:[%s3881 + $0x58] sm:$0xff]
        %v3894 = vld [vmem:[%s3881 + $0x60] sm:$0xff]
        %v3895 = vld [vmem:[%s3881 + $0x68] sm:$0xff]
        %v3896 = vld [vmem:[%s3881 + $0x70] sm:$0xff]
        %v3897 = vld [vmem:[%s3881 + $0x78] sm:$0xff]
        %3898 = vmatpush.msra.mxu0 %v3897
        %3899 = vmatpush.msra.mxu0 %v3896
        %3900 = vmatpush.msra.mxu0 %v3895
        %3901 = vmatpush.msra.mxu0 %v3894
        %3902 = vmatpush.msra.mxu0 %v3893
        %3903 = vmatpush.msra.mxu0 %v3892
        %3904 = vmatpush.msra.mxu0 %v3891
        %3905 = vmatpush.msra.mxu0 %v3890
        %3906 = vmatpush.msra.mxu0 %v3889
        %3907 = vmatpush.msra.mxu0 %v3888
        %3908 = vmatpush.msra.mxu0 %v3887
        %3909 = vmatpush.msra.mxu0 %v3886
        %3910 = vmatpush.msra.mxu0 %v3885
        %3911 = vmatpush.msra.mxu0 %v3884
        %3912 = vmatpush.msra.mxu0 %v3883
        %3913 = vmatpush.msra.mxu0 %v3882
        %3914 = vmatmul.f32.gmra.mxu0 %v3785
        %v3915 = vpop.f32.mrf.mxu0
        %v3916 = vadd.f32 0.0, %v3915
        %3917 = vmatmul.f32.gmra.mxu0 %v3786
        %v3918 = vpop.f32.mrf.mxu0
        %v3919 = vadd.f32 0.0, %v3918
        %3920 = vmatmul.f32.gmra.mxu0 %v3787
        %v3921 = vpop.f32.mrf.mxu0
        %v3922 = vadd.f32 0.0, %v3921
        %3923 = vmatmul.f32.gmra.mxu0 %v3788
        %v3924 = vpop.f32.mrf.mxu0
        %v3925 = vadd.f32 0.0, %v3924
        %3926 = vmatmul.f32.gmra.mxu0 %v3789
        %v3927 = vpop.f32.mrf.mxu0
        %v3928 = vadd.f32 0.0, %v3927
        %3929 = vmatmul.f32.gmra.mxu0 %v3790
        %v3930 = vpop.f32.mrf.mxu0
        %v3931 = vadd.f32 0.0, %v3930
        %3932 = vmatmul.f32.gmra.mxu0 %v3791
        %v3933 = vpop.f32.mrf.mxu0
        %v3934 = vadd.f32 0.0, %v3933
        %3935 = vmatmul.f32.gmra.mxu0 %v3792
        %v3936 = vpop.f32.mrf.mxu0
        %v3937 = vadd.f32 0.0, %v3936
        %3938 = vmatmul.f32.gmra.mxu0 %v3793
        %v3939 = vpop.f32.mrf.mxu0
        %v3940 = vadd.f32 0.0, %v3939
        %3941 = vmatmul.f32.gmra.mxu0 %v3794
        %v3942 = vpop.f32.mrf.mxu0
        %v3943 = vadd.f32 0.0, %v3942
        %3944 = vmatmul.f32.gmra.mxu0 %v3795
        %v3945 = vpop.f32.mrf.mxu0
        %v3946 = vadd.f32 0.0, %v3945
        %3947 = vmatmul.f32.gmra.mxu0 %v3796
        %v3948 = vpop.f32.mrf.mxu0
        %v3949 = vadd.f32 0.0, %v3948
        %3950 = vmatmul.f32.gmra.mxu0 %v3797
        %v3951 = vpop.f32.mrf.mxu0
        %v3952 = vadd.f32 0.0, %v3951
        %3953 = vmatmul.f32.gmra.mxu0 %v3798
        %v3954 = vpop.f32.mrf.mxu0
        %v3955 = vadd.f32 0.0, %v3954
        %3956 = vmatmul.f32.gmra.mxu0 %v3799
        %v3957 = vpop.f32.mrf.mxu0
        %v3958 = vadd.f32 0.0, %v3957
        %3959 = vmatmul.f32.gmra.mxu0 %v3800
        %v3960 = vpop.f32.mrf.mxu0
        %v3961 = vadd.f32 0.0, %v3960
        %3962 = vmatmul.f32.gmra.mxu0 %v3817
        %v3963 = vpop.f32.mrf.mxu0
        %v3964 = vadd.f32 0.0, %v3963
        %3965 = vmatmul.f32.gmra.mxu0 %v3818
        %v3966 = vpop.f32.mrf.mxu0
        %v3967 = vadd.f32 0.0, %v3966
        %3968 = vmatmul.f32.gmra.mxu0 %v3819
        %v3969 = vpop.f32.mrf.mxu0
        %v3970 = vadd.f32 0.0, %v3969
        %3971 = vmatmul.f32.gmra.mxu0 %v3820
        %v3972 = vpop.f32.mrf.mxu0
        %v3973 = vadd.f32 0.0, %v3972
        %3974 = vmatmul.f32.gmra.mxu0 %v3821
        %v3975 = vpop.f32.mrf.mxu0
        %v3976 = vadd.f32 0.0, %v3975
        %3977 = vmatmul.f32.gmra.mxu0 %v3822
        %v3978 = vpop.f32.mrf.mxu0
        %v3979 = vadd.f32 0.0, %v3978
        %3980 = vmatmul.f32.gmra.mxu0 %v3823
        %v3981 = vpop.f32.mrf.mxu0
        %v3982 = vadd.f32 0.0, %v3981
        %3983 = vmatmul.f32.gmra.mxu0 %v3824
        %v3984 = vpop.f32.mrf.mxu0
        %v3985 = vadd.f32 0.0, %v3984
        %3986 = vmatmul.f32.gmra.mxu0 %v3825
        %v3987 = vpop.f32.mrf.mxu0
        %v3988 = vadd.f32 0.0, %v3987
        %3989 = vmatmul.f32.gmra.mxu0 %v3826
        %v3990 = vpop.f32.mrf.mxu0
        %v3991 = vadd.f32 0.0, %v3990
        %3992 = vmatmul.f32.gmra.mxu0 %v3827
        %v3993 = vpop.f32.mrf.mxu0
        %v3994 = vadd.f32 0.0, %v3993
        %3995 = vmatmul.f32.gmra.mxu0 %v3828
        %v3996 = vpop.f32.mrf.mxu0
        %v3997 = vadd.f32 0.0, %v3996
        %3998 = vmatmul.f32.gmra.mxu0 %v3829
        %v3999 = vpop.f32.mrf.mxu0
        %v4000 = vadd.f32 0.0, %v3999
        %4001 = vmatmul.f32.gmra.mxu0 %v3830
        %v4002 = vpop.f32.mrf.mxu0
        %v4003 = vadd.f32 0.0, %v4002
        %4004 = vmatmul.f32.gmra.mxu0 %v3831
        %v4005 = vpop.f32.mrf.mxu0
        %v4006 = vadd.f32 0.0, %v4005
        %4007 = vmatmul.f32.gmra.mxu0 %v3832
        %v4008 = vpop.f32.mrf.mxu0
        %v4009 = vadd.f32 0.0, %v4008
        %4010 = vdwg.mxu0
        %4011 = vmatpush.msra.mxu0 %v3880
        %4012 = vmatpush.msra.mxu0 %v3879
        %4013 = vmatpush.msra.mxu0 %v3878
        %4014 = vmatpush.msra.mxu0 %v3877
        %4015 = vmatpush.msra.mxu0 %v3876
        %4016 = vmatpush.msra.mxu0 %v3875
        %4017 = vmatpush.msra.mxu0 %v3874
        %4018 = vmatpush.msra.mxu0 %v3873
        %4019 = vmatpush.msra.mxu0 %v3872
        %4020 = vmatpush.msra.mxu0 %v3871
        %4021 = vmatpush.msra.mxu0 %v3870
        %4022 = vmatpush.msra.mxu0 %v3869
        %4023 = vmatpush.msra.mxu0 %v3868
        %4024 = vmatpush.msra.mxu0 %v3867
        %4025 = vmatpush.msra.mxu0 %v3866
        %4026 = vmatpush.msra.mxu0 %v3865
        %4027 = vmatmul.f32.gmra.mxu0 %v3769
        %v4028 = vpop.f32.mrf.mxu0
        %v4029 = vadd.f32 %v3916, %v4028
        %4030 = vmatmul.f32.gmra.mxu0 %v3770
        %v4031 = vpop.f32.mrf.mxu0
        %v4032 = vadd.f32 %v3919, %v4031
        %4033 = vmatmul.f32.gmra.mxu0 %v3771
        %v4034 = vpop.f32.mrf.mxu0
        %v4035 = vadd.f32 %v3922, %v4034
        %4036 = vmatmul.f32.gmra.mxu0 %v3772
        %v4037 = vpop.f32.mrf.mxu0
        %v4038 = vadd.f32 %v3925, %v4037
        %4039 = vmatmul.f32.gmra.mxu0 %v3773
        %v4040 = vpop.f32.mrf.mxu0
        %v4041 = vadd.f32 %v3928, %v4040
        %4042 = vmatmul.f32.gmra.mxu0 %v3774
        %v4043 = vpop.f32.mrf.mxu0
        %v4044 = vadd.f32 %v3931, %v4043
        %4045 = vmatmul.f32.gmra.mxu0 %v3775
        %v4046 = vpop.f32.mrf.mxu0
        %v4047 = vadd.f32 %v3934, %v4046
        %4048 = vmatmul.f32.gmra.mxu0 %v3776
        %v4049 = vpop.f32.mrf.mxu0
        %v4050 = vadd.f32 %v3937, %v4049
        %4051 = vmatmul.f32.gmra.mxu0 %v3777
        %v4052 = vpop.f32.mrf.mxu0
        %v4053 = vadd.f32 %v3940, %v4052
        %4054 = vmatmul.f32.gmra.mxu0 %v3778
        %v4055 = vpop.f32.mrf.mxu0
        %v4056 = vadd.f32 %v3943, %v4055
        %4057 = vmatmul.f32.gmra.mxu0 %v3779
        %v4058 = vpop.f32.mrf.mxu0
        %v4059 = vadd.f32 %v3946, %v4058
        %4060 = vmatmul.f32.gmra.mxu0 %v3780
        %v4061 = vpop.f32.mrf.mxu0
        %v4062 = vadd.f32 %v3949, %v4061
        %4063 = vmatmul.f32.gmra.mxu0 %v3781
        %v4064 = vpop.f32.mrf.mxu0
        %v4065 = vadd.f32 %v3952, %v4064
        %4066 = vmatmul.f32.gmra.mxu0 %v3782
        %v4067 = vpop.f32.mrf.mxu0
        %v4068 = vadd.f32 %v3955, %v4067
        %4069 = vmatmul.f32.gmra.mxu0 %v3783
        %v4070 = vpop.f32.mrf.mxu0
        %v4071 = vadd.f32 %v3958, %v4070
        %4072 = vmatmul.f32.gmra.mxu0 %v3784
        %v4073 = vpop.f32.mrf.mxu0
        %v4074 = vadd.f32 %v3961, %v4073
        %4075 = vmatmul.f32.gmra.mxu0 %v3801
        %v4076 = vpop.f32.mrf.mxu0
        %v4077 = vadd.f32 %v3964, %v4076
        %4078 = vmatmul.f32.gmra.mxu0 %v3802
        %v4079 = vpop.f32.mrf.mxu0
        %v4080 = vadd.f32 %v3967, %v4079
        %4081 = vmatmul.f32.gmra.mxu0 %v3803
        %v4082 = vpop.f32.mrf.mxu0
        %v4083 = vadd.f32 %v3970, %v4082
        %4084 = vmatmul.f32.gmra.mxu0 %v3804
        %v4085 = vpop.f32.mrf.mxu0
        %v4086 = vadd.f32 %v3973, %v4085
        %4087 = vmatmul.f32.gmra.mxu0 %v3805
        %v4088 = vpop.f32.mrf.mxu0
        %v4089 = vadd.f32 %v3976, %v4088
        %4090 = vmatmul.f32.gmra.mxu0 %v3806
        %v4091 = vpop.f32.mrf.mxu0
        %v4092 = vadd.f32 %v3979, %v4091
        %4093 = vmatmul.f32.gmra.mxu0 %v3807
        %v4094 = vpop.f32.mrf.mxu0
        %v4095 = vadd.f32 %v3982, %v4094
        %4096 = vmatmul.f32.gmra.mxu0 %v3808
        %v4097 = vpop.f32.mrf.mxu0
        %v4098 = vadd.f32 %v3985, %v4097
        %4099 = vmatmul.f32.gmra.mxu0 %v3809
        %v4100 = vpop.f32.mrf.mxu0
        %v4101 = vadd.f32 %v3988, %v4100
        %4102 = vmatmul.f32.gmra.mxu0 %v3810
        %v4103 = vpop.f32.mrf.mxu0
        %v4104 = vadd.f32 %v3991, %v4103
        %4105 = vmatmul.f32.gmra.mxu0 %v3811
        %v4106 = vpop.f32.mrf.mxu0
        %v4107 = vadd.f32 %v3994, %v4106
        %4108 = vmatmul.f32.gmra.mxu0 %v3812
        %v4109 = vpop.f32.mrf.mxu0
        %v4110 = vadd.f32 %v3997, %v4109
        %4111 = vmatmul.f32.gmra.mxu0 %v3813
        %v4112 = vpop.f32.mrf.mxu0
        %v4113 = vadd.f32 %v4000, %v4112
        %4114 = vmatmul.f32.gmra.mxu0 %v3814
        %v4115 = vpop.f32.mrf.mxu0
        %v4116 = vadd.f32 %v4003, %v4115
        %4117 = vmatmul.f32.gmra.mxu0 %v3815
        %v4118 = vpop.f32.mrf.mxu0
        %v4119 = vadd.f32 %v4006, %v4118
        %4120 = vmatmul.f32.gmra.mxu0 %v3816
        %v4121 = vpop.f32.mrf.mxu0
        %v4122 = vadd.f32 %v4009, %v4121
        %4123 = vdwg.mxu0
        %s4124 = scalar_lea.vmem %s3, 256
        %v4125 = vld [vmem:[%s4124] sm:$0xff]
        %v4126 = vld [vmem:[%s4124 + $0x8] sm:$0xff]
        %v4127 = vld [vmem:[%s4124 + $0x10] sm:$0xff]
        %v4128 = vld [vmem:[%s4124 + $0x18] sm:$0xff]
        %v4129 = vld [vmem:[%s4124 + $0x20] sm:$0xff]
        %v4130 = vld [vmem:[%s4124 + $0x28] sm:$0xff]
        %v4131 = vld [vmem:[%s4124 + $0x30] sm:$0xff]
        %v4132 = vld [vmem:[%s4124 + $0x38] sm:$0xff]
        %v4133 = vld [vmem:[%s4124 + $0x40] sm:$0xff]
        %v4134 = vld [vmem:[%s4124 + $0x48] sm:$0xff]
        %v4135 = vld [vmem:[%s4124 + $0x50] sm:$0xff]
        %v4136 = vld [vmem:[%s4124 + $0x58] sm:$0xff]
        %v4137 = vld [vmem:[%s4124 + $0x60] sm:$0xff]
        %v4138 = vld [vmem:[%s4124 + $0x68] sm:$0xff]
        %v4139 = vld [vmem:[%s4124 + $0x70] sm:$0xff]
        %v4140 = vld [vmem:[%s4124 + $0x78] sm:$0xff]
        %4141 = vmatpush.msra.mxu0 %v4140
        %4142 = vmatpush.msra.mxu0 %v4139
        %4143 = vmatpush.msra.mxu0 %v4138
        %4144 = vmatpush.msra.mxu0 %v4137
        %4145 = vmatpush.msra.mxu0 %v4136
        %4146 = vmatpush.msra.mxu0 %v4135
        %4147 = vmatpush.msra.mxu0 %v4134
        %4148 = vmatpush.msra.mxu0 %v4133
        %4149 = vmatpush.msra.mxu0 %v4132
        %4150 = vmatpush.msra.mxu0 %v4131
        %4151 = vmatpush.msra.mxu0 %v4130
        %4152 = vmatpush.msra.mxu0 %v4129
        %4153 = vmatpush.msra.mxu0 %v4128
        %4154 = vmatpush.msra.mxu0 %v4127
        %4155 = vmatpush.msra.mxu0 %v4126
        %4156 = vmatpush.msra.mxu0 %v4125
        %4157 = vmatmul.f32.gmra.mxu0 %v3801
        %v4158 = vpop.f32.mrf.mxu0
        %v4159 = vadd.f32 0.0, %v4158
        %4160 = vmatmul.f32.gmra.mxu0 %v3802
        %v4161 = vpop.f32.mrf.mxu0
        %v4162 = vadd.f32 0.0, %v4161
        %4163 = vmatmul.f32.gmra.mxu0 %v3803
        %v4164 = vpop.f32.mrf.mxu0
        %v4165 = vadd.f32 0.0, %v4164
        %4166 = vmatmul.f32.gmra.mxu0 %v3804
        %v4167 = vpop.f32.mrf.mxu0
        %v4168 = vadd.f32 0.0, %v4167
        %4169 = vmatmul.f32.gmra.mxu0 %v3805
        %v4170 = vpop.f32.mrf.mxu0
        %v4171 = vadd.f32 0.0, %v4170
        %4172 = vmatmul.f32.gmra.mxu0 %v3806
        %v4173 = vpop.f32.mrf.mxu0
        %v4174 = vadd.f32 0.0, %v4173
        %4175 = vmatmul.f32.gmra.mxu0 %v3807
        %v4176 = vpop.f32.mrf.mxu0
        %v4177 = vadd.f32 0.0, %v4176
        %4178 = vmatmul.f32.gmra.mxu0 %v3808
        %v4179 = vpop.f32.mrf.mxu0
        %v4180 = vadd.f32 0.0, %v4179
        %4181 = vmatmul.f32.gmra.mxu0 %v3809
        %v4182 = vpop.f32.mrf.mxu0
        %v4183 = vadd.f32 0.0, %v4182
        %4184 = vmatmul.f32.gmra.mxu0 %v3810
        %v4185 = vpop.f32.mrf.mxu0
        %v4186 = vadd.f32 0.0, %v4185
        %4187 = vmatmul.f32.gmra.mxu0 %v3811
        %v4188 = vpop.f32.mrf.mxu0
        %v4189 = vadd.f32 0.0, %v4188
        %4190 = vmatmul.f32.gmra.mxu0 %v3812
        %v4191 = vpop.f32.mrf.mxu0
        %v4192 = vadd.f32 0.0, %v4191
        %4193 = vmatmul.f32.gmra.mxu0 %v3813
        %v4194 = vpop.f32.mrf.mxu0
        %v4195 = vadd.f32 0.0, %v4194
        %4196 = vmatmul.f32.gmra.mxu0 %v3814
        %v4197 = vpop.f32.mrf.mxu0
        %v4198 = vadd.f32 0.0, %v4197
        %4199 = vmatmul.f32.gmra.mxu0 %v3815
        %v4200 = vpop.f32.mrf.mxu0
        %v4201 = vadd.f32 0.0, %v4200
        %4202 = vmatmul.f32.gmra.mxu0 %v3816
        %v4203 = vpop.f32.mrf.mxu0
        %v4204 = vadd.f32 0.0, %v4203
        %4205 = vmatmul.f32.gmra.mxu0 %v3833
        %v4206 = vpop.f32.mrf.mxu0
        %v4207 = vadd.f32 0.0, %v4206
        %4208 = vmatmul.f32.gmra.mxu0 %v3834
        %v4209 = vpop.f32.mrf.mxu0
        %v4210 = vadd.f32 0.0, %v4209
        %4211 = vmatmul.f32.gmra.mxu0 %v3835
        %v4212 = vpop.f32.mrf.mxu0
        %v4213 = vadd.f32 0.0, %v4212
        %4214 = vmatmul.f32.gmra.mxu0 %v3836
        %v4215 = vpop.f32.mrf.mxu0
        %v4216 = vadd.f32 0.0, %v4215
        %4217 = vmatmul.f32.gmra.mxu0 %v3837
        %v4218 = vpop.f32.mrf.mxu0
        %v4219 = vadd.f32 0.0, %v4218
        %4220 = vmatmul.f32.gmra.mxu0 %v3838
        %v4221 = vpop.f32.mrf.mxu0
        %v4222 = vadd.f32 0.0, %v4221
        %4223 = vmatmul.f32.gmra.mxu0 %v3839
        %v4224 = vpop.f32.mrf.mxu0
        %v4225 = vadd.f32 0.0, %v4224
        %4226 = vmatmul.f32.gmra.mxu0 %v3840
        %v4227 = vpop.f32.mrf.mxu0
        %v4228 = vadd.f32 0.0, %v4227
        %4229 = vmatmul.f32.gmra.mxu0 %v3841
        %v4230 = vpop.f32.mrf.mxu0
        %v4231 = vadd.f32 0.0, %v4230
        %4232 = vmatmul.f32.gmra.mxu0 %v3842
        %v4233 = vpop.f32.mrf.mxu0
        %v4234 = vadd.f32 0.0, %v4233
        %4235 = vmatmul.f32.gmra.mxu0 %v3843
        %v4236 = vpop.f32.mrf.mxu0
        %v4237 = vadd.f32 0.0, %v4236
        %4238 = vmatmul.f32.gmra.mxu0 %v3844
        %v4239 = vpop.f32.mrf.mxu0
        %v4240 = vadd.f32 0.0, %v4239
        %4241 = vmatmul.f32.gmra.mxu0 %v3845
        %v4242 = vpop.f32.mrf.mxu0
        %v4243 = vadd.f32 0.0, %v4242
        %4244 = vmatmul.f32.gmra.mxu0 %v3846
        %v4245 = vpop.f32.mrf.mxu0
        %v4246 = vadd.f32 0.0, %v4245
        %4247 = vmatmul.f32.gmra.mxu0 %v3847
        %v4248 = vpop.f32.mrf.mxu0
        %v4249 = vadd.f32 0.0, %v4248
        %4250 = vmatmul.f32.gmra.mxu0 %v3848
        %v4251 = vpop.f32.mrf.mxu0
        %v4252 = vadd.f32 0.0, %v4251
        %4253 = vdwg.mxu0
        %v4254 = vadd.f32 %v4029, %v4159
        %v4255 = vadd.f32 %v4032, %v4162
        %v4256 = vadd.f32 %v4035, %v4165
        %v4257 = vadd.f32 %v4038, %v4168
        %v4258 = vadd.f32 %v4041, %v4171
        %v4259 = vadd.f32 %v4044, %v4174
        %v4260 = vadd.f32 %v4047, %v4177
        %v4261 = vadd.f32 %v4050, %v4180
        %v4262 = vadd.f32 %v4053, %v4183
        %v4263 = vadd.f32 %v4056, %v4186
        %v4264 = vadd.f32 %v4059, %v4189
        %v4265 = vadd.f32 %v4062, %v4192
        %v4266 = vadd.f32 %v4065, %v4195
        %v4267 = vadd.f32 %v4068, %v4198
        %v4268 = vadd.f32 %v4071, %v4201
        %v4269 = vadd.f32 %v4074, %v4204
        %v4270 = vadd.f32 %v4077, %v4207
        %v4271 = vadd.f32 %v4080, %v4210
        %v4272 = vadd.f32 %v4083, %v4213
        %v4273 = vadd.f32 %v4086, %v4216
        %v4274 = vadd.f32 %v4089, %v4219
        %v4275 = vadd.f32 %v4092, %v4222
        %v4276 = vadd.f32 %v4095, %v4225
        %v4277 = vadd.f32 %v4098, %v4228
        %v4278 = vadd.f32 %v4101, %v4231
        %v4279 = vadd.f32 %v4104, %v4234
        %v4280 = vadd.f32 %v4107, %v4237
        %v4281 = vadd.f32 %v4110, %v4240
        %v4282 = vadd.f32 %v4113, %v4243
        %v4283 = vadd.f32 %v4116, %v4246
        %v4284 = vadd.f32 %v4119, %v4249
        %v4285 = vadd.f32 %v4122, %v4252
        %s4286 = scalar_lea.vmem %s3, 384
        %v4287 = vld [vmem:[%s4286] sm:$0xff]
        %v4288 = vld [vmem:[%s4286 + $0x8] sm:$0xff]
        %v4289 = vld [vmem:[%s4286 + $0x10] sm:$0xff]
        %v4290 = vld [vmem:[%s4286 + $0x18] sm:$0xff]
        %v4291 = vld [vmem:[%s4286 + $0x20] sm:$0xff]
        %v4292 = vld [vmem:[%s4286 + $0x28] sm:$0xff]
        %v4293 = vld [vmem:[%s4286 + $0x30] sm:$0xff]
        %v4294 = vld [vmem:[%s4286 + $0x38] sm:$0xff]
        %v4295 = vld [vmem:[%s4286 + $0x40] sm:$0xff]
        %v4296 = vld [vmem:[%s4286 + $0x48] sm:$0xff]
        %v4297 = vld [vmem:[%s4286 + $0x50] sm:$0xff]
        %v4298 = vld [vmem:[%s4286 + $0x58] sm:$0xff]
        %v4299 = vld [vmem:[%s4286 + $0x60] sm:$0xff]
        %v4300 = vld [vmem:[%s4286 + $0x68] sm:$0xff]
        %v4301 = vld [vmem:[%s4286 + $0x70] sm:$0xff]
        %v4302 = vld [vmem:[%s4286 + $0x78] sm:$0xff]
        %4303 = vmatpush.msra.mxu0 %v4302
        %4304 = vmatpush.msra.mxu0 %v4301
        %4305 = vmatpush.msra.mxu0 %v4300
        %4306 = vmatpush.msra.mxu0 %v4299
        %4307 = vmatpush.msra.mxu0 %v4298
        %4308 = vmatpush.msra.mxu0 %v4297
        %4309 = vmatpush.msra.mxu0 %v4296
        %4310 = vmatpush.msra.mxu0 %v4295
        %4311 = vmatpush.msra.mxu0 %v4294
        %4312 = vmatpush.msra.mxu0 %v4293
        %4313 = vmatpush.msra.mxu0 %v4292
        %4314 = vmatpush.msra.mxu0 %v4291
        %4315 = vmatpush.msra.mxu0 %v4290
        %4316 = vmatpush.msra.mxu0 %v4289
        %4317 = vmatpush.msra.mxu0 %v4288
        %4318 = vmatpush.msra.mxu0 %v4287
        %4319 = vmatmul.f32.gmra.mxu0 %v3817
        %v4320 = vpop.f32.mrf.mxu0
        %v4321 = vadd.f32 0.0, %v4320
        %4322 = vmatmul.f32.gmra.mxu0 %v3818
        %v4323 = vpop.f32.mrf.mxu0
        %v4324 = vadd.f32 0.0, %v4323
        %4325 = vmatmul.f32.gmra.mxu0 %v3819
        %v4326 = vpop.f32.mrf.mxu0
        %v4327 = vadd.f32 0.0, %v4326
        %4328 = vmatmul.f32.gmra.mxu0 %v3820
        %v4329 = vpop.f32.mrf.mxu0
        %v4330 = vadd.f32 0.0, %v4329
        %4331 = vmatmul.f32.gmra.mxu0 %v3821
        %v4332 = vpop.f32.mrf.mxu0
        %v4333 = vadd.f32 0.0, %v4332
        %4334 = vmatmul.f32.gmra.mxu0 %v3822
        %v4335 = vpop.f32.mrf.mxu0
        %v4336 = vadd.f32 0.0, %v4335
        %4337 = vmatmul.f32.gmra.mxu0 %v3823
        %v4338 = vpop.f32.mrf.mxu0
        %v4339 = vadd.f32 0.0, %v4338
        %4340 = vmatmul.f32.gmra.mxu0 %v3824
        %v4341 = vpop.f32.mrf.mxu0
        %v4342 = vadd.f32 0.0, %v4341
        %4343 = vmatmul.f32.gmra.mxu0 %v3825
        %v4344 = vpop.f32.mrf.mxu0
        %v4345 = vadd.f32 0.0, %v4344
        %4346 = vmatmul.f32.gmra.mxu0 %v3826
        %v4347 = vpop.f32.mrf.mxu0
        %v4348 = vadd.f32 0.0, %v4347
        %4349 = vmatmul.f32.gmra.mxu0 %v3827
        %v4350 = vpop.f32.mrf.mxu0
        %v4351 = vadd.f32 0.0, %v4350
        %4352 = vmatmul.f32.gmra.mxu0 %v3828
        %v4353 = vpop.f32.mrf.mxu0
        %v4354 = vadd.f32 0.0, %v4353
        %4355 = vmatmul.f32.gmra.mxu0 %v3829
        %v4356 = vpop.f32.mrf.mxu0
        %v4357 = vadd.f32 0.0, %v4356
        %4358 = vmatmul.f32.gmra.mxu0 %v3830
        %v4359 = vpop.f32.mrf.mxu0
        %v4360 = vadd.f32 0.0, %v4359
        %4361 = vmatmul.f32.gmra.mxu0 %v3831
        %v4362 = vpop.f32.mrf.mxu0
        %v4363 = vadd.f32 0.0, %v4362
        %4364 = vmatmul.f32.gmra.mxu0 %v3832
        %v4365 = vpop.f32.mrf.mxu0
        %v4366 = vadd.f32 0.0, %v4365
        %4367 = vmatmul.f32.gmra.mxu0 %v3849
        %v4368 = vpop.f32.mrf.mxu0
        %v4369 = vadd.f32 0.0, %v4368
        %4370 = vmatmul.f32.gmra.mxu0 %v3850
        %v4371 = vpop.f32.mrf.mxu0
        %v4372 = vadd.f32 0.0, %v4371
        %4373 = vmatmul.f32.gmra.mxu0 %v3851
        %v4374 = vpop.f32.mrf.mxu0
        %v4375 = vadd.f32 0.0, %v4374
        %4376 = vmatmul.f32.gmra.mxu0 %v3852
        %v4377 = vpop.f32.mrf.mxu0
        %v4378 = vadd.f32 0.0, %v4377
        %4379 = vmatmul.f32.gmra.mxu0 %v3853
        %v4380 = vpop.f32.mrf.mxu0
        %v4381 = vadd.f32 0.0, %v4380
        %4382 = vmatmul.f32.gmra.mxu0 %v3854
        %v4383 = vpop.f32.mrf.mxu0
        %v4384 = vadd.f32 0.0, %v4383
        %4385 = vmatmul.f32.gmra.mxu0 %v3855
        %v4386 = vpop.f32.mrf.mxu0
        %v4387 = vadd.f32 0.0, %v4386
        %4388 = vmatmul.f32.gmra.mxu0 %v3856
        %v4389 = vpop.f32.mrf.mxu0
        %v4390 = vadd.f32 0.0, %v4389
        %4391 = vmatmul.f32.gmra.mxu0 %v3857
        %v4392 = vpop.f32.mrf.mxu0
        %v4393 = vadd.f32 0.0, %v4392
        %4394 = vmatmul.f32.gmra.mxu0 %v3858
        %v4395 = vpop.f32.mrf.mxu0
        %v4396 = vadd.f32 0.0, %v4395
        %4397 = vmatmul.f32.gmra.mxu0 %v3859
        %v4398 = vpop.f32.mrf.mxu0
        %v4399 = vadd.f32 0.0, %v4398
        %4400 = vmatmul.f32.gmra.mxu0 %v3860
        %v4401 = vpop.f32.mrf.mxu0
        %v4402 = vadd.f32 0.0, %v4401
        %4403 = vmatmul.f32.gmra.mxu0 %v3861
        %v4404 = vpop.f32.mrf.mxu0
        %v4405 = vadd.f32 0.0, %v4404
        %4406 = vmatmul.f32.gmra.mxu0 %v3862
        %v4407 = vpop.f32.mrf.mxu0
        %v4408 = vadd.f32 0.0, %v4407
        %4409 = vmatmul.f32.gmra.mxu0 %v3863
        %v4410 = vpop.f32.mrf.mxu0
        %v4411 = vadd.f32 0.0, %v4410
        %4412 = vmatmul.f32.gmra.mxu0 %v3864
        %v4413 = vpop.f32.mrf.mxu0
        %v4414 = vadd.f32 0.0, %v4413
        %4415 = vdwg.mxu0
        %v4416 = vadd.f32 %v4254, %v4321
        %v4417 = vadd.f32 %v4255, %v4324
        %v4418 = vadd.f32 %v4256, %v4327
        %v4419 = vadd.f32 %v4257, %v4330
        %v4420 = vadd.f32 %v4258, %v4333
        %v4421 = vadd.f32 %v4259, %v4336
        %v4422 = vadd.f32 %v4260, %v4339
        %v4423 = vadd.f32 %v4261, %v4342
        %v4424 = vadd.f32 %v4262, %v4345
        %v4425 = vadd.f32 %v4263, %v4348
        %v4426 = vadd.f32 %v4264, %v4351
        %v4427 = vadd.f32 %v4265, %v4354
        %v4428 = vadd.f32 %v4266, %v4357
        %v4429 = vadd.f32 %v4267, %v4360
        %v4430 = vadd.f32 %v4268, %v4363
        %v4431 = vadd.f32 %v4269, %v4366
        %v4432 = vadd.f32 %v4270, %v4369
        %v4433 = vadd.f32 %v4271, %v4372
        %v4434 = vadd.f32 %v4272, %v4375
        %v4435 = vadd.f32 %v4273, %v4378
        %v4436 = vadd.f32 %v4274, %v4381
        %v4437 = vadd.f32 %v4275, %v4384
        %v4438 = vadd.f32 %v4276, %v4387
        %v4439 = vadd.f32 %v4277, %v4390
        %v4440 = vadd.f32 %v4278, %v4393
        %v4441 = vadd.f32 %v4279, %v4396
        %v4442 = vadd.f32 %v4280, %v4399
        %v4443 = vadd.f32 %v4281, %v4402
        %v4444 = vadd.f32 %v4282, %v4405
        %v4445 = vadd.f32 %v4283, %v4408
        %v4446 = vadd.f32 %v4284, %v4411
        %v4447 = vadd.f32 %v4285, %v4414
        %v4448 = vld [vmem:[%s4] sm:$0x1]
        %v4450 = vperm.slane %v4448, 0
        %v4452 = vadd.f32 %v4416, %v4450
        %v4453 = vadd.f32 %v4417, %v4450
        %v4454 = vadd.f32 %v4418, %v4450
        %v4455 = vadd.f32 %v4419, %v4450
        %v4456 = vadd.f32 %v4420, %v4450
        %v4457 = vadd.f32 %v4421, %v4450
        %v4458 = vadd.f32 %v4422, %v4450
        %v4459 = vadd.f32 %v4423, %v4450
        %v4460 = vadd.f32 %v4424, %v4450
        %v4461 = vadd.f32 %v4425, %v4450
        %v4462 = vadd.f32 %v4426, %v4450
        %v4463 = vadd.f32 %v4427, %v4450
        %v4464 = vadd.f32 %v4428, %v4450
        %v4465 = vadd.f32 %v4429, %v4450
        %v4466 = vadd.f32 %v4430, %v4450
        %v4467 = vadd.f32 %v4431, %v4450
        %v4468 = vadd.f32 %v4432, %v4450
        %v4469 = vadd.f32 %v4433, %v4450
        %v4470 = vadd.f32 %v4434, %v4450
        %v4471 = vadd.f32 %v4435, %v4450
        %v4472 = vadd.f32 %v4436, %v4450
        %v4473 = vadd.f32 %v4437, %v4450
        %v4474 = vadd.f32 %v4438, %v4450
        %v4475 = vadd.f32 %v4439, %v4450
        %v4476 = vadd.f32 %v4440, %v4450
        %v4477 = vadd.f32 %v4441, %v4450
        %v4478 = vadd.f32 %v4442, %v4450
        %v4479 = vadd.f32 %v4443, %v4450
        %v4480 = vadd.f32 %v4444, %v4450
        %v4481 = vadd.f32 %v4445, %v4450
        %v4482 = vadd.f32 %v4446, %v4450
        %v4483 = vadd.f32 %v4447, %v4450
        %v4484 = vmax.f32 %v4452, 0.0
        %v4485 = vmax.f32 %v4453, 0.0
        %v4486 = vmax.f32 %v4454, 0.0
        %v4487 = vmax.f32 %v4455, 0.0
        %v4488 = vmax.f32 %v4456, 0.0
        %v4489 = vmax.f32 %v4457, 0.0
        %v4490 = vmax.f32 %v4458, 0.0
        %v4491 = vmax.f32 %v4459, 0.0
        %v4492 = vmax.f32 %v4460, 0.0
        %v4493 = vmax.f32 %v4461, 0.0
        %v4494 = vmax.f32 %v4462, 0.0
        %v4495 = vmax.f32 %v4463, 0.0
        %v4496 = vmax.f32 %v4464, 0.0
        %v4497 = vmax.f32 %v4465, 0.0
        %v4498 = vmax.f32 %v4466, 0.0
        %v4499 = vmax.f32 %v4467, 0.0
        %v4500 = vmax.f32 %v4468, 0.0
        %v4501 = vmax.f32 %v4469, 0.0
        %v4502 = vmax.f32 %v4470, 0.0
        %v4503 = vmax.f32 %v4471, 0.0
        %v4504 = vmax.f32 %v4472, 0.0
        %v4505 = vmax.f32 %v4473, 0.0
        %v4506 = vmax.f32 %v4474, 0.0
        %v4507 = vmax.f32 %v4475, 0.0
        %v4508 = vmax.f32 %v4476, 0.0
        %v4509 = vmax.f32 %v4477, 0.0
        %v4510 = vmax.f32 %v4478, 0.0
        %v4511 = vmax.f32 %v4479, 0.0
        %v4512 = vmax.f32 %v4480, 0.0
        %v4513 = vmax.f32 %v4481, 0.0
        %v4514 = vmax.f32 %v4482, 0.0
        %v4515 = vmax.f32 %v4483, 0.0
        %4532 = vrot.lane.b32.xlu0 %v4500, 64
        %v4533 = vpop.permute.xlu0 %4532
        %4534 = vrot.lane.b32.xlu0 %v4501, 64
        %v4535 = vpop.permute.xlu0 %4534
        %4536 = vrot.lane.b32.xlu0 %v4502, 64
        %v4537 = vpop.permute.xlu0 %4536
        %4538 = vrot.lane.b32.xlu0 %v4503, 64
        %v4539 = vpop.permute.xlu0 %4538
        %4540 = vrot.lane.b32.xlu0 %v4504, 64
        %v4541 = vpop.permute.xlu0 %4540
        %4542 = vrot.lane.b32.xlu0 %v4505, 64
        %v4543 = vpop.permute.xlu0 %4542
        %4544 = vrot.lane.b32.xlu0 %v4506, 64
        %v4545 = vpop.permute.xlu0 %4544
        %4546 = vrot.lane.b32.xlu0 %v4507, 64
        %v4547 = vpop.permute.xlu0 %4546
        %4548 = vrot.lane.b32.xlu0 %v4508, 64
        %v4549 = vpop.permute.xlu0 %4548
        %4550 = vrot.lane.b32.xlu0 %v4509, 64
        %v4551 = vpop.permute.xlu0 %4550
        %4552 = vrot.lane.b32.xlu0 %v4510, 64
        %v4553 = vpop.permute.xlu0 %4552
        %4554 = vrot.lane.b32.xlu0 %v4511, 64
        %v4555 = vpop.permute.xlu0 %4554
        %4556 = vrot.lane.b32.xlu0 %v4512, 64
        %v4557 = vpop.permute.xlu0 %4556
        %4558 = vrot.lane.b32.xlu0 %v4513, 64
        %v4559 = vpop.permute.xlu0 %4558
        %4560 = vrot.lane.b32.xlu0 %v4514, 64
        %v4561 = vpop.permute.xlu0 %4560
        %4562 = vrot.lane.b32.xlu0 %v4515, 64
        %v4563 = vpop.permute.xlu0 %4562
        %vm4580 = vcmask 523264
        %v4581 = vsel %vm4580, %v4484, %v4533
        %v4582 = vsel %vm4580, %v4485, %v4535
        %v4583 = vsel %vm4580, %v4486, %v4537
        %v4584 = vsel %vm4580, %v4487, %v4539
        %v4585 = vsel %vm4580, %v4488, %v4541
        %v4586 = vsel %vm4580, %v4489, %v4543
        %v4587 = vsel %vm4580, %v4490, %v4545
        %v4588 = vsel %vm4580, %v4491, %v4547
        %v4589 = vsel %vm4580, %v4492, %v4549
        %v4590 = vsel %vm4580, %v4493, %v4551
        %v4591 = vsel %vm4580, %v4494, %v4553
        %v4592 = vsel %vm4580, %v4495, %v4555
        %v4593 = vsel %vm4580, %v4496, %v4557
        %v4594 = vsel %vm4580, %v4497, %v4559
        %v4595 = vsel %vm4580, %v4498, %v4561
        %v4596 = vsel %vm4580, %v4499, %v4563
        %v4597 = vld [vmem:[%s5] sm:$0xff]
        %v4598 = vld [vmem:[%s5 + $0x8] sm:$0xff]
        %v4599 = vld [vmem:[%s5 + $0x10] sm:$0xff]
        %v4600 = vld [vmem:[%s5 + $0x18] sm:$0xff]
        %v4601 = vld [vmem:[%s5 + $0x20] sm:$0xff]
        %v4602 = vld [vmem:[%s5 + $0x28] sm:$0xff]
        %v4603 = vld [vmem:[%s5 + $0x30] sm:$0xff]
        %v4604 = vld [vmem:[%s5 + $0x38] sm:$0xff]
        %v4605 = vld [vmem:[%s5 + $0x40] sm:$0xff]
        %v4606 = vld [vmem:[%s5 + $0x48] sm:$0xff]
        %v4607 = vld [vmem:[%s5 + $0x50] sm:$0xff]
        %v4608 = vld [vmem:[%s5 + $0x58] sm:$0xff]
        %v4609 = vld [vmem:[%s5 + $0x60] sm:$0xff]
        %v4610 = vld [vmem:[%s5 + $0x68] sm:$0xff]
        %v4611 = vld [vmem:[%s5 + $0x70] sm:$0xff]
        %v4612 = vld [vmem:[%s5 + $0x78] sm:$0xff]
        %v4613 = vld [vmem:[%s6] sm:$0x1]
        %v4615 = vperm.slane %v4613, 0
        %4617 = vmatpush.msra.mxu0 %v4612
        %4618 = vmatpush.msra.mxu0 %v4611
        %4619 = vmatpush.msra.mxu0 %v4610
        %4620 = vmatpush.msra.mxu0 %v4609
        %4621 = vmatpush.msra.mxu0 %v4608
        %4622 = vmatpush.msra.mxu0 %v4607
        %4623 = vmatpush.msra.mxu0 %v4606
        %4624 = vmatpush.msra.mxu0 %v4605
        %4625 = vmatpush.msra.mxu0 %v4604
        %4626 = vmatpush.msra.mxu0 %v4603
        %4627 = vmatpush.msra.mxu0 %v4602
        %4628 = vmatpush.msra.mxu0 %v4601
        %4629 = vmatpush.msra.mxu0 %v4600
        %4630 = vmatpush.msra.mxu0 %v4599
        %4631 = vmatpush.msra.mxu0 %v4598
        %4632 = vmatpush.msra.mxu0 %v4597
        %4633 = vmatmul.f32.gmra.mxu0 %v4581
        %v4634 = vpop.f32.mrf.mxu0
        %v4635 = vadd.f32 %v4615, %v4634
        %4636 = vmatmul.f32.gmra.mxu0 %v4582
        %v4637 = vpop.f32.mrf.mxu0
        %v4638 = vadd.f32 %v4615, %v4637
        %4639 = vmatmul.f32.gmra.mxu0 %v4583
        %v4640 = vpop.f32.mrf.mxu0
        %v4641 = vadd.f32 %v4615, %v4640
        %4642 = vmatmul.f32.gmra.mxu0 %v4584
        %v4643 = vpop.f32.mrf.mxu0
        %v4644 = vadd.f32 %v4615, %v4643
        %4645 = vmatmul.f32.gmra.mxu0 %v4585
        %v4646 = vpop.f32.mrf.mxu0
        %v4647 = vadd.f32 %v4615, %v4646
        %4648 = vmatmul.f32.gmra.mxu0 %v4586
        %v4649 = vpop.f32.mrf.mxu0
        %v4650 = vadd.f32 %v4615, %v4649
        %4651 = vmatmul.f32.gmra.mxu0 %v4587
        %v4652 = vpop.f32.mrf.mxu0
        %v4653 = vadd.f32 %v4615, %v4652
        %4654 = vmatmul.f32.gmra.mxu0 %v4588
        %v4655 = vpop.f32.mrf.mxu0
        %v4656 = vadd.f32 %v4615, %v4655
        %4657 = vmatmul.f32.gmra.mxu0 %v4589
        %v4658 = vpop.f32.mrf.mxu0
        %v4659 = vadd.f32 %v4615, %v4658
        %4660 = vmatmul.f32.gmra.mxu0 %v4590
        %v4661 = vpop.f32.mrf.mxu0
        %v4662 = vadd.f32 %v4615, %v4661
        %4663 = vmatmul.f32.gmra.mxu0 %v4591
        %v4664 = vpop.f32.mrf.mxu0
        %v4665 = vadd.f32 %v4615, %v4664
        %4666 = vmatmul.f32.gmra.mxu0 %v4592
        %v4667 = vpop.f32.mrf.mxu0
        %v4668 = vadd.f32 %v4615, %v4667
        %4669 = vmatmul.f32.gmra.mxu0 %v4593
        %v4670 = vpop.f32.mrf.mxu0
        %v4671 = vadd.f32 %v4615, %v4670
        %4672 = vmatmul.f32.gmra.mxu0 %v4594
        %v4673 = vpop.f32.mrf.mxu0
        %v4674 = vadd.f32 %v4615, %v4673
        %4675 = vmatmul.f32.gmra.mxu0 %v4595
        %v4676 = vpop.f32.mrf.mxu0
        %v4677 = vadd.f32 %v4615, %v4676
        %4678 = vmatmul.f32.gmra.mxu0 %v4596
        %v4679 = vpop.f32.mrf.mxu0
        %v4680 = vadd.f32 %v4615, %v4679
        %4681 = vdwg.mxu0
        %v4682 = vmax.f32 %v4635, 0.0
        %v4683 = vmax.f32 %v4638, 0.0
        %v4684 = vmax.f32 %v4641, 0.0
        %v4685 = vmax.f32 %v4644, 0.0
        %v4686 = vmax.f32 %v4647, 0.0
        %v4687 = vmax.f32 %v4650, 0.0
        %v4688 = vmax.f32 %v4653, 0.0
        %v4689 = vmax.f32 %v4656, 0.0
        %v4690 = vmax.f32 %v4659, 0.0
        %v4691 = vmax.f32 %v4662, 0.0
        %v4692 = vmax.f32 %v4665, 0.0
        %v4693 = vmax.f32 %v4668, 0.0
        %v4694 = vmax.f32 %v4671, 0.0
        %v4695 = vmax.f32 %v4674, 0.0
        %v4696 = vmax.f32 %v4677, 0.0
        %v4697 = vmax.f32 %v4680, 0.0
        %v4698 = vld [vmem:[%s7] sm:$0x1]
        %v4699 = vld [vmem:[#allocation2] sm:$0x1]
        %4701 = vset.pattern.permute.xlu0 0
        %4702 = vperm.xlu0 %4701, %v4699
        %v4703 = vpop.permute.xlu0 %4702
        %v4705 = vperm.slane %v4703, 0
        %v4707 = vsel %vm4580, %v4698, 0
        %v4710 = vsel %vm4580, %v4682, 0
        %v4713 = vsel %vm4580, %v4683, 0
        %v4716 = vsel %vm4580, %v4684, 0
        %v4719 = vsel %vm4580, %v4685, 0
        %v4722 = vsel %vm4580, %v4686, 0
        %v4725 = vsel %vm4580, %v4687, 0
        %v4728 = vsel %vm4580, %v4688, 0
        %v4731 = vsel %vm4580, %v4689, 0
        %v4734 = vsel %vm4580, %v4690, 0
        %v4737 = vsel %vm4580, %v4691, 0
        %v4740 = vsel %vm4580, %v4692, 0
        %v4743 = vsel %vm4580, %v4693, 0
        %v4746 = vsel %vm4580, %v4694, 0
        %v4749 = vsel %vm4580, %v4695, 0
        %v4752 = vsel %vm4580, %v4696, 0
        %v4755 = vsel %vm4580, %v4697, 0
        %4757 = vmatpush.xpose.msra.mxu0 %v4755
        %4758 = vmatpush.xpose.msra.mxu0 %v4752
        %4759 = vmatpush.xpose.msra.mxu0 %v4749
        %4760 = vmatpush.xpose.msra.mxu0 %v4746
        %4761 = vmatpush.xpose.msra.mxu0 %v4743
        %4762 = vmatpush.xpose.msra.mxu0 %v4740
        %4763 = vmatpush.xpose.msra.mxu0 %v4737
        %4764 = vmatpush.xpose.msra.mxu0 %v4734
        %4765 = vmatpush.xpose.msra.mxu0 %v4731
        %4766 = vmatpush.xpose.msra.mxu0 %v4728
        %4767 = vmatpush.xpose.msra.mxu0 %v4725
        %4768 = vmatpush.xpose.msra.mxu0 %v4722
        %4769 = vmatpush.xpose.msra.mxu0 %v4719
        %4770 = vmatpush.xpose.msra.mxu0 %v4716
        %4771 = vmatpush.xpose.msra.mxu0 %v4713
        %4772 = vmatpush.xpose.msra.mxu0 %v4710
        %4773 = vmatmul.f32.gmra.mxu0 %v4707
        %v4774 = vpop.f32.mrf.mxu0
        %v4775 = vadd.f32 %v4705, %v4774
        %4776 = vdwg.mxu0
        %4777 = vst [vmem:[%s326] sm:$0x1] %v4775
        %s4778 = sand.u32 %s227, 1
        %s4779 = scalar_lea.sflag [#allocation4], %s4778
        %s4780 = sand.u32 %s227, 1
        %s4781 = scalar_lea.vmem [#allocation3], %s4780
        // Predicated region
        $region57: #{critic_forward.1} parent=55 // pred_check
          %p4782 = pneg %p237
        $region58: #{critic_forward.1} parent=55 // pred_check_branch
          %4784 = sbr.rel (%p4782) target = $region60
        $region59: #{critic_forward.1} parent=55 // pred_region
          %4786 = vsyncadd %s4779, 0
          %s4787 = scalar_lea.hbm %s9, %s25
          %s4789 = sshll.u32 %s4781, 4
          %s4790 = int_to_ptr.vmem [resolvable:$true] %s4789
          %s4791 = sshll.u32 %s4787, 4
          %s4792 = int_to_ptr.hbm [resolvable:$true] %s4791
          %4794 = dma.vmem_to_hbm [thread:$0]  %s4790, 16, %s4792, %s4779
        $region60: #{critic_forward.1} parent=55 // pred_fallthru
          _
      $region56: #{critic_forward.1} parent=5 // pred_fallthru
        _
      %p4795 = scmp.le.s32.totalorder 2, %s20
      // Predicated region
      $region61: #{critic_forward.1} parent=5 // pred_check
        %p4796 = pneg %p4795
      $region62: #{critic_forward.1} parent=5 // pred_check_branch
        %4798 = sbr.rel (%p4796) target = $region64
      $region63: #{critic_forward.1} parent=5 // pred_region
        %s4799 = ssub.s32 %s20, 2
        // Predicated region
        $region65: #{critic_forward.1} parent=63 // pred_check
          %p4800 = pneg %p243
        $region66: #{critic_forward.1} parent=63 // pred_check_branch
          %4802 = sbr.rel (%p4800) target = $region68
        $region67: #{critic_forward.1} parent=63 // pred_region
          %s4803 = sand.u32 %s228, 1
          %s4804 = scalar_lea.sflag [#allocation4], %s4803
          %s4805 = sand.u32 %s228, 1
          %s4806 = scalar_lea.vmem [#allocation3], %s4805
          %4808 = dma.done %s4804, 16
        $region68: #{critic_forward.1} parent=63 // pred_fallthru
          _
      $region64: #{critic_forward.1} parent=5 // pred_fallthru
        _
    $region6: #{critic_forward.1} parent=1 // loop_footer
      %s24 = sadd.s32 1, %s20
    $region7: #{critic_forward.1} parent=1 // loop_footer_branch
      %19 = sbr.rel target = $region3
    $region8: #{critic_forward.1} parent=1 // loop_exit
      _
    %4809 = vsyncpa [#allocation4], 1
    %s4810 = scalar_lea.sflag [#allocation4], 1
    %4811 = vsyncpa %s4810, 1

</llo_original>
